<compile_context>
chip_gen: v6e
topology: v6e:2x2x1
jax: 0.10.0
libtpu: 0.0.40
codegen_flags: <defaults>
</compile_context>

<pallas_src>
import functools

import jax
import jax.numpy as jnp
from jax.experimental import pallas as pl
from jax.experimental.pallas import tpu as pltpu

LANE = 128
SUBLANE = 8


def _round_up(x, m):
    return (x + m - 1) // m * m


# ---------------------------------------------------------------------------
# Pallas kernel: full h_function MLP + SAN head for one batch tile.
# ---------------------------------------------------------------------------
def san_disc_kernel(x_ref, w1_ref, b1_ref, w2_ref, b2_ref, w3_ref, b3_ref,
                    fcw_ref, out_ref):
    x = x_ref[...]                                            # (TB, Dpad) bf16

    # Linear(d_input_dim, 1024) + LeakyReLU(0.2)   (bf16 MXU, f32 accumulate)
    h = jnp.dot(x, w1_ref[...], preferred_element_type=jnp.float32) + b1_ref[...]
    h = jnp.maximum(h, 0.2 * h)

    # Linear(1024, 512) + LeakyReLU(0.2)
    h = jnp.dot(h.astype(jnp.bfloat16), w2_ref[...],
                preferred_element_type=jnp.float32) + b2_ref[...]
    h = jnp.maximum(h, 0.2 * h)

    # Linear(512, 256) + LeakyReLU(0.2)
    h = jnp.dot(h.astype(jnp.bfloat16), w3_ref[...],
                preferred_element_type=jnp.float32) + b3_ref[...]
    h = jnp.maximum(h, 0.2 * h)                               # (TB, 256) f32

    # SAN head collapsed: (h * scale) . direction == h . fc_w in the forward
    # pass (detach only changes gradients, so fun and dir share values).
    out_ref[...] = jnp.sum(h * fcw_ref[...], axis=1, keepdims=True)  # (TB, 1)


# ---------------------------------------------------------------------------
# Wrapper
# ---------------------------------------------------------------------------
@functools.partial(jax.jit, static_argnames=("flg_train",))
def san_discriminator_forward(x, params, flg_train: bool):
    w1, b1 = params["w1"], params["b1"]
    w2, b2 = params["w2"], params["b2"]
    w3, b3 = params["w3"], params["b3"]
    fc_w = params["fc_w"]

    B, d_in = x.shape
    d_pad = w1.shape[0]                     # 896 for d_in=784

    # bf16 activations for the matmuls; zero-pad features to the padded K dim.
    x = x.astype(jnp.bfloat16)
    if d_in < d_pad:
        x = jnp.pad(x, ((0, 0), (0, d_pad - d_in)))

    # Batch tiling: big batches get 256-row tiles (pipelined, megacore-
    # shardable); small batches run as a single grid step.
    TB = min(256, _round_up(B, SUBLANE))
    B_pad = _round_up(B, TB)
    if B_pad != B:
        x = jnp.pad(x, ((0, B_pad - B), (0, 0)))

    full = lambda a: pl.BlockSpec(a.shape, lambda i: (0, 0))

    out = pl.pallas_call(
        san_disc_kernel,
        out_shape=jax.ShapeDtypeStruct((B_pad, 1), jnp.float32),
        grid_spec=pltpu.PrefetchScalarGridSpec(
            num_scalar_prefetch=0,
            grid=(B_pad // TB,),
            in_specs=[
                pl.BlockSpec((TB, d_pad), lambda i: (i, 0)),   # x tile
                full(w1), full(b1),                            # layer 1
                full(w2), full(b2),                            # layer 2
                full(w3), full(b3),                            # layer 3
                full(fc_w),                                    # fc_w
            ],
            out_specs=pl.BlockSpec((TB, 1), lambda i: (i, 0)),
        ),
        compiler_params=pltpu.CompilerParams(
            dimension_semantics=("parallel",),
            vmem_limit_bytes=32 << 20,       # fits v7x's 64 MiB physical VMEM
        ),
    )(x, w1, b1, w2, b2, w3, b3, fc_w)

    out_vec = out[:B, 0]
    if flg_train:
        # Identical values in the forward pass; detach only affects gradients.
        return dict(fun=out_vec, dir=out_vec)
    return out_vec


# ---------------------------------------------------------------------------
# Deterministic parameter construction (synthetic; mirrors __init__ shapes)
# ---------------------------------------------------------------------------
def _spectral_normalize(W, key, n_power_iterations=1, eps=1e-12):
    # W is (out, in), as in torch.nn.Linear.weight.
    out_dim, _ = W.shape
    u = jax.random.normal(key, (out_dim,), dtype=W.dtype)
    u = u / jnp.maximum(jnp.linalg.norm(u), eps)
    v = None
    for _ in range(n_power_iterations):
        v = W.T @ u
        v = v / jnp.maximum(jnp.linalg.norm(v), eps)
        u = W @ v
        u = u / jnp.maximum(jnp.linalg.norm(u), eps)
    sigma = u @ (W @ v)
    return W / sigma


def make_params(key, d_input_dim):
    dims = [(1024, d_input_dim), (512, 1024), (256, 512)]
    keys = jax.random.split(key, 8)
    params = {}
    names = [("w1", "b1"), ("w2", "b2"), ("w3", "b3")]
    d_pad = _round_up(d_input_dim, LANE)
    for idx, ((out_d, in_d), (wn, bn)) in enumerate(zip(dims, names)):
        bound = 1.0 / jnp.sqrt(in_d)
        W = jax.random.uniform(keys[2 * idx], (out_d, in_d),
                               minval=-bound, maxval=bound, dtype=jnp.float32)
        W = _spectral_normalize(W, keys[2 * idx + 1])
        b = jax.random.uniform(jax.random.fold_in(keys[2 * idx], 7), (out_d,),
                               minval=-bound, maxval=bound, dtype=jnp.float32)
        Wt = W.T                                           # (in, out)
        if idx == 0 and in_d < d_pad:
            Wt = jnp.pad(Wt, ((0, d_pad - in_d), (0, 0)))  # zero-pad K to 896
        params[wn] = Wt.astype(jnp.bfloat16)               # bf16 weights
        params[bn] = b.reshape(1, out_d)                   # f32 biases
    params["fc_w"] = jax.random.normal(keys[6], (1, 256), dtype=jnp.float32)
    return params


# ---------------------------------------------------------------------------
# Pure-JAX reference (same bf16 matmul precision, PyTorch-style SAN head)
# ---------------------------------------------------------------------------
def reference_forward(x, params, flg_train):
    d_pad = params["w1"].shape[0]
    h = jnp.pad(x, ((0, 0), (0, d_pad - x.shape[1]))).astype(jnp.bfloat16)
    for wn, bn in (("w1", "b1"), ("w2", "b2"), ("w3", "b3")):
        h = jnp.dot(h, params[wn], preferred_element_type=jnp.float32) + params[bn]
        h = jnp.maximum(h, 0.2 * h)
        if wn != "w3":
            h = h.astype(jnp.bfloat16)
    # PyTorch-style SAN head: scale / direction (algebraically == h @ fc_w.T).
    w = params["fc_w"]
    scale = jnp.linalg.norm(w, axis=1, keepdims=True)          # (1, 1)
    direction = w / jnp.maximum(scale, 1e-12)
    h = h * scale
    out = jnp.sum(h * direction, axis=1)
    if flg_train:
        return dict(fun=out, dir=out)
    return out


if __name__ == "__main__":
    D_INPUT = 784
    BATCH = 8

    key = jax.random.PRNGKey(0)
    k_params, k_x = jax.random.split(key)
    params = make_params(k_params, D_INPUT)
    x = jax.random.normal(k_x, (BATCH, D_INPUT), dtype=jnp.float32)

    # Eval-mode forward (flg_train=False)
    out_eval = san_discriminator_forward(x, params, flg_train=False)
    jax.block_until_ready(out_eval)

    # Train-mode forward (flg_train=True) returns dict(fun=..., dir=...)
    out_train = san_discriminator_forward(x, params, flg_train=True)
    jax.block_until_ready(out_train["fun"])

    ref_eval = reference_forward(x, params, flg_train=False)
    ref_train = reference_forward(x, params, flg_train=True)

    assert out_eval.shape == (BATCH,)
    assert out_train["fun"].shape == (BATCH,)
    assert out_train["dir"].shape == (BATCH,)
    assert jnp.allclose(out_eval, ref_eval, atol=1e-2, rtol=1e-2)
    assert jnp.allclose(out_train["fun"], ref_train["fun"], atol=1e-2, rtol=1e-2)
    assert jnp.allclose(out_train["dir"], ref_train["dir"], atol=1e-2, rtol=1e-2)

    print("KERNEL_OK")
</pallas_src>

<mosaic_0001>
module attributes {stable_mosaic.version = 11 : i64} {
  func.func @san_disc_kernel(%arg0: i32, %arg1: memref<8x896xbf16, #tpu.memory_space<vmem>>, %arg2: memref<896x1024xbf16, #tpu.memory_space<vmem>>, %arg3: memref<1x1024xf32, #tpu.memory_space<vmem>>, %arg4: memref<1024x512xbf16, #tpu.memory_space<vmem>>, %arg5: memref<1x512xf32, #tpu.memory_space<vmem>>, %arg6: memref<512x256xbf16, #tpu.memory_space<vmem>>, %arg7: memref<1x256xf32, #tpu.memory_space<vmem>>, %arg8: memref<1x256xf32, #tpu.memory_space<vmem>>, %arg9: memref<8x1xf32, #tpu.memory_space<vmem>>) attributes {dimension_semantics = [#tpu.dimension_semantics<parallel>], iteration_bounds = array<i64: 1>, scalar_prefetch = 0 : i64, scratch_operands = 0 : i64, tpu.core_type = #tpu.core_type<tc>, window_params = [{transform_indices = @transform_0, window_bounds = array<i64: 8, 896>}, {pipeline_mode = #tpu.pipeline_mode<synchronous>, transform_indices = @transform_1, window_bounds = array<i64: 896, 1024>}, {pipeline_mode = #tpu.pipeline_mode<synchronous>, transform_indices = @transform_2, window_bounds = array<i64: 1, 1024>}, {pipeline_mode = #tpu.pipeline_mode<synchronous>, transform_indices = @transform_3, window_bounds = array<i64: 1024, 512>}, {pipeline_mode = #tpu.pipeline_mode<synchronous>, transform_indices = @transform_4, window_bounds = array<i64: 1, 512>}, {pipeline_mode = #tpu.pipeline_mode<synchronous>, transform_indices = @transform_5, window_bounds = array<i64: 512, 256>}, {pipeline_mode = #tpu.pipeline_mode<synchronous>, transform_indices = @transform_6, window_bounds = array<i64: 1, 256>}, {pipeline_mode = #tpu.pipeline_mode<synchronous>, transform_indices = @transform_7, window_bounds = array<i64: 1, 256>}, {transform_indices = @transform_8, window_bounds = array<i64: 8, 1>}]} {
    %c0 = arith.constant 0 : index
    %c0_0 = arith.constant 0 : index
    %0 = vector.load %arg1[%c0, %c0_0] : memref<8x896xbf16, #tpu.memory_space<vmem>>, vector<8x896xbf16>
    %c0_1 = arith.constant 0 : index
    %c0_2 = arith.constant 0 : index
    %1 = vector.load %arg2[%c0_1, %c0_2] : memref<896x1024xbf16, #tpu.memory_space<vmem>>, vector<896x1024xbf16>
    %cst = arith.constant dense<0.000000e+00> : vector<8x1024xf32>
    %2 = tpu.matmul %0, %1, %cst {dimension_numbers = #tpu.dot_dimension_numbers<[1], [0], [0], [1], [0, 0, 1, 1], [], []>} : vector<8x896xbf16>, vector<896x1024xbf16>, vector<8x1024xf32> -> vector<8x1024xf32>
    %c0_3 = arith.constant 0 : index
    %c0_4 = arith.constant 0 : index
    %3 = vector.load %arg3[%c0_3, %c0_4] : memref<1x1024xf32, #tpu.memory_space<vmem>>, vector<1x1024xf32>
    %4 = vector.broadcast %3 : vector<1x1024xf32> to vector<8x1024xf32>
    %5 = arith.addf %2, %4 : vector<8x1024xf32>
    %cst_5 = arith.constant 2.000000e-01 : f32
    %6 = vector.broadcast %cst_5 : f32 to vector<8x1024xf32>
    %7 = arith.mulf %6, %5 : vector<8x1024xf32>
    %8 = arith.maximumf %5, %7 : vector<8x1024xf32>
    %9 = arith.truncf %8 : vector<8x1024xf32> to vector<8x1024xbf16>
    %c0_6 = arith.constant 0 : index
    %c0_7 = arith.constant 0 : index
    %10 = vector.load %arg4[%c0_6, %c0_7] : memref<1024x512xbf16, #tpu.memory_space<vmem>>, vector<1024x512xbf16>
    %cst_8 = arith.constant dense<0.000000e+00> : vector<8x512xf32>
    %11 = tpu.matmul %9, %10, %cst_8 {dimension_numbers = #tpu.dot_dimension_numbers<[1], [0], [0], [1], [0, 0, 1, 1], [], []>} : vector<8x1024xbf16>, vector<1024x512xbf16>, vector<8x512xf32> -> vector<8x512xf32>
    %c0_9 = arith.constant 0 : index
    %c0_10 = arith.constant 0 : index
    %12 = vector.load %arg5[%c0_9, %c0_10] : memref<1x512xf32, #tpu.memory_space<vmem>>, vector<1x512xf32>
    %13 = vector.broadcast %12 : vector<1x512xf32> to vector<8x512xf32>
    %14 = arith.addf %11, %13 : vector<8x512xf32>
    %cst_11 = arith.constant 2.000000e-01 : f32
    %15 = vector.broadcast %cst_11 : f32 to vector<8x512xf32>
    %16 = arith.mulf %15, %14 : vector<8x512xf32>
    %17 = arith.maximumf %14, %16 : vector<8x512xf32>
    %18 = arith.truncf %17 : vector<8x512xf32> to vector<8x512xbf16>
    %c0_12 = arith.constant 0 : index
    %c0_13 = arith.constant 0 : index
    %19 = vector.load %arg6[%c0_12, %c0_13] : memref<512x256xbf16, #tpu.memory_space<vmem>>, vector<512x256xbf16>
    %cst_14 = arith.constant dense<0.000000e+00> : vector<8x256xf32>
    %20 = tpu.matmul %18, %19, %cst_14 {dimension_numbers = #tpu.dot_dimension_numbers<[1], [0], [0], [1], [0, 0, 1, 1], [], []>} : vector<8x512xbf16>, vector<512x256xbf16>, vector<8x256xf32> -> vector<8x256xf32>
    %c0_15 = arith.constant 0 : index
    %c0_16 = arith.constant 0 : index
    %21 = vector.load %arg7[%c0_15, %c0_16] : memref<1x256xf32, #tpu.memory_space<vmem>>, vector<1x256xf32>
    %22 = vector.broadcast %21 : vector<1x256xf32> to vector<8x256xf32>
    %23 = arith.addf %20, %22 : vector<8x256xf32>
    %cst_17 = arith.constant 2.000000e-01 : f32
    %24 = vector.broadcast %cst_17 : f32 to vector<8x256xf32>
    %25 = arith.mulf %24, %23 : vector<8x256xf32>
    %26 = arith.maximumf %23, %25 : vector<8x256xf32>
    %c0_18 = arith.constant 0 : index
    %c0_19 = arith.constant 0 : index
    %27 = vector.load %arg8[%c0_18, %c0_19] : memref<1x256xf32, #tpu.memory_space<vmem>>, vector<1x256xf32>
    %28 = vector.broadcast %27 : vector<1x256xf32> to vector<8x256xf32>
    %29 = arith.mulf %26, %28 : vector<8x256xf32>
    %cst_20 = arith.constant dense<0.000000e+00> : vector<8xf32>
    %30 = vector.multi_reduction <add>, %29, %cst_20 [1] : vector<8x256xf32> to vector<8xf32>
    %31 = vector.shape_cast %30 : vector<8xf32> to vector<8x1xf32>
    %c0_21 = arith.constant 0 : index
    %c0_22 = arith.constant 0 : index
    %32 = vector.load %arg9[%c0_21, %c0_22] : memref<8x1xf32, #tpu.memory_space<vmem>>, vector<8x1xf32>
    tpu.vector_store %arg9[%c0_21, %c0_22], %31 {strides = array<i32>} : memref<8x1xf32, #tpu.memory_space<vmem>>, vector<8x1xf32>,
    return
  }
  func.func @transform_0(%arg0: i32) -> (i32, i32) {
    %c0_i32 = arith.constant 0 : i32
    %c0_i32_0 = arith.constant 0 : i32
    return %arg0, %c0_i32 : i32, i32
  }
  func.func @transform_1(%arg0: i32) -> (i32, i32) {
    %c0_i32 = arith.constant 0 : i32
    %c0_i32_0 = arith.constant 0 : i32
    %c0_i32_1 = arith.constant 0 : i32
    return %c0_i32, %c0_i32_0 : i32, i32
  }
  func.func @transform_2(%arg0: i32) -> (i32, i32) {
    %c0_i32 = arith.constant 0 : i32
    %c0_i32_0 = arith.constant 0 : i32
    %c0_i32_1 = arith.constant 0 : i32
    return %c0_i32, %c0_i32_0 : i32, i32
  }
  func.func @transform_3(%arg0: i32) -> (i32, i32) {
    %c0_i32 = arith.constant 0 : i32
    %c0_i32_0 = arith.constant 0 : i32
    %c0_i32_1 = arith.constant 0 : i32
    return %c0_i32, %c0_i32_0 : i32, i32
  }
  func.func @transform_4(%arg0: i32) -> (i32, i32) {
    %c0_i32 = arith.constant 0 : i32
    %c0_i32_0 = arith.constant 0 : i32
    %c0_i32_1 = arith.constant 0 : i32
    return %c0_i32, %c0_i32_0 : i32, i32
  }
  func.func @transform_5(%arg0: i32) -> (i32, i32) {
    %c0_i32 = arith.constant 0 : i32
    %c0_i32_0 = arith.constant 0 : i32
    %c0_i32_1 = arith.constant 0 : i32
    return %c0_i32, %c0_i32_0 : i32, i32
  }
  func.func @transform_6(%arg0: i32) -> (i32, i32) {
    %c0_i32 = arith.constant 0 : i32
    %c0_i32_0 = arith.constant 0 : i32
    %c0_i32_1 = arith.constant 0 : i32
    return %c0_i32, %c0_i32_0 : i32, i32
  }
  func.func @transform_7(%arg0: i32) -> (i32, i32) {
    %c0_i32 = arith.constant 0 : i32
    %c0_i32_0 = arith.constant 0 : i32
    %c0_i32_1 = arith.constant 0 : i32
    return %c0_i32, %c0_i32_0 : i32, i32
  }
  func.func @transform_8(%arg0: i32) -> (i32, i32) {
    %c0_i32 = arith.constant 0 : i32
    %c0_i32_0 = arith.constant 0 : i32
    return %arg0, %c0_i32 : i32, i32
  }
}

</mosaic_0001>

<llo_original>
// kernel: san_discriminator_forward.1
$region0: #{san_discriminator_forward.1}
  #allocation0 [shape = 'u32[]', space=smem, size = 0x4, offset = 0x4, fixed_abs, tag = 'smem constant byte address 0x4 - core index']
  #allocation1 [shape = 'u32[144,128]{1,0:T(1,128)}', space=vmem, size = 0x12000, scoped, tag = 'internal scratch']
  %s0 = inlined_call_operand.vmem [shape: bf16[8,896], index: 0, kind: input, shape index: {}]
  %s1 = inlined_call_operand.hbm [shape: bf16[896,1024], index: 1, kind: input, shape index: {}]
  %s2 = inlined_call_operand.hbm [shape: f32[1,1024], index: 2, kind: input, shape index: {}]
  %s3 = inlined_call_operand.hbm [shape: bf16[1024,512], index: 3, kind: input, shape index: {}]
  %s4 = inlined_call_operand.hbm [shape: f32[1,512], index: 4, kind: input, shape index: {}]
  %s5 = inlined_call_operand.hbm [shape: bf16[512,256], index: 5, kind: input, shape index: {}]
  %s6 = inlined_call_operand.hbm [shape: f32[1,256], index: 6, kind: input, shape index: {}]
  %s7 = inlined_call_operand.hbm [shape: f32[1,256], index: 7, kind: input, shape index: {}]
  %s8 = inlined_call_operand.vmem [shape: f32[8,1], index: 8, kind: output, shape index: {}]
  %s9 = sld [smem:[#allocation0]]
  $region70: #{san_discriminator_forward.1} parent=0
    _
  %s11 = ssub.s32 1, %s9
  %s12 = scalar_select 0, %s11, %s9
  $region1: #{san_discriminator_forward.1} parent=0
    #allocation2 [shape = 'u8[1835008]{0}', space=vmem, size = 0x1c0000, scoped, tag = 'input window, operand 1, single buffered']
    #allocation3 [shape = 's32[1]{0}', space=sflag, size = 0x4, scoped, tag = 'scoped memory for san_discriminator_forward.1']
    #allocation4 [shape = 'u8[4096]{0}', space=vmem, size = 0x1000, scoped, tag = 'input window, operand 2, single buffered']
    #allocation5 [shape = 's32[1]{0}', space=sflag, size = 0x4, scoped, tag = 'scoped memory for san_discriminator_forward.1']
    #allocation6 [shape = 'u8[1048576]{0}', space=vmem, size = 0x100000, scoped, tag = 'input window, operand 3, single buffered']
    #allocation7 [shape = 'u8[2048]{0}', space=vmem, size = 0x800, scoped, tag = 'input window, operand 4, single buffered']
    #allocation8 [shape = 's32[1]{0}', space=sflag, size = 0x4, scoped, tag = 'scoped memory for san_discriminator_forward.1']
    #allocation9 [shape = 'u8[262144]{0}', space=vmem, size = 0x40000, scoped, tag = 'input window, operand 5, single buffered']
    #allocation10 [shape = 'u8[1024]{0}', space=vmem, size = 0x400, scoped, tag = 'input window, operand 6, single buffered']
    #allocation11 [shape = 's32[1]{0}', space=sflag, size = 0x4, scoped, tag = 'scoped memory for san_discriminator_forward.1']
    #allocation12 [shape = 'u8[1024]{0}', space=vmem, size = 0x400, scoped, tag = 'input window, operand 7, single buffered']
    %13 = vsyncpa [#allocation3], 0
    %14 = vsyncpa [#allocation5], 0
    %15 = vsyncpa [#allocation8], 0
    %16 = vsyncpa [#allocation11], 0
    // Predicated region
    $region2: #{san_discriminator_forward.1} parent=1 // pred_check
      _
    $region3: #{san_discriminator_forward.1} parent=1 // pred_check_branch
      %18 = sbr.rel (0) target = $region5
    $region4: #{san_discriminator_forward.1} parent=1 // pred_region
      _
    $region5: #{san_discriminator_forward.1} parent=1 // pred_fallthru
      _
    // Predicated region
    $region6: #{san_discriminator_forward.1} parent=1 // pred_check
      _
    $region7: #{san_discriminator_forward.1} parent=1 // pred_check_branch
      %20 = sbr.rel (0) target = $region9
    $region8: #{san_discriminator_forward.1} parent=1 // pred_region
      %s22 = ssub.s32 57344, 57344
      %23 = vsyncadd [#allocation3], %s22
      %s24 = sshll.u32 [#allocation2], 4
      %s25 = int_to_ptr.vmem [resolvable:$true] %s24
      %30 = dma.hbm_to_vmem [thread:$0]  %s1, 57344, %s25, [#allocation3], 512, 512, 32
    $region9: #{san_discriminator_forward.1} parent=1 // pred_fallthru
      _
    // Predicated region
    $region10: #{san_discriminator_forward.1} parent=1 // pred_check
      _
    $region11: #{san_discriminator_forward.1} parent=1 // pred_check_branch
      %32 = sbr.rel (0) target = $region13
    $region12: #{san_discriminator_forward.1} parent=1 // pred_region
      %s34 = ssub.s32 128, 128
      %35 = vsyncadd [#allocation5], %s34
      %s37 = sshll.u32 [#allocation4], 4
      %s38 = int_to_ptr.vmem [resolvable:$true] %s37
      %40 = dma.hbm_to_vmem [thread:$0]  %s2, 128, %s38, [#allocation5]
    $region13: #{san_discriminator_forward.1} parent=1 // pred_fallthru
      _
    // Predicated region
    $region14: #{san_discriminator_forward.1} parent=1 // pred_check
      _
    $region15: #{san_discriminator_forward.1} parent=1 // pred_check_branch
      %42 = sbr.rel (0) target = $region17
    $region16: #{san_discriminator_forward.1} parent=1 // pred_region
      %s44 = ssub.s32 32768, 32768
      %45 = vsyncadd [#allocation5], %s44
      %s46 = sshll.u32 [#allocation6], 4
      %s47 = int_to_ptr.vmem [resolvable:$true] %s46
      %52 = dma.hbm_to_vmem [thread:$0]  %s3, 32768, %s47, [#allocation5], 256, 256, 16
    $region17: #{san_discriminator_forward.1} parent=1 // pred_fallthru
      _
    // Predicated region
    $region18: #{san_discriminator_forward.1} parent=1 // pred_check
      _
    $region19: #{san_discriminator_forward.1} parent=1 // pred_check_branch
      %54 = sbr.rel (0) target = $region21
    $region20: #{san_discriminator_forward.1} parent=1 // pred_region
      %s56 = ssub.s32 64, 64
      %57 = vsyncadd [#allocation8], %s56
      %s59 = sshll.u32 [#allocation7], 4
      %s60 = int_to_ptr.vmem [resolvable:$true] %s59
      %62 = dma.hbm_to_vmem [thread:$0]  %s4, 64, %s60, [#allocation8]
    $region21: #{san_discriminator_forward.1} parent=1 // pred_fallthru
      _
    // Predicated region
    $region22: #{san_discriminator_forward.1} parent=1 // pred_check
      _
    $region23: #{san_discriminator_forward.1} parent=1 // pred_check_branch
      %64 = sbr.rel (0) target = $region25
    $region24: #{san_discriminator_forward.1} parent=1 // pred_region
      %s66 = ssub.s32 8192, 8192
      %67 = vsyncadd [#allocation8], %s66
      %s68 = sshll.u32 [#allocation9], 4
      %s69 = int_to_ptr.vmem [resolvable:$true] %s68
      %74 = dma.hbm_to_vmem [thread:$0]  %s5, 8192, %s69, [#allocation8], 128, 128, 8
    $region25: #{san_discriminator_forward.1} parent=1 // pred_fallthru
      _
    // Predicated region
    $region26: #{san_discriminator_forward.1} parent=1 // pred_check
      _
    $region27: #{san_discriminator_forward.1} parent=1 // pred_check_branch
      %76 = sbr.rel (0) target = $region29
    $region28: #{san_discriminator_forward.1} parent=1 // pred_region
      %s78 = ssub.s32 32, 32
      %79 = vsyncadd [#allocation11], %s78
      %s81 = sshll.u32 [#allocation10], 4
      %s82 = int_to_ptr.vmem [resolvable:$true] %s81
      %84 = dma.hbm_to_vmem [thread:$0]  %s6, 32, %s82, [#allocation11]
    $region29: #{san_discriminator_forward.1} parent=1 // pred_fallthru
      _
    // Predicated region
    $region30: #{san_discriminator_forward.1} parent=1 // pred_check
      _
    $region31: #{san_discriminator_forward.1} parent=1 // pred_check_branch
      %86 = sbr.rel (0) target = $region33
    $region32: #{san_discriminator_forward.1} parent=1 // pred_region
      %s88 = ssub.s32 32, 32
      %89 = vsyncadd [#allocation11], %s88
      %s91 = sshll.u32 [#allocation12], 4
      %s92 = int_to_ptr.vmem [resolvable:$true] %s91
      %94 = dma.hbm_to_vmem [thread:$0]  %s7, 32, %s92, [#allocation11]
    $region33: #{san_discriminator_forward.1} parent=1 // pred_fallthru
      _
    // Predicated region
    $region34: #{san_discriminator_forward.1} parent=1 // pred_check
      _
    $region35: #{san_discriminator_forward.1} parent=1 // pred_check_branch
      %96 = sbr.rel (0) target = $region37
    $region36: #{san_discriminator_forward.1} parent=1 // pred_region
      %97 = dma.done [#allocation3], 57344
    $region37: #{san_discriminator_forward.1} parent=1 // pred_fallthru
      _
    // Predicated region
    $region38: #{san_discriminator_forward.1} parent=1 // pred_check
      _
    $region39: #{san_discriminator_forward.1} parent=1 // pred_check_branch
      %99 = sbr.rel (0) target = $region41
    $region40: #{san_discriminator_forward.1} parent=1 // pred_region
      %100 = dma.done [#allocation5], 128
    $region41: #{san_discriminator_forward.1} parent=1 // pred_fallthru
      _
    // Predicated region
    $region42: #{san_discriminator_forward.1} parent=1 // pred_check
      _
    $region43: #{san_discriminator_forward.1} parent=1 // pred_check_branch
      %102 = sbr.rel (0) target = $region45
    $region44: #{san_discriminator_forward.1} parent=1 // pred_region
      %103 = dma.done [#allocation5], 32768
    $region45: #{san_discriminator_forward.1} parent=1 // pred_fallthru
      _
    // Predicated region
    $region46: #{san_discriminator_forward.1} parent=1 // pred_check
      _
    $region47: #{san_discriminator_forward.1} parent=1 // pred_check_branch
      %105 = sbr.rel (0) target = $region49
    $region48: #{san_discriminator_forward.1} parent=1 // pred_region
      %106 = dma.done [#allocation8], 64
    $region49: #{san_discriminator_forward.1} parent=1 // pred_fallthru
      _
    // Predicated region
    $region50: #{san_discriminator_forward.1} parent=1 // pred_check
      _
    $region51: #{san_discriminator_forward.1} parent=1 // pred_check_branch
      %108 = sbr.rel (0) target = $region53
    $region52: #{san_discriminator_forward.1} parent=1 // pred_region
      %109 = dma.done [#allocation8], 8192
    $region53: #{san_discriminator_forward.1} parent=1 // pred_fallthru
      _
    // Predicated region
    $region54: #{san_discriminator_forward.1} parent=1 // pred_check
      _
    $region55: #{san_discriminator_forward.1} parent=1 // pred_check_branch
      %111 = sbr.rel (0) target = $region57
    $region56: #{san_discriminator_forward.1} parent=1 // pred_region
      %112 = dma.done [#allocation11], 32
    $region57: #{san_discriminator_forward.1} parent=1 // pred_fallthru
      _
    // Predicated region
    $region58: #{san_discriminator_forward.1} parent=1 // pred_check
      _
    $region59: #{san_discriminator_forward.1} parent=1 // pred_check_branch
      %114 = sbr.rel (0) target = $region61
    $region60: #{san_discriminator_forward.1} parent=1 // pred_region
      %115 = dma.done [#allocation11], 32
    $region61: #{san_discriminator_forward.1} parent=1 // pred_fallthru
      _
    %v117 = vld [vmem:[%s0] sm:$0xff]
    %v118 = vld [vmem:[%s0 + $0x8] sm:$0xff]
    %v119 = vld [vmem:[%s0 + $0x10] sm:$0xff]
    %v120 = vld [vmem:[%s0 + $0x18] sm:$0xf]
    %v121 = vld [vmem:[#allocation2] sm:$0xff]
    %v122 = vld [vmem:[#allocation2 + $0x8] sm:$0xff]
    %v123 = vld [vmem:[#allocation2 + $0x10] sm:$0xff]
    %v124 = vld [vmem:[#allocation2 + $0x18] sm:$0xff]
    %v125 = vld [vmem:[#allocation2 + $0x20] sm:$0xff]
    %v126 = vld [vmem:[#allocation2 + $0x28] sm:$0xff]
    %v127 = vld [vmem:[#allocation2 + $0x30] sm:$0xff]
    %v128 = vld [vmem:[#allocation2 + $0x38] sm:$0xff]
    %v129 = vld [vmem:[#allocation2 + $0x40] sm:$0xff]
    %v130 = vld [vmem:[#allocation2 + $0x48] sm:$0xff]
    %v131 = vld [vmem:[#allocation2 + $0x50] sm:$0xff]
    %v132 = vld [vmem:[#allocation2 + $0x58] sm:$0xff]
    %v133 = vld [vmem:[#allocation2 + $0x60] sm:$0xff]
    %v134 = vld [vmem:[#allocation2 + $0x68] sm:$0xff]
    %v135 = vld [vmem:[#allocation2 + $0x70] sm:$0xff]
    %v136 = vld [vmem:[#allocation2 + $0x78] sm:$0xff]
    %v137 = vld [vmem:[#allocation2 + $0x80] sm:$0xff]
    %v138 = vld [vmem:[#allocation2 + $0x88] sm:$0xff]
    %v139 = vld [vmem:[#allocation2 + $0x90] sm:$0xff]
    %v140 = vld [vmem:[#allocation2 + $0x98] sm:$0xff]
    %v141 = vld [vmem:[#allocation2 + $0xa0] sm:$0xff]
    %v142 = vld [vmem:[#allocation2 + $0xa8] sm:$0xff]
    %v143 = vld [vmem:[#allocation2 + $0xb0] sm:$0xff]
    %v144 = vld [vmem:[#allocation2 + $0xb8] sm:$0xff]
    %v145 = vld [vmem:[#allocation2 + $0xc0] sm:$0xff]
    %v146 = vld [vmem:[#allocation2 + $0xc8] sm:$0xff]
    %v147 = vld [vmem:[#allocation2 + $0xd0] sm:$0xff]
    %v148 = vld [vmem:[#allocation2 + $0xd8] sm:$0xff]
    %v149 = vld [vmem:[#allocation2 + $0xe0] sm:$0xff]
    %v150 = vld [vmem:[#allocation2 + $0xe8] sm:$0xff]
    %v151 = vld [vmem:[#allocation2 + $0xf0] sm:$0xff]
    %v152 = vld [vmem:[#allocation2 + $0xf8] sm:$0xff]
    %v153 = vld [vmem:[#allocation2 + $0x100] sm:$0xff]
    %v154 = vld [vmem:[#allocation2 + $0x108] sm:$0xff]
    %v155 = vld [vmem:[#allocation2 + $0x110] sm:$0xff]
    %v156 = vld [vmem:[#allocation2 + $0x118] sm:$0xff]
    %v157 = vld [vmem:[#allocation2 + $0x120] sm:$0xff]
    %v158 = vld [vmem:[#allocation2 + $0x128] sm:$0xff]
    %v159 = vld [vmem:[#allocation2 + $0x130] sm:$0xff]
    %v160 = vld [vmem:[#allocation2 + $0x138] sm:$0xff]
    %v161 = vld [vmem:[#allocation2 + $0x140] sm:$0xff]
    %v162 = vld [vmem:[#allocation2 + $0x148] sm:$0xff]
    %v163 = vld [vmem:[#allocation2 + $0x150] sm:$0xff]
    %v164 = vld [vmem:[#allocation2 + $0x158] sm:$0xff]
    %v165 = vld [vmem:[#allocation2 + $0x160] sm:$0xff]
    %v166 = vld [vmem:[#allocation2 + $0x168] sm:$0xff]
    %v167 = vld [vmem:[#allocation2 + $0x170] sm:$0xff]
    %v168 = vld [vmem:[#allocation2 + $0x178] sm:$0xff]
    %v169 = vld [vmem:[#allocation2 + $0x180] sm:$0xff]
    %v170 = vld [vmem:[#allocation2 + $0x188] sm:$0xff]
    %v171 = vld [vmem:[#allocation2 + $0x190] sm:$0xff]
    %v172 = vld [vmem:[#allocation2 + $0x198] sm:$0xff]
    %v173 = vld [vmem:[#allocation2 + $0x1a0] sm:$0xff]
    %v174 = vld [vmem:[#allocation2 + $0x1a8] sm:$0xff]
    %v175 = vld [vmem:[#allocation2 + $0x1b0] sm:$0xff]
    %v176 = vld [vmem:[#allocation2 + $0x1b8] sm:$0xff]
    %v177 = vld [vmem:[#allocation2 + $0x1c0] sm:$0xff]
    %v178 = vld [vmem:[#allocation2 + $0x1c8] sm:$0xff]
    %v179 = vld [vmem:[#allocation2 + $0x1d0] sm:$0xff]
    %v180 = vld [vmem:[#allocation2 + $0x1d8] sm:$0xff]
    %v181 = vld [vmem:[#allocation2 + $0x1e0] sm:$0xff]
    %v182 = vld [vmem:[#allocation2 + $0x1e8] sm:$0xff]
    %v183 = vld [vmem:[#allocation2 + $0x1f0] sm:$0xff]
    %v184 = vld [vmem:[#allocation2 + $0x1f8] sm:$0xff]
    %v185 = vld [vmem:[#allocation2 + $0x200] sm:$0xff]
    %v186 = vld [vmem:[#allocation2 + $0x208] sm:$0xff]
    %v187 = vld [vmem:[#allocation2 + $0x210] sm:$0xff]
    %v188 = vld [vmem:[#allocation2 + $0x218] sm:$0xff]
    %v189 = vld [vmem:[#allocation2 + $0x220] sm:$0xff]
    %v190 = vld [vmem:[#allocation2 + $0x228] sm:$0xff]
    %v191 = vld [vmem:[#allocation2 + $0x230] sm:$0xff]
    %v192 = vld [vmem:[#allocation2 + $0x238] sm:$0xff]
    %v193 = vld [vmem:[#allocation2 + $0x240] sm:$0xff]
    %v194 = vld [vmem:[#allocation2 + $0x248] sm:$0xff]
    %v195 = vld [vmem:[#allocation2 + $0x250] sm:$0xff]
    %v196 = vld [vmem:[#allocation2 + $0x258] sm:$0xff]
    %v197 = vld [vmem:[#allocation2 + $0x260] sm:$0xff]
    %v198 = vld [vmem:[#allocation2 + $0x268] sm:$0xff]
    %v199 = vld [vmem:[#allocation2 + $0x270] sm:$0xff]
    %v200 = vld [vmem:[#allocation2 + $0x278] sm:$0xff]
    %v201 = vld [vmem:[#allocation2 + $0x280] sm:$0xff]
    %v202 = vld [vmem:[#allocation2 + $0x288] sm:$0xff]
    %v203 = vld [vmem:[#allocation2 + $0x290] sm:$0xff]
    %v204 = vld [vmem:[#allocation2 + $0x298] sm:$0xff]
    %v205 = vld [vmem:[#allocation2 + $0x2a0] sm:$0xff]
    %v206 = vld [vmem:[#allocation2 + $0x2a8] sm:$0xff]
    %v207 = vld [vmem:[#allocation2 + $0x2b0] sm:$0xff]
    %v208 = vld [vmem:[#allocation2 + $0x2b8] sm:$0xff]
    %v209 = vld [vmem:[#allocation2 + $0x2c0] sm:$0xff]
    %v210 = vld [vmem:[#allocation2 + $0x2c8] sm:$0xff]
    %v211 = vld [vmem:[#allocation2 + $0x2d0] sm:$0xff]
    %v212 = vld [vmem:[#allocation2 + $0x2d8] sm:$0xff]
    %v213 = vld [vmem:[#allocation2 + $0x2e0] sm:$0xff]
    %v214 = vld [vmem:[#allocation2 + $0x2e8] sm:$0xff]
    %v215 = vld [vmem:[#allocation2 + $0x2f0] sm:$0xff]
    %v216 = vld [vmem:[#allocation2 + $0x2f8] sm:$0xff]
    %v217 = vld [vmem:[#allocation2 + $0x300] sm:$0xff]
    %v218 = vld [vmem:[#allocation2 + $0x308] sm:$0xff]
    %v219 = vld [vmem:[#allocation2 + $0x310] sm:$0xff]
    %v220 = vld [vmem:[#allocation2 + $0x318] sm:$0xff]
    %v221 = vld [vmem:[#allocation2 + $0x320] sm:$0xff]
    %v222 = vld [vmem:[#allocation2 + $0x328] sm:$0xff]
    %v223 = vld [vmem:[#allocation2 + $0x330] sm:$0xff]
    %v224 = vld [vmem:[#allocation2 + $0x338] sm:$0xff]
    %v225 = vld [vmem:[#allocation2 + $0x340] sm:$0xff]
    %v226 = vld [vmem:[#allocation2 + $0x348] sm:$0xff]
    %v227 = vld [vmem:[#allocation2 + $0x350] sm:$0xff]
    %v228 = vld [vmem:[#allocation2 + $0x358] sm:$0xff]
    %v229 = vld [vmem:[#allocation2 + $0x360] sm:$0xff]
    %v230 = vld [vmem:[#allocation2 + $0x368] sm:$0xff]
    %v231 = vld [vmem:[#allocation2 + $0x370] sm:$0xff]
    %v232 = vld [vmem:[#allocation2 + $0x378] sm:$0xff]
    %v233 = vld [vmem:[#allocation2 + $0x380] sm:$0xff]
    %v234 = vld [vmem:[#allocation2 + $0x388] sm:$0xff]
    %v235 = vld [vmem:[#allocation2 + $0x390] sm:$0xff]
    %v236 = vld [vmem:[#allocation2 + $0x398] sm:$0xff]
    %v237 = vld [vmem:[#allocation2 + $0x3a0] sm:$0xff]
    %v238 = vld [vmem:[#allocation2 + $0x3a8] sm:$0xff]
    %v239 = vld [vmem:[#allocation2 + $0x3b0] sm:$0xff]
    %v240 = vld [vmem:[#allocation2 + $0x3b8] sm:$0xff]
    %v241 = vld [vmem:[#allocation2 + $0x3c0] sm:$0xff]
    %v242 = vld [vmem:[#allocation2 + $0x3c8] sm:$0xff]
    %v243 = vld [vmem:[#allocation2 + $0x3d0] sm:$0xff]
    %v244 = vld [vmem:[#allocation2 + $0x3d8] sm:$0xff]
    %v245 = vld [vmem:[#allocation2 + $0x3e0] sm:$0xff]
    %v246 = vld [vmem:[#allocation2 + $0x3e8] sm:$0xff]
    %v247 = vld [vmem:[#allocation2 + $0x3f0] sm:$0xff]
    %v248 = vld [vmem:[#allocation2 + $0x3f8] sm:$0xff]
    %v249 = vld [vmem:[#allocation2 + $0x400] sm:$0xff]
    %v250 = vld [vmem:[#allocation2 + $0x408] sm:$0xff]
    %v251 = vld [vmem:[#allocation2 + $0x410] sm:$0xff]
    %v252 = vld [vmem:[#allocation2 + $0x418] sm:$0xff]
    %v253 = vld [vmem:[#allocation2 + $0x420] sm:$0xff]
    %v254 = vld [vmem:[#allocation2 + $0x428] sm:$0xff]
    %v255 = vld [vmem:[#allocation2 + $0x430] sm:$0xff]
    %v256 = vld [vmem:[#allocation2 + $0x438] sm:$0xff]
    %v257 = vld [vmem:[#allocation2 + $0x440] sm:$0xff]
    %v258 = vld [vmem:[#allocation2 + $0x448] sm:$0xff]
    %v259 = vld [vmem:[#allocation2 + $0x450] sm:$0xff]
    %v260 = vld [vmem:[#allocation2 + $0x458] sm:$0xff]
    %v261 = vld [vmem:[#allocation2 + $0x460] sm:$0xff]
    %v262 = vld [vmem:[#allocation2 + $0x468] sm:$0xff]
    %v263 = vld [vmem:[#allocation2 + $0x470] sm:$0xff]
    %v264 = vld [vmem:[#allocation2 + $0x478] sm:$0xff]
    %v265 = vld [vmem:[#allocation2 + $0x480] sm:$0xff]
    %v266 = vld [vmem:[#allocation2 + $0x488] sm:$0xff]
    %v267 = vld [vmem:[#allocation2 + $0x490] sm:$0xff]
    %v268 = vld [vmem:[#allocation2 + $0x498] sm:$0xff]
    %v269 = vld [vmem:[#allocation2 + $0x4a0] sm:$0xff]
    %v270 = vld [vmem:[#allocation2 + $0x4a8] sm:$0xff]
    %v271 = vld [vmem:[#allocation2 + $0x4b0] sm:$0xff]
    %v272 = vld [vmem:[#allocation2 + $0x4b8] sm:$0xff]
    %v273 = vld [vmem:[#allocation2 + $0x4c0] sm:$0xff]
    %v274 = vld [vmem:[#allocation2 + $0x4c8] sm:$0xff]
    %v275 = vld [vmem:[#allocation2 + $0x4d0] sm:$0xff]
    %v276 = vld [vmem:[#allocation2 + $0x4d8] sm:$0xff]
    %v277 = vld [vmem:[#allocation2 + $0x4e0] sm:$0xff]
    %v278 = vld [vmem:[#allocation2 + $0x4e8] sm:$0xff]
    %v279 = vld [vmem:[#allocation2 + $0x4f0] sm:$0xff]
    %v280 = vld [vmem:[#allocation2 + $0x4f8] sm:$0xff]
    %v281 = vld [vmem:[#allocation2 + $0x500] sm:$0xff]
    %v282 = vld [vmem:[#allocation2 + $0x508] sm:$0xff]
    %v283 = vld [vmem:[#allocation2 + $0x510] sm:$0xff]
    %v284 = vld [vmem:[#allocation2 + $0x518] sm:$0xff]
    %v285 = vld [vmem:[#allocation2 + $0x520] sm:$0xff]
    %v286 = vld [vmem:[#allocation2 + $0x528] sm:$0xff]
    %v287 = vld [vmem:[#allocation2 + $0x530] sm:$0xff]
    %v288 = vld [vmem:[#allocation2 + $0x538] sm:$0xff]
    %v289 = vld [vmem:[#allocation2 + $0x540] sm:$0xff]
    %v290 = vld [vmem:[#allocation2 + $0x548] sm:$0xff]
    %v291 = vld [vmem:[#allocation2 + $0x550] sm:$0xff]
    %v292 = vld [vmem:[#allocation2 + $0x558] sm:$0xff]
    %v293 = vld [vmem:[#allocation2 + $0x560] sm:$0xff]
    %v294 = vld [vmem:[#allocation2 + $0x568] sm:$0xff]
    %v295 = vld [vmem:[#allocation2 + $0x570] sm:$0xff]
    %v296 = vld [vmem:[#allocation2 + $0x578] sm:$0xff]
    %v297 = vld [vmem:[#allocation2 + $0x580] sm:$0xff]
    %v298 = vld [vmem:[#allocation2 + $0x588] sm:$0xff]
    %v299 = vld [vmem:[#allocation2 + $0x590] sm:$0xff]
    %v300 = vld [vmem:[#allocation2 + $0x598] sm:$0xff]
    %v301 = vld [vmem:[#allocation2 + $0x5a0] sm:$0xff]
    %v302 = vld [vmem:[#allocation2 + $0x5a8] sm:$0xff]
    %v303 = vld [vmem:[#allocation2 + $0x5b0] sm:$0xff]
    %v304 = vld [vmem:[#allocation2 + $0x5b8] sm:$0xff]
    %v305 = vld [vmem:[#allocation2 + $0x5c0] sm:$0xff]
    %v306 = vld [vmem:[#allocation2 + $0x5c8] sm:$0xff]
    %v307 = vld [vmem:[#allocation2 + $0x5d0] sm:$0xff]
    %v308 = vld [vmem:[#allocation2 + $0x5d8] sm:$0xff]
    %v309 = vld [vmem:[#allocation2 + $0x5e0] sm:$0xff]
    %v310 = vld [vmem:[#allocation2 + $0x5e8] sm:$0xff]
    %v311 = vld [vmem:[#allocation2 + $0x5f0] sm:$0xff]
    %v312 = vld [vmem:[#allocation2 + $0x5f8] sm:$0xff]
    %v313 = vld [vmem:[#allocation2 + $0x600] sm:$0xff]
    %v314 = vld [vmem:[#allocation2 + $0x608] sm:$0xff]
    %v315 = vld [vmem:[#allocation2 + $0x610] sm:$0xff]
    %v316 = vld [vmem:[#allocation2 + $0x618] sm:$0xff]
    %v317 = vld [vmem:[#allocation2 + $0x620] sm:$0xff]
    %v318 = vld [vmem:[#allocation2 + $0x628] sm:$0xff]
    %v319 = vld [vmem:[#allocation2 + $0x630] sm:$0xff]
    %v320 = vld [vmem:[#allocation2 + $0x638] sm:$0xff]
    %v321 = vld [vmem:[#allocation2 + $0x640] sm:$0xff]
    %v322 = vld [vmem:[#allocation2 + $0x648] sm:$0xff]
    %v323 = vld [vmem:[#allocation2 + $0x650] sm:$0xff]
    %v324 = vld [vmem:[#allocation2 + $0x658] sm:$0xff]
    %v325 = vld [vmem:[#allocation2 + $0x660] sm:$0xff]
    %v326 = vld [vmem:[#allocation2 + $0x668] sm:$0xff]
    %v327 = vld [vmem:[#allocation2 + $0x670] sm:$0xff]
    %v328 = vld [vmem:[#allocation2 + $0x678] sm:$0xff]
    %v329 = vld [vmem:[#allocation2 + $0x680] sm:$0xff]
    %v330 = vld [vmem:[#allocation2 + $0x688] sm:$0xff]
    %v331 = vld [vmem:[#allocation2 + $0x690] sm:$0xff]
    %v332 = vld [vmem:[#allocation2 + $0x698] sm:$0xff]
    %v333 = vld [vmem:[#allocation2 + $0x6a0] sm:$0xff]
    %v334 = vld [vmem:[#allocation2 + $0x6a8] sm:$0xff]
    %v335 = vld [vmem:[#allocation2 + $0x6b0] sm:$0xff]
    %v336 = vld [vmem:[#allocation2 + $0x6b8] sm:$0xff]
    %v337 = vld [vmem:[#allocation2 + $0x6c0] sm:$0xff]
    %v338 = vld [vmem:[#allocation2 + $0x6c8] sm:$0xff]
    %v339 = vld [vmem:[#allocation2 + $0x6d0] sm:$0xff]
    %v340 = vld [vmem:[#allocation2 + $0x6d8] sm:$0xff]
    %v341 = vld [vmem:[#allocation2 + $0x6e0] sm:$0xff]
    %v342 = vld [vmem:[#allocation2 + $0x6e8] sm:$0xff]
    %v343 = vld [vmem:[#allocation2 + $0x6f0] sm:$0xff]
    %v344 = vld [vmem:[#allocation2 + $0x6f8] sm:$0xff]
    %v345 = vld [vmem:[#allocation2 + $0x700] sm:$0xff]
    %v346 = vld [vmem:[#allocation2 + $0x708] sm:$0xff]
    %v347 = vld [vmem:[#allocation2 + $0x710] sm:$0xff]
    %v348 = vld [vmem:[#allocation2 + $0x718] sm:$0xff]
    %v349 = vld [vmem:[#allocation2 + $0x720] sm:$0xff]
    %v350 = vld [vmem:[#allocation2 + $0x728] sm:$0xff]
    %v351 = vld [vmem:[#allocation2 + $0x730] sm:$0xff]
    %v352 = vld [vmem:[#allocation2 + $0x738] sm:$0xff]
    %v353 = vld [vmem:[#allocation2 + $0x740] sm:$0xff]
    %v354 = vld [vmem:[#allocation2 + $0x748] sm:$0xff]
    %v355 = vld [vmem:[#allocation2 + $0x750] sm:$0xff]
    %v356 = vld [vmem:[#allocation2 + $0x758] sm:$0xff]
    %v357 = vld [vmem:[#allocation2 + $0x760] sm:$0xff]
    %v358 = vld [vmem:[#allocation2 + $0x768] sm:$0xff]
    %v359 = vld [vmem:[#allocation2 + $0x770] sm:$0xff]
    %v360 = vld [vmem:[#allocation2 + $0x778] sm:$0xff]
    %v361 = vld [vmem:[#allocation2 + $0x780] sm:$0xff]
    %v362 = vld [vmem:[#allocation2 + $0x788] sm:$0xff]
    %v363 = vld [vmem:[#allocation2 + $0x790] sm:$0xff]
    %v364 = vld [vmem:[#allocation2 + $0x798] sm:$0xff]
    %v365 = vld [vmem:[#allocation2 + $0x7a0] sm:$0xff]
    %v366 = vld [vmem:[#allocation2 + $0x7a8] sm:$0xff]
    %v367 = vld [vmem:[#allocation2 + $0x7b0] sm:$0xff]
    %v368 = vld [vmem:[#allocation2 + $0x7b8] sm:$0xff]
    %v369 = vld [vmem:[#allocation2 + $0x7c0] sm:$0xff]
    %v370 = vld [vmem:[#allocation2 + $0x7c8] sm:$0xff]
    %v371 = vld [vmem:[#allocation2 + $0x7d0] sm:$0xff]
    %v372 = vld [vmem:[#allocation2 + $0x7d8] sm:$0xff]
    %v373 = vld [vmem:[#allocation2 + $0x7e0] sm:$0xff]
    %v374 = vld [vmem:[#allocation2 + $0x7e8] sm:$0xff]
    %v375 = vld [vmem:[#allocation2 + $0x7f0] sm:$0xff]
    %v376 = vld [vmem:[#allocation2 + $0x7f8] sm:$0xff]
    %v377 = vld [vmem:[#allocation2 + $0x800] sm:$0xff]
    %v378 = vld [vmem:[#allocation2 + $0x808] sm:$0xff]
    %v379 = vld [vmem:[#allocation2 + $0x810] sm:$0xff]
    %v380 = vld [vmem:[#allocation2 + $0x818] sm:$0xff]
    %v381 = vld [vmem:[#allocation2 + $0x820] sm:$0xff]
    %v382 = vld [vmem:[#allocation2 + $0x828] sm:$0xff]
    %v383 = vld [vmem:[#allocation2 + $0x830] sm:$0xff]
    %v384 = vld [vmem:[#allocation2 + $0x838] sm:$0xff]
    %v385 = vld [vmem:[#allocation2 + $0x840] sm:$0xff]
    %v386 = vld [vmem:[#allocation2 + $0x848] sm:$0xff]
    %v387 = vld [vmem:[#allocation2 + $0x850] sm:$0xff]
    %v388 = vld [vmem:[#allocation2 + $0x858] sm:$0xff]
    %v389 = vld [vmem:[#allocation2 + $0x860] sm:$0xff]
    %v390 = vld [vmem:[#allocation2 + $0x868] sm:$0xff]
    %v391 = vld [vmem:[#allocation2 + $0x870] sm:$0xff]
    %v392 = vld [vmem:[#allocation2 + $0x878] sm:$0xff]
    %v393 = vld [vmem:[#allocation2 + $0x880] sm:$0xff]
    %v394 = vld [vmem:[#allocation2 + $0x888] sm:$0xff]
    %v395 = vld [vmem:[#allocation2 + $0x890] sm:$0xff]
    %v396 = vld [vmem:[#allocation2 + $0x898] sm:$0xff]
    %v397 = vld [vmem:[#allocation2 + $0x8a0] sm:$0xff]
    %v398 = vld [vmem:[#allocation2 + $0x8a8] sm:$0xff]
    %v399 = vld [vmem:[#allocation2 + $0x8b0] sm:$0xff]
    %v400 = vld [vmem:[#allocation2 + $0x8b8] sm:$0xff]
    %v401 = vld [vmem:[#allocation2 + $0x8c0] sm:$0xff]
    %v402 = vld [vmem:[#allocation2 + $0x8c8] sm:$0xff]
    %v403 = vld [vmem:[#allocation2 + $0x8d0] sm:$0xff]
    %v404 = vld [vmem:[#allocation2 + $0x8d8] sm:$0xff]
    %v405 = vld [vmem:[#allocation2 + $0x8e0] sm:$0xff]
    %v406 = vld [vmem:[#allocation2 + $0x8e8] sm:$0xff]
    %v407 = vld [vmem:[#allocation2 + $0x8f0] sm:$0xff]
    %v408 = vld [vmem:[#allocation2 + $0x8f8] sm:$0xff]
    %v409 = vld [vmem:[#allocation2 + $0x900] sm:$0xff]
    %v410 = vld [vmem:[#allocation2 + $0x908] sm:$0xff]
    %v411 = vld [vmem:[#allocation2 + $0x910] sm:$0xff]
    %v412 = vld [vmem:[#allocation2 + $0x918] sm:$0xff]
    %v413 = vld [vmem:[#allocation2 + $0x920] sm:$0xff]
    %v414 = vld [vmem:[#allocation2 + $0x928] sm:$0xff]
    %v415 = vld [vmem:[#allocation2 + $0x930] sm:$0xff]
    %v416 = vld [vmem:[#allocation2 + $0x938] sm:$0xff]
    %v417 = vld [vmem:[#allocation2 + $0x940] sm:$0xff]
    %v418 = vld [vmem:[#allocation2 + $0x948] sm:$0xff]
    %v419 = vld [vmem:[#allocation2 + $0x950] sm:$0xff]
    %v420 = vld [vmem:[#allocation2 + $0x958] sm:$0xff]
    %v421 = vld [vmem:[#allocation2 + $0x960] sm:$0xff]
    %v422 = vld [vmem:[#allocation2 + $0x968] sm:$0xff]
    %v423 = vld [vmem:[#allocation2 + $0x970] sm:$0xff]
    %v424 = vld [vmem:[#allocation2 + $0x978] sm:$0xff]
    %v425 = vld [vmem:[#allocation2 + $0x980] sm:$0xff]
    %v426 = vld [vmem:[#allocation2 + $0x988] sm:$0xff]
    %v427 = vld [vmem:[#allocation2 + $0x990] sm:$0xff]
    %v428 = vld [vmem:[#allocation2 + $0x998] sm:$0xff]
    %v429 = vld [vmem:[#allocation2 + $0x9a0] sm:$0xff]
    %v430 = vld [vmem:[#allocation2 + $0x9a8] sm:$0xff]
    %v431 = vld [vmem:[#allocation2 + $0x9b0] sm:$0xff]
    %v432 = vld [vmem:[#allocation2 + $0x9b8] sm:$0xff]
    %v433 = vld [vmem:[#allocation2 + $0x9c0] sm:$0xff]
    %v434 = vld [vmem:[#allocation2 + $0x9c8] sm:$0xff]
    %v435 = vld [vmem:[#allocation2 + $0x9d0] sm:$0xff]
    %v436 = vld [vmem:[#allocation2 + $0x9d8] sm:$0xff]
    %v437 = vld [vmem:[#allocation2 + $0x9e0] sm:$0xff]
    %v438 = vld [vmem:[#allocation2 + $0x9e8] sm:$0xff]
    %v439 = vld [vmem:[#allocation2 + $0x9f0] sm:$0xff]
    %v440 = vld [vmem:[#allocation2 + $0x9f8] sm:$0xff]
    %v441 = vld [vmem:[#allocation2 + $0xa00] sm:$0xff]
    %v442 = vld [vmem:[#allocation2 + $0xa08] sm:$0xff]
    %v443 = vld [vmem:[#allocation2 + $0xa10] sm:$0xff]
    %v444 = vld [vmem:[#allocation2 + $0xa18] sm:$0xff]
    %v445 = vld [vmem:[#allocation2 + $0xa20] sm:$0xff]
    %v446 = vld [vmem:[#allocation2 + $0xa28] sm:$0xff]
    %v447 = vld [vmem:[#allocation2 + $0xa30] sm:$0xff]
    %v448 = vld [vmem:[#allocation2 + $0xa38] sm:$0xff]
    %v449 = vld [vmem:[#allocation2 + $0xa40] sm:$0xff]
    %v450 = vld [vmem:[#allocation2 + $0xa48] sm:$0xff]
    %v451 = vld [vmem:[#allocation2 + $0xa50] sm:$0xff]
    %v452 = vld [vmem:[#allocation2 + $0xa58] sm:$0xff]
    %v453 = vld [vmem:[#allocation2 + $0xa60] sm:$0xff]
    %v454 = vld [vmem:[#allocation2 + $0xa68] sm:$0xff]
    %v455 = vld [vmem:[#allocation2 + $0xa70] sm:$0xff]
    %v456 = vld [vmem:[#allocation2 + $0xa78] sm:$0xff]
    %v457 = vld [vmem:[#allocation2 + $0xa80] sm:$0xff]
    %v458 = vld [vmem:[#allocation2 + $0xa88] sm:$0xff]
    %v459 = vld [vmem:[#allocation2 + $0xa90] sm:$0xff]
    %v460 = vld [vmem:[#allocation2 + $0xa98] sm:$0xff]
    %v461 = vld [vmem:[#allocation2 + $0xaa0] sm:$0xff]
    %v462 = vld [vmem:[#allocation2 + $0xaa8] sm:$0xff]
    %v463 = vld [vmem:[#allocation2 + $0xab0] sm:$0xff]
    %v464 = vld [vmem:[#allocation2 + $0xab8] sm:$0xff]
    %v465 = vld [vmem:[#allocation2 + $0xac0] sm:$0xff]
    %v466 = vld [vmem:[#allocation2 + $0xac8] sm:$0xff]
    %v467 = vld [vmem:[#allocation2 + $0xad0] sm:$0xff]
    %v468 = vld [vmem:[#allocation2 + $0xad8] sm:$0xff]
    %v469 = vld [vmem:[#allocation2 + $0xae0] sm:$0xff]
    %v470 = vld [vmem:[#allocation2 + $0xae8] sm:$0xff]
    %v471 = vld [vmem:[#allocation2 + $0xaf0] sm:$0xff]
    %v472 = vld [vmem:[#allocation2 + $0xaf8] sm:$0xff]
    %v473 = vld [vmem:[#allocation2 + $0xb00] sm:$0xff]
    %v474 = vld [vmem:[#allocation2 + $0xb08] sm:$0xff]
    %v475 = vld [vmem:[#allocation2 + $0xb10] sm:$0xff]
    %v476 = vld [vmem:[#allocation2 + $0xb18] sm:$0xff]
    %v477 = vld [vmem:[#allocation2 + $0xb20] sm:$0xff]
    %v478 = vld [vmem:[#allocation2 + $0xb28] sm:$0xff]
    %v479 = vld [vmem:[#allocation2 + $0xb30] sm:$0xff]
    %v480 = vld [vmem:[#allocation2 + $0xb38] sm:$0xff]
    %v481 = vld [vmem:[#allocation2 + $0xb40] sm:$0xff]
    %v482 = vld [vmem:[#allocation2 + $0xb48] sm:$0xff]
    %v483 = vld [vmem:[#allocation2 + $0xb50] sm:$0xff]
    %v484 = vld [vmem:[#allocation2 + $0xb58] sm:$0xff]
    %v485 = vld [vmem:[#allocation2 + $0xb60] sm:$0xff]
    %v486 = vld [vmem:[#allocation2 + $0xb68] sm:$0xff]
    %v487 = vld [vmem:[#allocation2 + $0xb70] sm:$0xff]
    %v488 = vld [vmem:[#allocation2 + $0xb78] sm:$0xff]
    %v489 = vld [vmem:[#allocation2 + $0xb80] sm:$0xff]
    %v490 = vld [vmem:[#allocation2 + $0xb88] sm:$0xff]
    %v491 = vld [vmem:[#allocation2 + $0xb90] sm:$0xff]
    %v492 = vld [vmem:[#allocation2 + $0xb98] sm:$0xff]
    %v493 = vld [vmem:[#allocation2 + $0xba0] sm:$0xff]
    %v494 = vld [vmem:[#allocation2 + $0xba8] sm:$0xff]
    %v495 = vld [vmem:[#allocation2 + $0xbb0] sm:$0xff]
    %v496 = vld [vmem:[#allocation2 + $0xbb8] sm:$0xff]
    %v497 = vld [vmem:[#allocation2 + $0xbc0] sm:$0xff]
    %v498 = vld [vmem:[#allocation2 + $0xbc8] sm:$0xff]
    %v499 = vld [vmem:[#allocation2 + $0xbd0] sm:$0xff]
    %v500 = vld [vmem:[#allocation2 + $0xbd8] sm:$0xff]
    %v501 = vld [vmem:[#allocation2 + $0xbe0] sm:$0xff]
    %v502 = vld [vmem:[#allocation2 + $0xbe8] sm:$0xff]
    %v503 = vld [vmem:[#allocation2 + $0xbf0] sm:$0xff]
    %v504 = vld [vmem:[#allocation2 + $0xbf8] sm:$0xff]
    %v505 = vld [vmem:[#allocation2 + $0xc00] sm:$0xff]
    %v506 = vld [vmem:[#allocation2 + $0xc08] sm:$0xff]
    %v507 = vld [vmem:[#allocation2 + $0xc10] sm:$0xff]
    %v508 = vld [vmem:[#allocation2 + $0xc18] sm:$0xff]
    %v509 = vld [vmem:[#allocation2 + $0xc20] sm:$0xff]
    %v510 = vld [vmem:[#allocation2 + $0xc28] sm:$0xff]
    %v511 = vld [vmem:[#allocation2 + $0xc30] sm:$0xff]
    %v512 = vld [vmem:[#allocation2 + $0xc38] sm:$0xff]
    %v513 = vld [vmem:[#allocation2 + $0xc40] sm:$0xff]
    %v514 = vld [vmem:[#allocation2 + $0xc48] sm:$0xff]
    %v515 = vld [vmem:[#allocation2 + $0xc50] sm:$0xff]
    %v516 = vld [vmem:[#allocation2 + $0xc58] sm:$0xff]
    %v517 = vld [vmem:[#allocation2 + $0xc60] sm:$0xff]
    %v518 = vld [vmem:[#allocation2 + $0xc68] sm:$0xff]
    %v519 = vld [vmem:[#allocation2 + $0xc70] sm:$0xff]
    %v520 = vld [vmem:[#allocation2 + $0xc78] sm:$0xff]
    %v521 = vld [vmem:[#allocation2 + $0xc80] sm:$0xff]
    %v522 = vld [vmem:[#allocation2 + $0xc88] sm:$0xff]
    %v523 = vld [vmem:[#allocation2 + $0xc90] sm:$0xff]
    %v524 = vld [vmem:[#allocation2 + $0xc98] sm:$0xff]
    %v525 = vld [vmem:[#allocation2 + $0xca0] sm:$0xff]
    %v526 = vld [vmem:[#allocation2 + $0xca8] sm:$0xff]
    %v527 = vld [vmem:[#allocation2 + $0xcb0] sm:$0xff]
    %v528 = vld [vmem:[#allocation2 + $0xcb8] sm:$0xff]
    %v529 = vld [vmem:[#allocation2 + $0xcc0] sm:$0xff]
    %v530 = vld [vmem:[#allocation2 + $0xcc8] sm:$0xff]
    %v531 = vld [vmem:[#allocation2 + $0xcd0] sm:$0xff]
    %v532 = vld [vmem:[#allocation2 + $0xcd8] sm:$0xff]
    %v533 = vld [vmem:[#allocation2 + $0xce0] sm:$0xff]
    %v534 = vld [vmem:[#allocation2 + $0xce8] sm:$0xff]
    %v535 = vld [vmem:[#allocation2 + $0xcf0] sm:$0xff]
    %v536 = vld [vmem:[#allocation2 + $0xcf8] sm:$0xff]
    %v537 = vld [vmem:[#allocation2 + $0xd00] sm:$0xff]
    %v538 = vld [vmem:[#allocation2 + $0xd08] sm:$0xff]
    %v539 = vld [vmem:[#allocation2 + $0xd10] sm:$0xff]
    %v540 = vld [vmem:[#allocation2 + $0xd18] sm:$0xff]
    %v541 = vld [vmem:[#allocation2 + $0xd20] sm:$0xff]
    %v542 = vld [vmem:[#allocation2 + $0xd28] sm:$0xff]
    %v543 = vld [vmem:[#allocation2 + $0xd30] sm:$0xff]
    %v544 = vld [vmem:[#allocation2 + $0xd38] sm:$0xff]
    %v545 = vld [vmem:[#allocation2 + $0xd40] sm:$0xff]
    %v546 = vld [vmem:[#allocation2 + $0xd48] sm:$0xff]
    %v547 = vld [vmem:[#allocation2 + $0xd50] sm:$0xff]
    %v548 = vld [vmem:[#allocation2 + $0xd58] sm:$0xff]
    %v549 = vld [vmem:[#allocation2 + $0xd60] sm:$0xff]
    %v550 = vld [vmem:[#allocation2 + $0xd68] sm:$0xff]
    %v551 = vld [vmem:[#allocation2 + $0xd70] sm:$0xff]
    %v552 = vld [vmem:[#allocation2 + $0xd78] sm:$0xff]
    %v553 = vld [vmem:[#allocation2 + $0xd80] sm:$0xff]
    %v554 = vld [vmem:[#allocation2 + $0xd88] sm:$0xff]
    %v555 = vld [vmem:[#allocation2 + $0xd90] sm:$0xff]
    %v556 = vld [vmem:[#allocation2 + $0xd98] sm:$0xff]
    %v557 = vld [vmem:[#allocation2 + $0xda0] sm:$0xff]
    %v558 = vld [vmem:[#allocation2 + $0xda8] sm:$0xff]
    %v559 = vld [vmem:[#allocation2 + $0xdb0] sm:$0xff]
    %v560 = vld [vmem:[#allocation2 + $0xdb8] sm:$0xff]
    %v561 = vld [vmem:[#allocation2 + $0xdc0] sm:$0xff]
    %v562 = vld [vmem:[#allocation2 + $0xdc8] sm:$0xff]
    %v563 = vld [vmem:[#allocation2 + $0xdd0] sm:$0xff]
    %v564 = vld [vmem:[#allocation2 + $0xdd8] sm:$0xff]
    %v565 = vld [vmem:[#allocation2 + $0xde0] sm:$0xff]
    %v566 = vld [vmem:[#allocation2 + $0xde8] sm:$0xff]
    %v567 = vld [vmem:[#allocation2 + $0xdf0] sm:$0xff]
    %v568 = vld [vmem:[#allocation2 + $0xdf8] sm:$0xff]
    %v569 = vld [vmem:[#allocation4] sm:$0xff]
    %v571 = vlaneseq
    %v572 = vshrl.u32 %v571, 7
    %v573 = vsub.s32 0, %v572
    %v574 = vrot.slane %v569, %v573
    %v575 = vlaneseq
    %v576 = vshrl.u32 %v575, 7
    %v577 = vsub.s32 1, %v576
    %v578 = vrot.slane %v569, %v577
    %v579 = vlaneseq
    %v580 = vshrl.u32 %v579, 7
    %v581 = vsub.s32 2, %v580
    %v582 = vrot.slane %v569, %v581
    %v583 = vlaneseq
    %v584 = vshrl.u32 %v583, 7
    %v585 = vsub.s32 3, %v584
    %v586 = vrot.slane %v569, %v585
    %v587 = vlaneseq
    %v588 = vshrl.u32 %v587, 7
    %v589 = vsub.s32 4, %v588
    %v590 = vrot.slane %v569, %v589
    %v591 = vlaneseq
    %v592 = vshrl.u32 %v591, 7
    %v593 = vsub.s32 5, %v592
    %v594 = vrot.slane %v569, %v593
    %v595 = vlaneseq
    %v596 = vshrl.u32 %v595, 7
    %v597 = vsub.s32 6, %v596
    %v598 = vrot.slane %v569, %v597
    %v599 = vlaneseq
    %v600 = vshrl.u32 %v599, 7
    %v601 = vsub.s32 7, %v600
    %v602 = vrot.slane %v569, %v601
    %v615 = vunpack.c.l.b16 %v117
    %v616 = vunpack.c.h.b16 %v117
    %v617 = vunpack.c.l.b16 %v118
    %v618 = vunpack.c.h.b16 %v118
    %v619 = vunpack.c.l.b16 %v119
    %v620 = vunpack.c.h.b16 %v119
    %v621 = vunpack.c.l.b16 %v120
    %v622 = vpack.c.b16 %v615, %v615
    %v623 = vpack.c.b16 %v616, %v616
    %v624 = vpack.c.b16 %v617, %v617
    %v625 = vpack.c.b16 %v618, %v618
    %v626 = vpack.c.b16 %v619, %v619
    %v627 = vpack.c.b16 %v620, %v620
    %v628 = vpack.c.b16 %v621, %v621
    %v1084 = vunpack.c.l.b16 %v121
    %v1085 = vunpack.c.h.b16 %v121
    %v1086 = vunpack.c.l.b16 %v122
    %v1087 = vunpack.c.h.b16 %v122
    %v1088 = vunpack.c.l.b16 %v123
    %v1089 = vunpack.c.h.b16 %v123
    %v1090 = vunpack.c.l.b16 %v124
    %v1091 = vunpack.c.h.b16 %v124
    %v1092 = vunpack.c.l.b16 %v125
    %v1093 = vunpack.c.h.b16 %v125
    %v1094 = vunpack.c.l.b16 %v126
    %v1095 = vunpack.c.h.b16 %v126
    %v1096 = vunpack.c.l.b16 %v127
    %v1097 = vunpack.c.h.b16 %v127
    %v1098 = vunpack.c.l.b16 %v128
    %v1099 = vunpack.c.h.b16 %v128
    %v1100 = vunpack.c.l.b16 %v129
    %v1101 = vunpack.c.h.b16 %v129
    %v1102 = vunpack.c.l.b16 %v130
    %v1103 = vunpack.c.h.b16 %v130
    %v1104 = vunpack.c.l.b16 %v131
    %v1105 = vunpack.c.h.b16 %v131
    %v1106 = vunpack.c.l.b16 %v132
    %v1107 = vunpack.c.h.b16 %v132
    %v1108 = vunpack.c.l.b16 %v133
    %v1109 = vunpack.c.h.b16 %v133
    %v1110 = vunpack.c.l.b16 %v134
    %v1111 = vunpack.c.h.b16 %v134
    %v1112 = vunpack.c.l.b16 %v135
    %v1113 = vunpack.c.h.b16 %v135
    %v1114 = vunpack.c.l.b16 %v136
    %v1115 = vunpack.c.h.b16 %v136
    %v1116 = vunpack.c.l.b16 %v137
    %v1117 = vunpack.c.h.b16 %v137
    %v1118 = vunpack.c.l.b16 %v138
    %v1119 = vunpack.c.h.b16 %v138
    %v1120 = vunpack.c.l.b16 %v139
    %v1121 = vunpack.c.h.b16 %v139
    %v1122 = vunpack.c.l.b16 %v140
    %v1123 = vunpack.c.h.b16 %v140
    %v1124 = vunpack.c.l.b16 %v141
    %v1125 = vunpack.c.h.b16 %v141
    %v1126 = vunpack.c.l.b16 %v142
    %v1127 = vunpack.c.h.b16 %v142
    %v1128 = vunpack.c.l.b16 %v143
    %v1129 = vunpack.c.h.b16 %v143
    %v1130 = vunpack.c.l.b16 %v144
    %v1131 = vunpack.c.h.b16 %v144
    %v1132 = vunpack.c.l.b16 %v145
    %v1133 = vunpack.c.h.b16 %v145
    %v1134 = vunpack.c.l.b16 %v146
    %v1135 = vunpack.c.h.b16 %v146
    %v1136 = vunpack.c.l.b16 %v147
    %v1137 = vunpack.c.h.b16 %v147
    %v1138 = vunpack.c.l.b16 %v148
    %v1139 = vunpack.c.h.b16 %v148
    %v1140 = vunpack.c.l.b16 %v149
    %v1141 = vunpack.c.h.b16 %v149
    %v1142 = vunpack.c.l.b16 %v150
    %v1143 = vunpack.c.h.b16 %v150
    %v1144 = vunpack.c.l.b16 %v151
    %v1145 = vunpack.c.h.b16 %v151
    %v1146 = vunpack.c.l.b16 %v152
    %v1147 = vunpack.c.h.b16 %v152
    %v1148 = vunpack.c.l.b16 %v153
    %v1149 = vunpack.c.h.b16 %v153
    %v1150 = vunpack.c.l.b16 %v154
    %v1151 = vunpack.c.h.b16 %v154
    %v1152 = vunpack.c.l.b16 %v155
    %v1153 = vunpack.c.h.b16 %v155
    %v1154 = vunpack.c.l.b16 %v156
    %v1155 = vunpack.c.h.b16 %v156
    %v1156 = vunpack.c.l.b16 %v157
    %v1157 = vunpack.c.h.b16 %v157
    %v1158 = vunpack.c.l.b16 %v158
    %v1159 = vunpack.c.h.b16 %v158
    %v1160 = vunpack.c.l.b16 %v159
    %v1161 = vunpack.c.h.b16 %v159
    %v1162 = vunpack.c.l.b16 %v160
    %v1163 = vunpack.c.h.b16 %v160
    %v1164 = vunpack.c.l.b16 %v161
    %v1165 = vunpack.c.h.b16 %v161
    %v1166 = vunpack.c.l.b16 %v162
    %v1167 = vunpack.c.h.b16 %v162
    %v1168 = vunpack.c.l.b16 %v163
    %v1169 = vunpack.c.h.b16 %v163
    %v1170 = vunpack.c.l.b16 %v164
    %v1171 = vunpack.c.h.b16 %v164
    %v1172 = vunpack.c.l.b16 %v165
    %v1173 = vunpack.c.h.b16 %v165
    %v1174 = vunpack.c.l.b16 %v166
    %v1175 = vunpack.c.h.b16 %v166
    %v1176 = vunpack.c.l.b16 %v167
    %v1177 = vunpack.c.h.b16 %v167
    %v1178 = vunpack.c.l.b16 %v168
    %v1179 = vunpack.c.h.b16 %v168
    %v1180 = vunpack.c.l.b16 %v169
    %v1181 = vunpack.c.h.b16 %v169
    %v1182 = vunpack.c.l.b16 %v170
    %v1183 = vunpack.c.h.b16 %v170
    %v1184 = vunpack.c.l.b16 %v171
    %v1185 = vunpack.c.h.b16 %v171
    %v1186 = vunpack.c.l.b16 %v172
    %v1187 = vunpack.c.h.b16 %v172
    %v1188 = vunpack.c.l.b16 %v173
    %v1189 = vunpack.c.h.b16 %v173
    %v1190 = vunpack.c.l.b16 %v174
    %v1191 = vunpack.c.h.b16 %v174
    %v1192 = vunpack.c.l.b16 %v175
    %v1193 = vunpack.c.h.b16 %v175
    %v1194 = vunpack.c.l.b16 %v176
    %v1195 = vunpack.c.h.b16 %v176
    %v1196 = vunpack.c.l.b16 %v177
    %v1197 = vunpack.c.h.b16 %v177
    %v1198 = vunpack.c.l.b16 %v178
    %v1199 = vunpack.c.h.b16 %v178
    %v1200 = vunpack.c.l.b16 %v179
    %v1201 = vunpack.c.h.b16 %v179
    %v1202 = vunpack.c.l.b16 %v180
    %v1203 = vunpack.c.h.b16 %v180
    %v1204 = vunpack.c.l.b16 %v181
    %v1205 = vunpack.c.h.b16 %v181
    %v1206 = vunpack.c.l.b16 %v182
    %v1207 = vunpack.c.h.b16 %v182
    %v1208 = vunpack.c.l.b16 %v183
    %v1209 = vunpack.c.h.b16 %v183
    %v1210 = vunpack.c.l.b16 %v184
    %v1211 = vunpack.c.h.b16 %v184
    %v1212 = vunpack.c.l.b16 %v185
    %v1213 = vunpack.c.h.b16 %v185
    %v1214 = vunpack.c.l.b16 %v186
    %v1215 = vunpack.c.h.b16 %v186
    %v1216 = vunpack.c.l.b16 %v187
    %v1217 = vunpack.c.h.b16 %v187
    %v1218 = vunpack.c.l.b16 %v188
    %v1219 = vunpack.c.h.b16 %v188
    %v1220 = vunpack.c.l.b16 %v189
    %v1221 = vunpack.c.h.b16 %v189
    %v1222 = vunpack.c.l.b16 %v190
    %v1223 = vunpack.c.h.b16 %v190
    %v1224 = vunpack.c.l.b16 %v191
    %v1225 = vunpack.c.h.b16 %v191
    %v1226 = vunpack.c.l.b16 %v192
    %v1227 = vunpack.c.h.b16 %v192
    %v1228 = vunpack.c.l.b16 %v193
    %v1229 = vunpack.c.h.b16 %v193
    %v1230 = vunpack.c.l.b16 %v194
    %v1231 = vunpack.c.h.b16 %v194
    %v1232 = vunpack.c.l.b16 %v195
    %v1233 = vunpack.c.h.b16 %v195
    %v1234 = vunpack.c.l.b16 %v196
    %v1235 = vunpack.c.h.b16 %v196
    %v1236 = vunpack.c.l.b16 %v197
    %v1237 = vunpack.c.h.b16 %v197
    %v1238 = vunpack.c.l.b16 %v198
    %v1239 = vunpack.c.h.b16 %v198
    %v1240 = vunpack.c.l.b16 %v199
    %v1241 = vunpack.c.h.b16 %v199
    %v1242 = vunpack.c.l.b16 %v200
    %v1243 = vunpack.c.h.b16 %v200
    %v1244 = vunpack.c.l.b16 %v201
    %v1245 = vunpack.c.h.b16 %v201
    %v1246 = vunpack.c.l.b16 %v202
    %v1247 = vunpack.c.h.b16 %v202
    %v1248 = vunpack.c.l.b16 %v203
    %v1249 = vunpack.c.h.b16 %v203
    %v1250 = vunpack.c.l.b16 %v204
    %v1251 = vunpack.c.h.b16 %v204
    %v1252 = vunpack.c.l.b16 %v205
    %v1253 = vunpack.c.h.b16 %v205
    %v1254 = vunpack.c.l.b16 %v206
    %v1255 = vunpack.c.h.b16 %v206
    %v1256 = vunpack.c.l.b16 %v207
    %v1257 = vunpack.c.h.b16 %v207
    %v1258 = vunpack.c.l.b16 %v208
    %v1259 = vunpack.c.h.b16 %v208
    %v1260 = vunpack.c.l.b16 %v209
    %v1261 = vunpack.c.h.b16 %v209
    %v1262 = vunpack.c.l.b16 %v210
    %v1263 = vunpack.c.h.b16 %v210
    %v1264 = vunpack.c.l.b16 %v211
    %v1265 = vunpack.c.h.b16 %v211
    %v1266 = vunpack.c.l.b16 %v212
    %v1267 = vunpack.c.h.b16 %v212
    %v1268 = vunpack.c.l.b16 %v213
    %v1269 = vunpack.c.h.b16 %v213
    %v1270 = vunpack.c.l.b16 %v214
    %v1271 = vunpack.c.h.b16 %v214
    %v1272 = vunpack.c.l.b16 %v215
    %v1273 = vunpack.c.h.b16 %v215
    %v1274 = vunpack.c.l.b16 %v216
    %v1275 = vunpack.c.h.b16 %v216
    %v1276 = vunpack.c.l.b16 %v217
    %v1277 = vunpack.c.h.b16 %v217
    %v1278 = vunpack.c.l.b16 %v218
    %v1279 = vunpack.c.h.b16 %v218
    %v1280 = vunpack.c.l.b16 %v219
    %v1281 = vunpack.c.h.b16 %v219
    %v1282 = vunpack.c.l.b16 %v220
    %v1283 = vunpack.c.h.b16 %v220
    %v1284 = vunpack.c.l.b16 %v221
    %v1285 = vunpack.c.h.b16 %v221
    %v1286 = vunpack.c.l.b16 %v222
    %v1287 = vunpack.c.h.b16 %v222
    %v1288 = vunpack.c.l.b16 %v223
    %v1289 = vunpack.c.h.b16 %v223
    %v1290 = vunpack.c.l.b16 %v224
    %v1291 = vunpack.c.h.b16 %v224
    %v1292 = vunpack.c.l.b16 %v225
    %v1293 = vunpack.c.h.b16 %v225
    %v1294 = vunpack.c.l.b16 %v226
    %v1295 = vunpack.c.h.b16 %v226
    %v1296 = vunpack.c.l.b16 %v227
    %v1297 = vunpack.c.h.b16 %v227
    %v1298 = vunpack.c.l.b16 %v228
    %v1299 = vunpack.c.h.b16 %v228
    %v1300 = vunpack.c.l.b16 %v229
    %v1301 = vunpack.c.h.b16 %v229
    %v1302 = vunpack.c.l.b16 %v230
    %v1303 = vunpack.c.h.b16 %v230
    %v1304 = vunpack.c.l.b16 %v231
    %v1305 = vunpack.c.h.b16 %v231
    %v1306 = vunpack.c.l.b16 %v232
    %v1307 = vunpack.c.h.b16 %v232
    %v1308 = vunpack.c.l.b16 %v233
    %v1309 = vunpack.c.h.b16 %v233
    %v1310 = vunpack.c.l.b16 %v234
    %v1311 = vunpack.c.h.b16 %v234
    %v1312 = vunpack.c.l.b16 %v235
    %v1313 = vunpack.c.h.b16 %v235
    %v1314 = vunpack.c.l.b16 %v236
    %v1315 = vunpack.c.h.b16 %v236
    %v1316 = vunpack.c.l.b16 %v237
    %v1317 = vunpack.c.h.b16 %v237
    %v1318 = vunpack.c.l.b16 %v238
    %v1319 = vunpack.c.h.b16 %v238
    %v1320 = vunpack.c.l.b16 %v239
    %v1321 = vunpack.c.h.b16 %v239
    %v1322 = vunpack.c.l.b16 %v240
    %v1323 = vunpack.c.h.b16 %v240
    %v1324 = vunpack.c.l.b16 %v241
    %v1325 = vunpack.c.h.b16 %v241
    %v1326 = vunpack.c.l.b16 %v242
    %v1327 = vunpack.c.h.b16 %v242
    %v1328 = vunpack.c.l.b16 %v243
    %v1329 = vunpack.c.h.b16 %v243
    %v1330 = vunpack.c.l.b16 %v244
    %v1331 = vunpack.c.h.b16 %v244
    %v1332 = vunpack.c.l.b16 %v245
    %v1333 = vunpack.c.h.b16 %v245
    %v1334 = vunpack.c.l.b16 %v246
    %v1335 = vunpack.c.h.b16 %v246
    %v1336 = vunpack.c.l.b16 %v247
    %v1337 = vunpack.c.h.b16 %v247
    %v1338 = vunpack.c.l.b16 %v248
    %v1339 = vunpack.c.h.b16 %v248
    %v1340 = vunpack.c.l.b16 %v249
    %v1341 = vunpack.c.h.b16 %v249
    %v1342 = vunpack.c.l.b16 %v250
    %v1343 = vunpack.c.h.b16 %v250
    %v1344 = vunpack.c.l.b16 %v251
    %v1345 = vunpack.c.h.b16 %v251
    %v1346 = vunpack.c.l.b16 %v252
    %v1347 = vunpack.c.h.b16 %v252
    %v1348 = vunpack.c.l.b16 %v253
    %v1349 = vunpack.c.h.b16 %v253
    %v1350 = vunpack.c.l.b16 %v254
    %v1351 = vunpack.c.h.b16 %v254
    %v1352 = vunpack.c.l.b16 %v255
    %v1353 = vunpack.c.h.b16 %v255
    %v1354 = vunpack.c.l.b16 %v256
    %v1355 = vunpack.c.h.b16 %v256
    %v1356 = vunpack.c.l.b16 %v257
    %v1357 = vunpack.c.h.b16 %v257
    %v1358 = vunpack.c.l.b16 %v258
    %v1359 = vunpack.c.h.b16 %v258
    %v1360 = vunpack.c.l.b16 %v259
    %v1361 = vunpack.c.h.b16 %v259
    %v1362 = vunpack.c.l.b16 %v260
    %v1363 = vunpack.c.h.b16 %v260
    %v1364 = vunpack.c.l.b16 %v261
    %v1365 = vunpack.c.h.b16 %v261
    %v1366 = vunpack.c.l.b16 %v262
    %v1367 = vunpack.c.h.b16 %v262
    %v1368 = vunpack.c.l.b16 %v263
    %v1369 = vunpack.c.h.b16 %v263
    %v1370 = vunpack.c.l.b16 %v264
    %v1371 = vunpack.c.h.b16 %v264
    %v1372 = vunpack.c.l.b16 %v265
    %v1373 = vunpack.c.h.b16 %v265
    %v1374 = vunpack.c.l.b16 %v266
    %v1375 = vunpack.c.h.b16 %v266
    %v1376 = vunpack.c.l.b16 %v267
    %v1377 = vunpack.c.h.b16 %v267
    %v1378 = vunpack.c.l.b16 %v268
    %v1379 = vunpack.c.h.b16 %v268
    %v1380 = vunpack.c.l.b16 %v269
    %v1381 = vunpack.c.h.b16 %v269
    %v1382 = vunpack.c.l.b16 %v270
    %v1383 = vunpack.c.h.b16 %v270
    %v1384 = vunpack.c.l.b16 %v271
    %v1385 = vunpack.c.h.b16 %v271
    %v1386 = vunpack.c.l.b16 %v272
    %v1387 = vunpack.c.h.b16 %v272
    %v1388 = vunpack.c.l.b16 %v273
    %v1389 = vunpack.c.h.b16 %v273
    %v1390 = vunpack.c.l.b16 %v274
    %v1391 = vunpack.c.h.b16 %v274
    %v1392 = vunpack.c.l.b16 %v275
    %v1393 = vunpack.c.h.b16 %v275
    %v1394 = vunpack.c.l.b16 %v276
    %v1395 = vunpack.c.h.b16 %v276
    %v1396 = vunpack.c.l.b16 %v277
    %v1397 = vunpack.c.h.b16 %v277
    %v1398 = vunpack.c.l.b16 %v278
    %v1399 = vunpack.c.h.b16 %v278
    %v1400 = vunpack.c.l.b16 %v279
    %v1401 = vunpack.c.h.b16 %v279
    %v1402 = vunpack.c.l.b16 %v280
    %v1403 = vunpack.c.h.b16 %v280
    %v1404 = vunpack.c.l.b16 %v281
    %v1405 = vunpack.c.h.b16 %v281
    %v1406 = vunpack.c.l.b16 %v282
    %v1407 = vunpack.c.h.b16 %v282
    %v1408 = vunpack.c.l.b16 %v283
    %v1409 = vunpack.c.h.b16 %v283
    %v1410 = vunpack.c.l.b16 %v284
    %v1411 = vunpack.c.h.b16 %v284
    %v1412 = vunpack.c.l.b16 %v285
    %v1413 = vunpack.c.h.b16 %v285
    %v1414 = vunpack.c.l.b16 %v286
    %v1415 = vunpack.c.h.b16 %v286
    %v1416 = vunpack.c.l.b16 %v287
    %v1417 = vunpack.c.h.b16 %v287
    %v1418 = vunpack.c.l.b16 %v288
    %v1419 = vunpack.c.h.b16 %v288
    %v1420 = vunpack.c.l.b16 %v289
    %v1421 = vunpack.c.h.b16 %v289
    %v1422 = vunpack.c.l.b16 %v290
    %v1423 = vunpack.c.h.b16 %v290
    %v1424 = vunpack.c.l.b16 %v291
    %v1425 = vunpack.c.h.b16 %v291
    %v1426 = vunpack.c.l.b16 %v292
    %v1427 = vunpack.c.h.b16 %v292
    %v1428 = vunpack.c.l.b16 %v293
    %v1429 = vunpack.c.h.b16 %v293
    %v1430 = vunpack.c.l.b16 %v294
    %v1431 = vunpack.c.h.b16 %v294
    %v1432 = vunpack.c.l.b16 %v295
    %v1433 = vunpack.c.h.b16 %v295
    %v1434 = vunpack.c.l.b16 %v296
    %v1435 = vunpack.c.h.b16 %v296
    %v1436 = vunpack.c.l.b16 %v297
    %v1437 = vunpack.c.h.b16 %v297
    %v1438 = vunpack.c.l.b16 %v298
    %v1439 = vunpack.c.h.b16 %v298
    %v1440 = vunpack.c.l.b16 %v299
    %v1441 = vunpack.c.h.b16 %v299
    %v1442 = vunpack.c.l.b16 %v300
    %v1443 = vunpack.c.h.b16 %v300
    %v1444 = vunpack.c.l.b16 %v301
    %v1445 = vunpack.c.h.b16 %v301
    %v1446 = vunpack.c.l.b16 %v302
    %v1447 = vunpack.c.h.b16 %v302
    %v1448 = vunpack.c.l.b16 %v303
    %v1449 = vunpack.c.h.b16 %v303
    %v1450 = vunpack.c.l.b16 %v304
    %v1451 = vunpack.c.h.b16 %v304
    %v1452 = vunpack.c.l.b16 %v305
    %v1453 = vunpack.c.h.b16 %v305
    %v1454 = vunpack.c.l.b16 %v306
    %v1455 = vunpack.c.h.b16 %v306
    %v1456 = vunpack.c.l.b16 %v307
    %v1457 = vunpack.c.h.b16 %v307
    %v1458 = vunpack.c.l.b16 %v308
    %v1459 = vunpack.c.h.b16 %v308
    %v1460 = vunpack.c.l.b16 %v309
    %v1461 = vunpack.c.h.b16 %v309
    %v1462 = vunpack.c.l.b16 %v310
    %v1463 = vunpack.c.h.b16 %v310
    %v1464 = vunpack.c.l.b16 %v311
    %v1465 = vunpack.c.h.b16 %v311
    %v1466 = vunpack.c.l.b16 %v312
    %v1467 = vunpack.c.h.b16 %v312
    %v1468 = vunpack.c.l.b16 %v313
    %v1469 = vunpack.c.h.b16 %v313
    %v1470 = vunpack.c.l.b16 %v314
    %v1471 = vunpack.c.h.b16 %v314
    %v1472 = vunpack.c.l.b16 %v315
    %v1473 = vunpack.c.h.b16 %v315
    %v1474 = vunpack.c.l.b16 %v316
    %v1475 = vunpack.c.h.b16 %v316
    %v1476 = vunpack.c.l.b16 %v317
    %v1477 = vunpack.c.h.b16 %v317
    %v1478 = vunpack.c.l.b16 %v318
    %v1479 = vunpack.c.h.b16 %v318
    %v1480 = vunpack.c.l.b16 %v319
    %v1481 = vunpack.c.h.b16 %v319
    %v1482 = vunpack.c.l.b16 %v320
    %v1483 = vunpack.c.h.b16 %v320
    %v1484 = vunpack.c.l.b16 %v321
    %v1485 = vunpack.c.h.b16 %v321
    %v1486 = vunpack.c.l.b16 %v322
    %v1487 = vunpack.c.h.b16 %v322
    %v1488 = vunpack.c.l.b16 %v323
    %v1489 = vunpack.c.h.b16 %v323
    %v1490 = vunpack.c.l.b16 %v324
    %v1491 = vunpack.c.h.b16 %v324
    %v1492 = vunpack.c.l.b16 %v325
    %v1493 = vunpack.c.h.b16 %v325
    %v1494 = vunpack.c.l.b16 %v326
    %v1495 = vunpack.c.h.b16 %v326
    %v1496 = vunpack.c.l.b16 %v327
    %v1497 = vunpack.c.h.b16 %v327
    %v1498 = vunpack.c.l.b16 %v328
    %v1499 = vunpack.c.h.b16 %v328
    %v1500 = vunpack.c.l.b16 %v329
    %v1501 = vunpack.c.h.b16 %v329
    %v1502 = vunpack.c.l.b16 %v330
    %v1503 = vunpack.c.h.b16 %v330
    %v1504 = vunpack.c.l.b16 %v331
    %v1505 = vunpack.c.h.b16 %v331
    %v1506 = vunpack.c.l.b16 %v332
    %v1507 = vunpack.c.h.b16 %v332
    %v1508 = vunpack.c.l.b16 %v333
    %v1509 = vunpack.c.h.b16 %v333
    %v1510 = vunpack.c.l.b16 %v334
    %v1511 = vunpack.c.h.b16 %v334
    %v1512 = vunpack.c.l.b16 %v335
    %v1513 = vunpack.c.h.b16 %v335
    %v1514 = vunpack.c.l.b16 %v336
    %v1515 = vunpack.c.h.b16 %v336
    %v1516 = vunpack.c.l.b16 %v337
    %v1517 = vunpack.c.h.b16 %v337
    %v1518 = vunpack.c.l.b16 %v338
    %v1519 = vunpack.c.h.b16 %v338
    %v1520 = vunpack.c.l.b16 %v339
    %v1521 = vunpack.c.h.b16 %v339
    %v1522 = vunpack.c.l.b16 %v340
    %v1523 = vunpack.c.h.b16 %v340
    %v1524 = vunpack.c.l.b16 %v341
    %v1525 = vunpack.c.h.b16 %v341
    %v1526 = vunpack.c.l.b16 %v342
    %v1527 = vunpack.c.h.b16 %v342
    %v1528 = vunpack.c.l.b16 %v343
    %v1529 = vunpack.c.h.b16 %v343
    %v1530 = vunpack.c.l.b16 %v344
    %v1531 = vunpack.c.h.b16 %v344
    %v1532 = vunpack.c.l.b16 %v345
    %v1533 = vunpack.c.h.b16 %v345
    %v1534 = vunpack.c.l.b16 %v346
    %v1535 = vunpack.c.h.b16 %v346
    %v1536 = vunpack.c.l.b16 %v347
    %v1537 = vunpack.c.h.b16 %v347
    %v1538 = vunpack.c.l.b16 %v348
    %v1539 = vunpack.c.h.b16 %v348
    %v1540 = vunpack.c.l.b16 %v349
    %v1541 = vunpack.c.h.b16 %v349
    %v1542 = vunpack.c.l.b16 %v350
    %v1543 = vunpack.c.h.b16 %v350
    %v1544 = vunpack.c.l.b16 %v351
    %v1545 = vunpack.c.h.b16 %v351
    %v1546 = vunpack.c.l.b16 %v352
    %v1547 = vunpack.c.h.b16 %v352
    %v1548 = vunpack.c.l.b16 %v353
    %v1549 = vunpack.c.h.b16 %v353
    %v1550 = vunpack.c.l.b16 %v354
    %v1551 = vunpack.c.h.b16 %v354
    %v1552 = vunpack.c.l.b16 %v355
    %v1553 = vunpack.c.h.b16 %v355
    %v1554 = vunpack.c.l.b16 %v356
    %v1555 = vunpack.c.h.b16 %v356
    %v1556 = vunpack.c.l.b16 %v357
    %v1557 = vunpack.c.h.b16 %v357
    %v1558 = vunpack.c.l.b16 %v358
    %v1559 = vunpack.c.h.b16 %v358
    %v1560 = vunpack.c.l.b16 %v359
    %v1561 = vunpack.c.h.b16 %v359
    %v1562 = vunpack.c.l.b16 %v360
    %v1563 = vunpack.c.h.b16 %v360
    %v1564 = vunpack.c.l.b16 %v361
    %v1565 = vunpack.c.h.b16 %v361
    %v1566 = vunpack.c.l.b16 %v362
    %v1567 = vunpack.c.h.b16 %v362
    %v1568 = vunpack.c.l.b16 %v363
    %v1569 = vunpack.c.h.b16 %v363
    %v1570 = vunpack.c.l.b16 %v364
    %v1571 = vunpack.c.h.b16 %v364
    %v1572 = vunpack.c.l.b16 %v365
    %v1573 = vunpack.c.h.b16 %v365
    %v1574 = vunpack.c.l.b16 %v366
    %v1575 = vunpack.c.h.b16 %v366
    %v1576 = vunpack.c.l.b16 %v367
    %v1577 = vunpack.c.h.b16 %v367
    %v1578 = vunpack.c.l.b16 %v368
    %v1579 = vunpack.c.h.b16 %v368
    %v1580 = vunpack.c.l.b16 %v369
    %v1581 = vunpack.c.h.b16 %v369
    %v1582 = vunpack.c.l.b16 %v370
    %v1583 = vunpack.c.h.b16 %v370
    %v1584 = vunpack.c.l.b16 %v371
    %v1585 = vunpack.c.h.b16 %v371
    %v1586 = vunpack.c.l.b16 %v372
    %v1587 = vunpack.c.h.b16 %v372
    %v1588 = vunpack.c.l.b16 %v373
    %v1589 = vunpack.c.h.b16 %v373
    %v1590 = vunpack.c.l.b16 %v374
    %v1591 = vunpack.c.h.b16 %v374
    %v1592 = vunpack.c.l.b16 %v375
    %v1593 = vunpack.c.h.b16 %v375
    %v1594 = vunpack.c.l.b16 %v376
    %v1595 = vunpack.c.h.b16 %v376
    %v1596 = vunpack.c.l.b16 %v377
    %v1597 = vunpack.c.h.b16 %v377
    %v1598 = vunpack.c.l.b16 %v378
    %v1599 = vunpack.c.h.b16 %v378
    %v1600 = vunpack.c.l.b16 %v379
    %v1601 = vunpack.c.h.b16 %v379
    %v1602 = vunpack.c.l.b16 %v380
    %v1603 = vunpack.c.h.b16 %v380
    %v1604 = vunpack.c.l.b16 %v381
    %v1605 = vunpack.c.h.b16 %v381
    %v1606 = vunpack.c.l.b16 %v382
    %v1607 = vunpack.c.h.b16 %v382
    %v1608 = vunpack.c.l.b16 %v383
    %v1609 = vunpack.c.h.b16 %v383
    %v1610 = vunpack.c.l.b16 %v384
    %v1611 = vunpack.c.h.b16 %v384
    %v1612 = vunpack.c.l.b16 %v385
    %v1613 = vunpack.c.h.b16 %v385
    %v1614 = vunpack.c.l.b16 %v386
    %v1615 = vunpack.c.h.b16 %v386
    %v1616 = vunpack.c.l.b16 %v387
    %v1617 = vunpack.c.h.b16 %v387
    %v1618 = vunpack.c.l.b16 %v388
    %v1619 = vunpack.c.h.b16 %v388
    %v1620 = vunpack.c.l.b16 %v389
    %v1621 = vunpack.c.h.b16 %v389
    %v1622 = vunpack.c.l.b16 %v390
    %v1623 = vunpack.c.h.b16 %v390
    %v1624 = vunpack.c.l.b16 %v391
    %v1625 = vunpack.c.h.b16 %v391
    %v1626 = vunpack.c.l.b16 %v392
    %v1627 = vunpack.c.h.b16 %v392
    %v1628 = vunpack.c.l.b16 %v393
    %v1629 = vunpack.c.h.b16 %v393
    %v1630 = vunpack.c.l.b16 %v394
    %v1631 = vunpack.c.h.b16 %v394
    %v1632 = vunpack.c.l.b16 %v395
    %v1633 = vunpack.c.h.b16 %v395
    %v1634 = vunpack.c.l.b16 %v396
    %v1635 = vunpack.c.h.b16 %v396
    %v1636 = vunpack.c.l.b16 %v397
    %v1637 = vunpack.c.h.b16 %v397
    %v1638 = vunpack.c.l.b16 %v398
    %v1639 = vunpack.c.h.b16 %v398
    %v1640 = vunpack.c.l.b16 %v399
    %v1641 = vunpack.c.h.b16 %v399
    %v1642 = vunpack.c.l.b16 %v400
    %v1643 = vunpack.c.h.b16 %v400
    %v1644 = vunpack.c.l.b16 %v401
    %v1645 = vunpack.c.h.b16 %v401
    %v1646 = vunpack.c.l.b16 %v402
    %v1647 = vunpack.c.h.b16 %v402
    %v1648 = vunpack.c.l.b16 %v403
    %v1649 = vunpack.c.h.b16 %v403
    %v1650 = vunpack.c.l.b16 %v404
    %v1651 = vunpack.c.h.b16 %v404
    %v1652 = vunpack.c.l.b16 %v405
    %v1653 = vunpack.c.h.b16 %v405
    %v1654 = vunpack.c.l.b16 %v406
    %v1655 = vunpack.c.h.b16 %v406
    %v1656 = vunpack.c.l.b16 %v407
    %v1657 = vunpack.c.h.b16 %v407
    %v1658 = vunpack.c.l.b16 %v408
    %v1659 = vunpack.c.h.b16 %v408
    %v1660 = vunpack.c.l.b16 %v409
    %v1661 = vunpack.c.h.b16 %v409
    %v1662 = vunpack.c.l.b16 %v410
    %v1663 = vunpack.c.h.b16 %v410
    %v1664 = vunpack.c.l.b16 %v411
    %v1665 = vunpack.c.h.b16 %v411
    %v1666 = vunpack.c.l.b16 %v412
    %v1667 = vunpack.c.h.b16 %v412
    %v1668 = vunpack.c.l.b16 %v413
    %v1669 = vunpack.c.h.b16 %v413
    %v1670 = vunpack.c.l.b16 %v414
    %v1671 = vunpack.c.h.b16 %v414
    %v1672 = vunpack.c.l.b16 %v415
    %v1673 = vunpack.c.h.b16 %v415
    %v1674 = vunpack.c.l.b16 %v416
    %v1675 = vunpack.c.h.b16 %v416
    %v1676 = vunpack.c.l.b16 %v417
    %v1677 = vunpack.c.h.b16 %v417
    %v1678 = vunpack.c.l.b16 %v418
    %v1679 = vunpack.c.h.b16 %v418
    %v1680 = vunpack.c.l.b16 %v419
    %v1681 = vunpack.c.h.b16 %v419
    %v1682 = vunpack.c.l.b16 %v420
    %v1683 = vunpack.c.h.b16 %v420
    %v1684 = vunpack.c.l.b16 %v421
    %v1685 = vunpack.c.h.b16 %v421
    %v1686 = vunpack.c.l.b16 %v422
    %v1687 = vunpack.c.h.b16 %v422
    %v1688 = vunpack.c.l.b16 %v423
    %v1689 = vunpack.c.h.b16 %v423
    %v1690 = vunpack.c.l.b16 %v424
    %v1691 = vunpack.c.h.b16 %v424
    %v1692 = vunpack.c.l.b16 %v425
    %v1693 = vunpack.c.h.b16 %v425
    %v1694 = vunpack.c.l.b16 %v426
    %v1695 = vunpack.c.h.b16 %v426
    %v1696 = vunpack.c.l.b16 %v427
    %v1697 = vunpack.c.h.b16 %v427
    %v1698 = vunpack.c.l.b16 %v428
    %v1699 = vunpack.c.h.b16 %v428
    %v1700 = vunpack.c.l.b16 %v429
    %v1701 = vunpack.c.h.b16 %v429
    %v1702 = vunpack.c.l.b16 %v430
    %v1703 = vunpack.c.h.b16 %v430
    %v1704 = vunpack.c.l.b16 %v431
    %v1705 = vunpack.c.h.b16 %v431
    %v1706 = vunpack.c.l.b16 %v432
    %v1707 = vunpack.c.h.b16 %v432
    %v1708 = vunpack.c.l.b16 %v433
    %v1709 = vunpack.c.h.b16 %v433
    %v1710 = vunpack.c.l.b16 %v434
    %v1711 = vunpack.c.h.b16 %v434
    %v1712 = vunpack.c.l.b16 %v435
    %v1713 = vunpack.c.h.b16 %v435
    %v1714 = vunpack.c.l.b16 %v436
    %v1715 = vunpack.c.h.b16 %v436
    %v1716 = vunpack.c.l.b16 %v437
    %v1717 = vunpack.c.h.b16 %v437
    %v1718 = vunpack.c.l.b16 %v438
    %v1719 = vunpack.c.h.b16 %v438
    %v1720 = vunpack.c.l.b16 %v439
    %v1721 = vunpack.c.h.b16 %v439
    %v1722 = vunpack.c.l.b16 %v440
    %v1723 = vunpack.c.h.b16 %v440
    %v1724 = vunpack.c.l.b16 %v441
    %v1725 = vunpack.c.h.b16 %v441
    %v1726 = vunpack.c.l.b16 %v442
    %v1727 = vunpack.c.h.b16 %v442
    %v1728 = vunpack.c.l.b16 %v443
    %v1729 = vunpack.c.h.b16 %v443
    %v1730 = vunpack.c.l.b16 %v444
    %v1731 = vunpack.c.h.b16 %v444
    %v1732 = vunpack.c.l.b16 %v445
    %v1733 = vunpack.c.h.b16 %v445
    %v1734 = vunpack.c.l.b16 %v446
    %v1735 = vunpack.c.h.b16 %v446
    %v1736 = vunpack.c.l.b16 %v447
    %v1737 = vunpack.c.h.b16 %v447
    %v1738 = vunpack.c.l.b16 %v448
    %v1739 = vunpack.c.h.b16 %v448
    %v1740 = vunpack.c.l.b16 %v449
    %v1741 = vunpack.c.h.b16 %v449
    %v1742 = vunpack.c.l.b16 %v450
    %v1743 = vunpack.c.h.b16 %v450
    %v1744 = vunpack.c.l.b16 %v451
    %v1745 = vunpack.c.h.b16 %v451
    %v1746 = vunpack.c.l.b16 %v452
    %v1747 = vunpack.c.h.b16 %v452
    %v1748 = vunpack.c.l.b16 %v453
    %v1749 = vunpack.c.h.b16 %v453
    %v1750 = vunpack.c.l.b16 %v454
    %v1751 = vunpack.c.h.b16 %v454
    %v1752 = vunpack.c.l.b16 %v455
    %v1753 = vunpack.c.h.b16 %v455
    %v1754 = vunpack.c.l.b16 %v456
    %v1755 = vunpack.c.h.b16 %v456
    %v1756 = vunpack.c.l.b16 %v457
    %v1757 = vunpack.c.h.b16 %v457
    %v1758 = vunpack.c.l.b16 %v458
    %v1759 = vunpack.c.h.b16 %v458
    %v1760 = vunpack.c.l.b16 %v459
    %v1761 = vunpack.c.h.b16 %v459
    %v1762 = vunpack.c.l.b16 %v460
    %v1763 = vunpack.c.h.b16 %v460
    %v1764 = vunpack.c.l.b16 %v461
    %v1765 = vunpack.c.h.b16 %v461
    %v1766 = vunpack.c.l.b16 %v462
    %v1767 = vunpack.c.h.b16 %v462
    %v1768 = vunpack.c.l.b16 %v463
    %v1769 = vunpack.c.h.b16 %v463
    %v1770 = vunpack.c.l.b16 %v464
    %v1771 = vunpack.c.h.b16 %v464
    %v1772 = vunpack.c.l.b16 %v465
    %v1773 = vunpack.c.h.b16 %v465
    %v1774 = vunpack.c.l.b16 %v466
    %v1775 = vunpack.c.h.b16 %v466
    %v1776 = vunpack.c.l.b16 %v467
    %v1777 = vunpack.c.h.b16 %v467
    %v1778 = vunpack.c.l.b16 %v468
    %v1779 = vunpack.c.h.b16 %v468
    %v1780 = vunpack.c.l.b16 %v469
    %v1781 = vunpack.c.h.b16 %v469
    %v1782 = vunpack.c.l.b16 %v470
    %v1783 = vunpack.c.h.b16 %v470
    %v1784 = vunpack.c.l.b16 %v471
    %v1785 = vunpack.c.h.b16 %v471
    %v1786 = vunpack.c.l.b16 %v472
    %v1787 = vunpack.c.h.b16 %v472
    %v1788 = vunpack.c.l.b16 %v473
    %v1789 = vunpack.c.h.b16 %v473
    %v1790 = vunpack.c.l.b16 %v474
    %v1791 = vunpack.c.h.b16 %v474
    %v1792 = vunpack.c.l.b16 %v475
    %v1793 = vunpack.c.h.b16 %v475
    %v1794 = vunpack.c.l.b16 %v476
    %v1795 = vunpack.c.h.b16 %v476
    %v1796 = vunpack.c.l.b16 %v477
    %v1797 = vunpack.c.h.b16 %v477
    %v1798 = vunpack.c.l.b16 %v478
    %v1799 = vunpack.c.h.b16 %v478
    %v1800 = vunpack.c.l.b16 %v479
    %v1801 = vunpack.c.h.b16 %v479
    %v1802 = vunpack.c.l.b16 %v480
    %v1803 = vunpack.c.h.b16 %v480
    %v1804 = vunpack.c.l.b16 %v481
    %v1805 = vunpack.c.h.b16 %v481
    %v1806 = vunpack.c.l.b16 %v482
    %v1807 = vunpack.c.h.b16 %v482
    %v1808 = vunpack.c.l.b16 %v483
    %v1809 = vunpack.c.h.b16 %v483
    %v1810 = vunpack.c.l.b16 %v484
    %v1811 = vunpack.c.h.b16 %v484
    %v1812 = vunpack.c.l.b16 %v485
    %v1813 = vunpack.c.h.b16 %v485
    %v1814 = vunpack.c.l.b16 %v486
    %v1815 = vunpack.c.h.b16 %v486
    %v1816 = vunpack.c.l.b16 %v487
    %v1817 = vunpack.c.h.b16 %v487
    %v1818 = vunpack.c.l.b16 %v488
    %v1819 = vunpack.c.h.b16 %v488
    %v1820 = vunpack.c.l.b16 %v489
    %v1821 = vunpack.c.h.b16 %v489
    %v1822 = vunpack.c.l.b16 %v490
    %v1823 = vunpack.c.h.b16 %v490
    %v1824 = vunpack.c.l.b16 %v491
    %v1825 = vunpack.c.h.b16 %v491
    %v1826 = vunpack.c.l.b16 %v492
    %v1827 = vunpack.c.h.b16 %v492
    %v1828 = vunpack.c.l.b16 %v493
    %v1829 = vunpack.c.h.b16 %v493
    %v1830 = vunpack.c.l.b16 %v494
    %v1831 = vunpack.c.h.b16 %v494
    %v1832 = vunpack.c.l.b16 %v495
    %v1833 = vunpack.c.h.b16 %v495
    %v1834 = vunpack.c.l.b16 %v496
    %v1835 = vunpack.c.h.b16 %v496
    %v1836 = vunpack.c.l.b16 %v497
    %v1837 = vunpack.c.h.b16 %v497
    %v1838 = vunpack.c.l.b16 %v498
    %v1839 = vunpack.c.h.b16 %v498
    %v1840 = vunpack.c.l.b16 %v499
    %v1841 = vunpack.c.h.b16 %v499
    %v1842 = vunpack.c.l.b16 %v500
    %v1843 = vunpack.c.h.b16 %v500
    %v1844 = vunpack.c.l.b16 %v501
    %v1845 = vunpack.c.h.b16 %v501
    %v1846 = vunpack.c.l.b16 %v502
    %v1847 = vunpack.c.h.b16 %v502
    %v1848 = vunpack.c.l.b16 %v503
    %v1849 = vunpack.c.h.b16 %v503
    %v1850 = vunpack.c.l.b16 %v504
    %v1851 = vunpack.c.h.b16 %v504
    %v1852 = vunpack.c.l.b16 %v505
    %v1853 = vunpack.c.h.b16 %v505
    %v1854 = vunpack.c.l.b16 %v506
    %v1855 = vunpack.c.h.b16 %v506
    %v1856 = vunpack.c.l.b16 %v507
    %v1857 = vunpack.c.h.b16 %v507
    %v1858 = vunpack.c.l.b16 %v508
    %v1859 = vunpack.c.h.b16 %v508
    %v1860 = vunpack.c.l.b16 %v509
    %v1861 = vunpack.c.h.b16 %v509
    %v1862 = vunpack.c.l.b16 %v510
    %v1863 = vunpack.c.h.b16 %v510
    %v1864 = vunpack.c.l.b16 %v511
    %v1865 = vunpack.c.h.b16 %v511
    %v1866 = vunpack.c.l.b16 %v512
    %v1867 = vunpack.c.h.b16 %v512
    %v1868 = vunpack.c.l.b16 %v513
    %v1869 = vunpack.c.h.b16 %v513
    %v1870 = vunpack.c.l.b16 %v514
    %v1871 = vunpack.c.h.b16 %v514
    %v1872 = vunpack.c.l.b16 %v515
    %v1873 = vunpack.c.h.b16 %v515
    %v1874 = vunpack.c.l.b16 %v516
    %v1875 = vunpack.c.h.b16 %v516
    %v1876 = vunpack.c.l.b16 %v517
    %v1877 = vunpack.c.h.b16 %v517
    %v1878 = vunpack.c.l.b16 %v518
    %v1879 = vunpack.c.h.b16 %v518
    %v1880 = vunpack.c.l.b16 %v519
    %v1881 = vunpack.c.h.b16 %v519
    %v1882 = vunpack.c.l.b16 %v520
    %v1883 = vunpack.c.h.b16 %v520
    %v1884 = vunpack.c.l.b16 %v521
    %v1885 = vunpack.c.h.b16 %v521
    %v1886 = vunpack.c.l.b16 %v522
    %v1887 = vunpack.c.h.b16 %v522
    %v1888 = vunpack.c.l.b16 %v523
    %v1889 = vunpack.c.h.b16 %v523
    %v1890 = vunpack.c.l.b16 %v524
    %v1891 = vunpack.c.h.b16 %v524
    %v1892 = vunpack.c.l.b16 %v525
    %v1893 = vunpack.c.h.b16 %v525
    %v1894 = vunpack.c.l.b16 %v526
    %v1895 = vunpack.c.h.b16 %v526
    %v1896 = vunpack.c.l.b16 %v527
    %v1897 = vunpack.c.h.b16 %v527
    %v1898 = vunpack.c.l.b16 %v528
    %v1899 = vunpack.c.h.b16 %v528
    %v1900 = vunpack.c.l.b16 %v529
    %v1901 = vunpack.c.h.b16 %v529
    %v1902 = vunpack.c.l.b16 %v530
    %v1903 = vunpack.c.h.b16 %v530
    %v1904 = vunpack.c.l.b16 %v531
    %v1905 = vunpack.c.h.b16 %v531
    %v1906 = vunpack.c.l.b16 %v532
    %v1907 = vunpack.c.h.b16 %v532
    %v1908 = vunpack.c.l.b16 %v533
    %v1909 = vunpack.c.h.b16 %v533
    %v1910 = vunpack.c.l.b16 %v534
    %v1911 = vunpack.c.h.b16 %v534
    %v1912 = vunpack.c.l.b16 %v535
    %v1913 = vunpack.c.h.b16 %v535
    %v1914 = vunpack.c.l.b16 %v536
    %v1915 = vunpack.c.h.b16 %v536
    %v1916 = vunpack.c.l.b16 %v537
    %v1917 = vunpack.c.h.b16 %v537
    %v1918 = vunpack.c.l.b16 %v538
    %v1919 = vunpack.c.h.b16 %v538
    %v1920 = vunpack.c.l.b16 %v539
    %v1921 = vunpack.c.h.b16 %v539
    %v1922 = vunpack.c.l.b16 %v540
    %v1923 = vunpack.c.h.b16 %v540
    %v1924 = vunpack.c.l.b16 %v541
    %v1925 = vunpack.c.h.b16 %v541
    %v1926 = vunpack.c.l.b16 %v542
    %v1927 = vunpack.c.h.b16 %v542
    %v1928 = vunpack.c.l.b16 %v543
    %v1929 = vunpack.c.h.b16 %v543
    %v1930 = vunpack.c.l.b16 %v544
    %v1931 = vunpack.c.h.b16 %v544
    %v1932 = vunpack.c.l.b16 %v545
    %v1933 = vunpack.c.h.b16 %v545
    %v1934 = vunpack.c.l.b16 %v546
    %v1935 = vunpack.c.h.b16 %v546
    %v1936 = vunpack.c.l.b16 %v547
    %v1937 = vunpack.c.h.b16 %v547
    %v1938 = vunpack.c.l.b16 %v548
    %v1939 = vunpack.c.h.b16 %v548
    %v1940 = vunpack.c.l.b16 %v549
    %v1941 = vunpack.c.h.b16 %v549
    %v1942 = vunpack.c.l.b16 %v550
    %v1943 = vunpack.c.h.b16 %v550
    %v1944 = vunpack.c.l.b16 %v551
    %v1945 = vunpack.c.h.b16 %v551
    %v1946 = vunpack.c.l.b16 %v552
    %v1947 = vunpack.c.h.b16 %v552
    %v1948 = vunpack.c.l.b16 %v553
    %v1949 = vunpack.c.h.b16 %v553
    %v1950 = vunpack.c.l.b16 %v554
    %v1951 = vunpack.c.h.b16 %v554
    %v1952 = vunpack.c.l.b16 %v555
    %v1953 = vunpack.c.h.b16 %v555
    %v1954 = vunpack.c.l.b16 %v556
    %v1955 = vunpack.c.h.b16 %v556
    %v1956 = vunpack.c.l.b16 %v557
    %v1957 = vunpack.c.h.b16 %v557
    %v1958 = vunpack.c.l.b16 %v558
    %v1959 = vunpack.c.h.b16 %v558
    %v1960 = vunpack.c.l.b16 %v559
    %v1961 = vunpack.c.h.b16 %v559
    %v1962 = vunpack.c.l.b16 %v560
    %v1963 = vunpack.c.h.b16 %v560
    %v1964 = vunpack.c.l.b16 %v561
    %v1965 = vunpack.c.h.b16 %v561
    %v1966 = vunpack.c.l.b16 %v562
    %v1967 = vunpack.c.h.b16 %v562
    %v1968 = vunpack.c.l.b16 %v563
    %v1969 = vunpack.c.h.b16 %v563
    %v1970 = vunpack.c.l.b16 %v564
    %v1971 = vunpack.c.h.b16 %v564
    %v1972 = vunpack.c.l.b16 %v565
    %v1973 = vunpack.c.h.b16 %v565
    %v1974 = vunpack.c.l.b16 %v566
    %v1975 = vunpack.c.h.b16 %v566
    %v1976 = vunpack.c.l.b16 %v567
    %v1977 = vunpack.c.h.b16 %v567
    %v1978 = vunpack.c.l.b16 %v568
    %v1979 = vunpack.c.h.b16 %v568
    %v1980 = vpack.c.b16 %v1092, %v1084
    %v1981 = vpack.c.b16 %v1093, %v1085
    %v1982 = vpack.c.b16 %v1094, %v1086
    %v1983 = vpack.c.b16 %v1095, %v1087
    %v1984 = vpack.c.b16 %v1096, %v1088
    %v1985 = vpack.c.b16 %v1097, %v1089
    %v1986 = vpack.c.b16 %v1098, %v1090
    %v1987 = vpack.c.b16 %v1099, %v1091
    %v1988 = vpack.c.b16 %v1108, %v1100
    %v1989 = vpack.c.b16 %v1109, %v1101
    %v1990 = vpack.c.b16 %v1110, %v1102
    %v1991 = vpack.c.b16 %v1111, %v1103
    %v1992 = vpack.c.b16 %v1112, %v1104
    %v1993 = vpack.c.b16 %v1113, %v1105
    %v1994 = vpack.c.b16 %v1114, %v1106
    %v1995 = vpack.c.b16 %v1115, %v1107
    %v1996 = vpack.c.b16 %v1124, %v1116
    %v1997 = vpack.c.b16 %v1125, %v1117
    %v1998 = vpack.c.b16 %v1126, %v1118
    %v1999 = vpack.c.b16 %v1127, %v1119
    %v2000 = vpack.c.b16 %v1128, %v1120
    %v2001 = vpack.c.b16 %v1129, %v1121
    %v2002 = vpack.c.b16 %v1130, %v1122
    %v2003 = vpack.c.b16 %v1131, %v1123
    %v2004 = vpack.c.b16 %v1140, %v1132
    %v2005 = vpack.c.b16 %v1141, %v1133
    %v2006 = vpack.c.b16 %v1142, %v1134
    %v2007 = vpack.c.b16 %v1143, %v1135
    %v2008 = vpack.c.b16 %v1144, %v1136
    %v2009 = vpack.c.b16 %v1145, %v1137
    %v2010 = vpack.c.b16 %v1146, %v1138
    %v2011 = vpack.c.b16 %v1147, %v1139
    %v2012 = vpack.c.b16 %v1156, %v1148
    %v2013 = vpack.c.b16 %v1157, %v1149
    %v2014 = vpack.c.b16 %v1158, %v1150
    %v2015 = vpack.c.b16 %v1159, %v1151
    %v2016 = vpack.c.b16 %v1160, %v1152
    %v2017 = vpack.c.b16 %v1161, %v1153
    %v2018 = vpack.c.b16 %v1162, %v1154
    %v2019 = vpack.c.b16 %v1163, %v1155
    %v2020 = vpack.c.b16 %v1172, %v1164
    %v2021 = vpack.c.b16 %v1173, %v1165
    %v2022 = vpack.c.b16 %v1174, %v1166
    %v2023 = vpack.c.b16 %v1175, %v1167
    %v2024 = vpack.c.b16 %v1176, %v1168
    %v2025 = vpack.c.b16 %v1177, %v1169
    %v2026 = vpack.c.b16 %v1178, %v1170
    %v2027 = vpack.c.b16 %v1179, %v1171
    %v2028 = vpack.c.b16 %v1188, %v1180
    %v2029 = vpack.c.b16 %v1189, %v1181
    %v2030 = vpack.c.b16 %v1190, %v1182
    %v2031 = vpack.c.b16 %v1191, %v1183
    %v2032 = vpack.c.b16 %v1192, %v1184
    %v2033 = vpack.c.b16 %v1193, %v1185
    %v2034 = vpack.c.b16 %v1194, %v1186
    %v2035 = vpack.c.b16 %v1195, %v1187
    %v2036 = vpack.c.b16 %v1204, %v1196
    %v2037 = vpack.c.b16 %v1205, %v1197
    %v2038 = vpack.c.b16 %v1206, %v1198
    %v2039 = vpack.c.b16 %v1207, %v1199
    %v2040 = vpack.c.b16 %v1208, %v1200
    %v2041 = vpack.c.b16 %v1209, %v1201
    %v2042 = vpack.c.b16 %v1210, %v1202
    %v2043 = vpack.c.b16 %v1211, %v1203
    %v2044 = vpack.c.b16 %v1220, %v1212
    %v2045 = vpack.c.b16 %v1221, %v1213
    %v2046 = vpack.c.b16 %v1222, %v1214
    %v2047 = vpack.c.b16 %v1223, %v1215
    %v2048 = vpack.c.b16 %v1224, %v1216
    %v2049 = vpack.c.b16 %v1225, %v1217
    %v2050 = vpack.c.b16 %v1226, %v1218
    %v2051 = vpack.c.b16 %v1227, %v1219
    %v2052 = vpack.c.b16 %v1236, %v1228
    %v2053 = vpack.c.b16 %v1237, %v1229
    %v2054 = vpack.c.b16 %v1238, %v1230
    %v2055 = vpack.c.b16 %v1239, %v1231
    %v2056 = vpack.c.b16 %v1240, %v1232
    %v2057 = vpack.c.b16 %v1241, %v1233
    %v2058 = vpack.c.b16 %v1242, %v1234
    %v2059 = vpack.c.b16 %v1243, %v1235
    %v2060 = vpack.c.b16 %v1252, %v1244
    %v2061 = vpack.c.b16 %v1253, %v1245
    %v2062 = vpack.c.b16 %v1254, %v1246
    %v2063 = vpack.c.b16 %v1255, %v1247
    %v2064 = vpack.c.b16 %v1256, %v1248
    %v2065 = vpack.c.b16 %v1257, %v1249
    %v2066 = vpack.c.b16 %v1258, %v1250
    %v2067 = vpack.c.b16 %v1259, %v1251
    %v2068 = vpack.c.b16 %v1268, %v1260
    %v2069 = vpack.c.b16 %v1269, %v1261
    %v2070 = vpack.c.b16 %v1270, %v1262
    %v2071 = vpack.c.b16 %v1271, %v1263
    %v2072 = vpack.c.b16 %v1272, %v1264
    %v2073 = vpack.c.b16 %v1273, %v1265
    %v2074 = vpack.c.b16 %v1274, %v1266
    %v2075 = vpack.c.b16 %v1275, %v1267
    %v2076 = vpack.c.b16 %v1284, %v1276
    %v2077 = vpack.c.b16 %v1285, %v1277
    %v2078 = vpack.c.b16 %v1286, %v1278
    %v2079 = vpack.c.b16 %v1287, %v1279
    %v2080 = vpack.c.b16 %v1288, %v1280
    %v2081 = vpack.c.b16 %v1289, %v1281
    %v2082 = vpack.c.b16 %v1290, %v1282
    %v2083 = vpack.c.b16 %v1291, %v1283
    %v2084 = vpack.c.b16 %v1300, %v1292
    %v2085 = vpack.c.b16 %v1301, %v1293
    %v2086 = vpack.c.b16 %v1302, %v1294
    %v2087 = vpack.c.b16 %v1303, %v1295
    %v2088 = vpack.c.b16 %v1304, %v1296
    %v2089 = vpack.c.b16 %v1305, %v1297
    %v2090 = vpack.c.b16 %v1306, %v1298
    %v2091 = vpack.c.b16 %v1307, %v1299
    %v2092 = vpack.c.b16 %v1316, %v1308
    %v2093 = vpack.c.b16 %v1317, %v1309
    %v2094 = vpack.c.b16 %v1318, %v1310
    %v2095 = vpack.c.b16 %v1319, %v1311
    %v2096 = vpack.c.b16 %v1320, %v1312
    %v2097 = vpack.c.b16 %v1321, %v1313
    %v2098 = vpack.c.b16 %v1322, %v1314
    %v2099 = vpack.c.b16 %v1323, %v1315
    %v2100 = vpack.c.b16 %v1332, %v1324
    %v2101 = vpack.c.b16 %v1333, %v1325
    %v2102 = vpack.c.b16 %v1334, %v1326
    %v2103 = vpack.c.b16 %v1335, %v1327
    %v2104 = vpack.c.b16 %v1336, %v1328
    %v2105 = vpack.c.b16 %v1337, %v1329
    %v2106 = vpack.c.b16 %v1338, %v1330
    %v2107 = vpack.c.b16 %v1339, %v1331
    %v2108 = vpack.c.b16 %v1348, %v1340
    %v2109 = vpack.c.b16 %v1349, %v1341
    %v2110 = vpack.c.b16 %v1350, %v1342
    %v2111 = vpack.c.b16 %v1351, %v1343
    %v2112 = vpack.c.b16 %v1352, %v1344
    %v2113 = vpack.c.b16 %v1353, %v1345
    %v2114 = vpack.c.b16 %v1354, %v1346
    %v2115 = vpack.c.b16 %v1355, %v1347
    %v2116 = vpack.c.b16 %v1364, %v1356
    %v2117 = vpack.c.b16 %v1365, %v1357
    %v2118 = vpack.c.b16 %v1366, %v1358
    %v2119 = vpack.c.b16 %v1367, %v1359
    %v2120 = vpack.c.b16 %v1368, %v1360
    %v2121 = vpack.c.b16 %v1369, %v1361
    %v2122 = vpack.c.b16 %v1370, %v1362
    %v2123 = vpack.c.b16 %v1371, %v1363
    %v2124 = vpack.c.b16 %v1380, %v1372
    %v2125 = vpack.c.b16 %v1381, %v1373
    %v2126 = vpack.c.b16 %v1382, %v1374
    %v2127 = vpack.c.b16 %v1383, %v1375
    %v2128 = vpack.c.b16 %v1384, %v1376
    %v2129 = vpack.c.b16 %v1385, %v1377
    %v2130 = vpack.c.b16 %v1386, %v1378
    %v2131 = vpack.c.b16 %v1387, %v1379
    %v2132 = vpack.c.b16 %v1396, %v1388
    %v2133 = vpack.c.b16 %v1397, %v1389
    %v2134 = vpack.c.b16 %v1398, %v1390
    %v2135 = vpack.c.b16 %v1399, %v1391
    %v2136 = vpack.c.b16 %v1400, %v1392
    %v2137 = vpack.c.b16 %v1401, %v1393
    %v2138 = vpack.c.b16 %v1402, %v1394
    %v2139 = vpack.c.b16 %v1403, %v1395
    %v2140 = vpack.c.b16 %v1412, %v1404
    %v2141 = vpack.c.b16 %v1413, %v1405
    %v2142 = vpack.c.b16 %v1414, %v1406
    %v2143 = vpack.c.b16 %v1415, %v1407
    %v2144 = vpack.c.b16 %v1416, %v1408
    %v2145 = vpack.c.b16 %v1417, %v1409
    %v2146 = vpack.c.b16 %v1418, %v1410
    %v2147 = vpack.c.b16 %v1419, %v1411
    %v2148 = vpack.c.b16 %v1428, %v1420
    %v2149 = vpack.c.b16 %v1429, %v1421
    %v2150 = vpack.c.b16 %v1430, %v1422
    %v2151 = vpack.c.b16 %v1431, %v1423
    %v2152 = vpack.c.b16 %v1432, %v1424
    %v2153 = vpack.c.b16 %v1433, %v1425
    %v2154 = vpack.c.b16 %v1434, %v1426
    %v2155 = vpack.c.b16 %v1435, %v1427
    %v2156 = vpack.c.b16 %v1444, %v1436
    %v2157 = vpack.c.b16 %v1445, %v1437
    %v2158 = vpack.c.b16 %v1446, %v1438
    %v2159 = vpack.c.b16 %v1447, %v1439
    %v2160 = vpack.c.b16 %v1448, %v1440
    %v2161 = vpack.c.b16 %v1449, %v1441
    %v2162 = vpack.c.b16 %v1450, %v1442
    %v2163 = vpack.c.b16 %v1451, %v1443
    %v2164 = vpack.c.b16 %v1460, %v1452
    %v2165 = vpack.c.b16 %v1461, %v1453
    %v2166 = vpack.c.b16 %v1462, %v1454
    %v2167 = vpack.c.b16 %v1463, %v1455
    %v2168 = vpack.c.b16 %v1464, %v1456
    %v2169 = vpack.c.b16 %v1465, %v1457
    %v2170 = vpack.c.b16 %v1466, %v1458
    %v2171 = vpack.c.b16 %v1467, %v1459
    %v2172 = vpack.c.b16 %v1476, %v1468
    %v2173 = vpack.c.b16 %v1477, %v1469
    %v2174 = vpack.c.b16 %v1478, %v1470
    %v2175 = vpack.c.b16 %v1479, %v1471
    %v2176 = vpack.c.b16 %v1480, %v1472
    %v2177 = vpack.c.b16 %v1481, %v1473
    %v2178 = vpack.c.b16 %v1482, %v1474
    %v2179 = vpack.c.b16 %v1483, %v1475
    %v2180 = vpack.c.b16 %v1492, %v1484
    %v2181 = vpack.c.b16 %v1493, %v1485
    %v2182 = vpack.c.b16 %v1494, %v1486
    %v2183 = vpack.c.b16 %v1495, %v1487
    %v2184 = vpack.c.b16 %v1496, %v1488
    %v2185 = vpack.c.b16 %v1497, %v1489
    %v2186 = vpack.c.b16 %v1498, %v1490
    %v2187 = vpack.c.b16 %v1499, %v1491
    %v2188 = vpack.c.b16 %v1508, %v1500
    %v2189 = vpack.c.b16 %v1509, %v1501
    %v2190 = vpack.c.b16 %v1510, %v1502
    %v2191 = vpack.c.b16 %v1511, %v1503
    %v2192 = vpack.c.b16 %v1512, %v1504
    %v2193 = vpack.c.b16 %v1513, %v1505
    %v2194 = vpack.c.b16 %v1514, %v1506
    %v2195 = vpack.c.b16 %v1515, %v1507
    %v2196 = vpack.c.b16 %v1524, %v1516
    %v2197 = vpack.c.b16 %v1525, %v1517
    %v2198 = vpack.c.b16 %v1526, %v1518
    %v2199 = vpack.c.b16 %v1527, %v1519
    %v2200 = vpack.c.b16 %v1528, %v1520
    %v2201 = vpack.c.b16 %v1529, %v1521
    %v2202 = vpack.c.b16 %v1530, %v1522
    %v2203 = vpack.c.b16 %v1531, %v1523
    %v2204 = vpack.c.b16 %v1540, %v1532
    %v2205 = vpack.c.b16 %v1541, %v1533
    %v2206 = vpack.c.b16 %v1542, %v1534
    %v2207 = vpack.c.b16 %v1543, %v1535
    %v2208 = vpack.c.b16 %v1544, %v1536
    %v2209 = vpack.c.b16 %v1545, %v1537
    %v2210 = vpack.c.b16 %v1546, %v1538
    %v2211 = vpack.c.b16 %v1547, %v1539
    %v2212 = vpack.c.b16 %v1556, %v1548
    %v2213 = vpack.c.b16 %v1557, %v1549
    %v2214 = vpack.c.b16 %v1558, %v1550
    %v2215 = vpack.c.b16 %v1559, %v1551
    %v2216 = vpack.c.b16 %v1560, %v1552
    %v2217 = vpack.c.b16 %v1561, %v1553
    %v2218 = vpack.c.b16 %v1562, %v1554
    %v2219 = vpack.c.b16 %v1563, %v1555
    %v2220 = vpack.c.b16 %v1572, %v1564
    %v2221 = vpack.c.b16 %v1573, %v1565
    %v2222 = vpack.c.b16 %v1574, %v1566
    %v2223 = vpack.c.b16 %v1575, %v1567
    %v2224 = vpack.c.b16 %v1576, %v1568
    %v2225 = vpack.c.b16 %v1577, %v1569
    %v2226 = vpack.c.b16 %v1578, %v1570
    %v2227 = vpack.c.b16 %v1579, %v1571
    %v2228 = vpack.c.b16 %v1588, %v1580
    %v2229 = vpack.c.b16 %v1589, %v1581
    %v2230 = vpack.c.b16 %v1590, %v1582
    %v2231 = vpack.c.b16 %v1591, %v1583
    %v2232 = vpack.c.b16 %v1592, %v1584
    %v2233 = vpack.c.b16 %v1593, %v1585
    %v2234 = vpack.c.b16 %v1594, %v1586
    %v2235 = vpack.c.b16 %v1595, %v1587
    %v2236 = vpack.c.b16 %v1604, %v1596
    %v2237 = vpack.c.b16 %v1605, %v1597
    %v2238 = vpack.c.b16 %v1606, %v1598
    %v2239 = vpack.c.b16 %v1607, %v1599
    %v2240 = vpack.c.b16 %v1608, %v1600
    %v2241 = vpack.c.b16 %v1609, %v1601
    %v2242 = vpack.c.b16 %v1610, %v1602
    %v2243 = vpack.c.b16 %v1611, %v1603
    %v2244 = vpack.c.b16 %v1620, %v1612
    %v2245 = vpack.c.b16 %v1621, %v1613
    %v2246 = vpack.c.b16 %v1622, %v1614
    %v2247 = vpack.c.b16 %v1623, %v1615
    %v2248 = vpack.c.b16 %v1624, %v1616
    %v2249 = vpack.c.b16 %v1625, %v1617
    %v2250 = vpack.c.b16 %v1626, %v1618
    %v2251 = vpack.c.b16 %v1627, %v1619
    %v2252 = vpack.c.b16 %v1636, %v1628
    %v2253 = vpack.c.b16 %v1637, %v1629
    %v2254 = vpack.c.b16 %v1638, %v1630
    %v2255 = vpack.c.b16 %v1639, %v1631
    %v2256 = vpack.c.b16 %v1640, %v1632
    %v2257 = vpack.c.b16 %v1641, %v1633
    %v2258 = vpack.c.b16 %v1642, %v1634
    %v2259 = vpack.c.b16 %v1643, %v1635
    %v2260 = vpack.c.b16 %v1652, %v1644
    %v2261 = vpack.c.b16 %v1653, %v1645
    %v2262 = vpack.c.b16 %v1654, %v1646
    %v2263 = vpack.c.b16 %v1655, %v1647
    %v2264 = vpack.c.b16 %v1656, %v1648
    %v2265 = vpack.c.b16 %v1657, %v1649
    %v2266 = vpack.c.b16 %v1658, %v1650
    %v2267 = vpack.c.b16 %v1659, %v1651
    %v2268 = vpack.c.b16 %v1668, %v1660
    %v2269 = vpack.c.b16 %v1669, %v1661
    %v2270 = vpack.c.b16 %v1670, %v1662
    %v2271 = vpack.c.b16 %v1671, %v1663
    %v2272 = vpack.c.b16 %v1672, %v1664
    %v2273 = vpack.c.b16 %v1673, %v1665
    %v2274 = vpack.c.b16 %v1674, %v1666
    %v2275 = vpack.c.b16 %v1675, %v1667
    %v2276 = vpack.c.b16 %v1684, %v1676
    %v2277 = vpack.c.b16 %v1685, %v1677
    %v2278 = vpack.c.b16 %v1686, %v1678
    %v2279 = vpack.c.b16 %v1687, %v1679
    %v2280 = vpack.c.b16 %v1688, %v1680
    %v2281 = vpack.c.b16 %v1689, %v1681
    %v2282 = vpack.c.b16 %v1690, %v1682
    %v2283 = vpack.c.b16 %v1691, %v1683
    %v2284 = vpack.c.b16 %v1700, %v1692
    %v2285 = vpack.c.b16 %v1701, %v1693
    %v2286 = vpack.c.b16 %v1702, %v1694
    %v2287 = vpack.c.b16 %v1703, %v1695
    %v2288 = vpack.c.b16 %v1704, %v1696
    %v2289 = vpack.c.b16 %v1705, %v1697
    %v2290 = vpack.c.b16 %v1706, %v1698
    %v2291 = vpack.c.b16 %v1707, %v1699
    %v2292 = vpack.c.b16 %v1716, %v1708
    %v2293 = vpack.c.b16 %v1717, %v1709
    %v2294 = vpack.c.b16 %v1718, %v1710
    %v2295 = vpack.c.b16 %v1719, %v1711
    %v2296 = vpack.c.b16 %v1720, %v1712
    %v2297 = vpack.c.b16 %v1721, %v1713
    %v2298 = vpack.c.b16 %v1722, %v1714
    %v2299 = vpack.c.b16 %v1723, %v1715
    %v2300 = vpack.c.b16 %v1732, %v1724
    %v2301 = vpack.c.b16 %v1733, %v1725
    %v2302 = vpack.c.b16 %v1734, %v1726
    %v2303 = vpack.c.b16 %v1735, %v1727
    %v2304 = vpack.c.b16 %v1736, %v1728
    %v2305 = vpack.c.b16 %v1737, %v1729
    %v2306 = vpack.c.b16 %v1738, %v1730
    %v2307 = vpack.c.b16 %v1739, %v1731
    %v2308 = vpack.c.b16 %v1748, %v1740
    %v2309 = vpack.c.b16 %v1749, %v1741
    %v2310 = vpack.c.b16 %v1750, %v1742
    %v2311 = vpack.c.b16 %v1751, %v1743
    %v2312 = vpack.c.b16 %v1752, %v1744
    %v2313 = vpack.c.b16 %v1753, %v1745
    %v2314 = vpack.c.b16 %v1754, %v1746
    %v2315 = vpack.c.b16 %v1755, %v1747
    %v2316 = vpack.c.b16 %v1764, %v1756
    %v2317 = vpack.c.b16 %v1765, %v1757
    %v2318 = vpack.c.b16 %v1766, %v1758
    %v2319 = vpack.c.b16 %v1767, %v1759
    %v2320 = vpack.c.b16 %v1768, %v1760
    %v2321 = vpack.c.b16 %v1769, %v1761
    %v2322 = vpack.c.b16 %v1770, %v1762
    %v2323 = vpack.c.b16 %v1771, %v1763
    %v2324 = vpack.c.b16 %v1780, %v1772
    %v2325 = vpack.c.b16 %v1781, %v1773
    %v2326 = vpack.c.b16 %v1782, %v1774
    %v2327 = vpack.c.b16 %v1783, %v1775
    %v2328 = vpack.c.b16 %v1784, %v1776
    %v2329 = vpack.c.b16 %v1785, %v1777
    %v2330 = vpack.c.b16 %v1786, %v1778
    %v2331 = vpack.c.b16 %v1787, %v1779
    %v2332 = vpack.c.b16 %v1796, %v1788
    %v2333 = vpack.c.b16 %v1797, %v1789
    %v2334 = vpack.c.b16 %v1798, %v1790
    %v2335 = vpack.c.b16 %v1799, %v1791
    %v2336 = vpack.c.b16 %v1800, %v1792
    %v2337 = vpack.c.b16 %v1801, %v1793
    %v2338 = vpack.c.b16 %v1802, %v1794
    %v2339 = vpack.c.b16 %v1803, %v1795
    %v2340 = vpack.c.b16 %v1812, %v1804
    %v2341 = vpack.c.b16 %v1813, %v1805
    %v2342 = vpack.c.b16 %v1814, %v1806
    %v2343 = vpack.c.b16 %v1815, %v1807
    %v2344 = vpack.c.b16 %v1816, %v1808
    %v2345 = vpack.c.b16 %v1817, %v1809
    %v2346 = vpack.c.b16 %v1818, %v1810
    %v2347 = vpack.c.b16 %v1819, %v1811
    %v2348 = vpack.c.b16 %v1828, %v1820
    %v2349 = vpack.c.b16 %v1829, %v1821
    %v2350 = vpack.c.b16 %v1830, %v1822
    %v2351 = vpack.c.b16 %v1831, %v1823
    %v2352 = vpack.c.b16 %v1832, %v1824
    %v2353 = vpack.c.b16 %v1833, %v1825
    %v2354 = vpack.c.b16 %v1834, %v1826
    %v2355 = vpack.c.b16 %v1835, %v1827
    %v2356 = vpack.c.b16 %v1844, %v1836
    %v2357 = vpack.c.b16 %v1845, %v1837
    %v2358 = vpack.c.b16 %v1846, %v1838
    %v2359 = vpack.c.b16 %v1847, %v1839
    %v2360 = vpack.c.b16 %v1848, %v1840
    %v2361 = vpack.c.b16 %v1849, %v1841
    %v2362 = vpack.c.b16 %v1850, %v1842
    %v2363 = vpack.c.b16 %v1851, %v1843
    %v2364 = vpack.c.b16 %v1860, %v1852
    %v2365 = vpack.c.b16 %v1861, %v1853
    %v2366 = vpack.c.b16 %v1862, %v1854
    %v2367 = vpack.c.b16 %v1863, %v1855
    %v2368 = vpack.c.b16 %v1864, %v1856
    %v2369 = vpack.c.b16 %v1865, %v1857
    %v2370 = vpack.c.b16 %v1866, %v1858
    %v2371 = vpack.c.b16 %v1867, %v1859
    %v2372 = vpack.c.b16 %v1876, %v1868
    %v2373 = vpack.c.b16 %v1877, %v1869
    %v2374 = vpack.c.b16 %v1878, %v1870
    %v2375 = vpack.c.b16 %v1879, %v1871
    %v2376 = vpack.c.b16 %v1880, %v1872
    %v2377 = vpack.c.b16 %v1881, %v1873
    %v2378 = vpack.c.b16 %v1882, %v1874
    %v2379 = vpack.c.b16 %v1883, %v1875
    %v2380 = vpack.c.b16 %v1892, %v1884
    %v2381 = vpack.c.b16 %v1893, %v1885
    %v2382 = vpack.c.b16 %v1894, %v1886
    %v2383 = vpack.c.b16 %v1895, %v1887
    %v2384 = vpack.c.b16 %v1896, %v1888
    %v2385 = vpack.c.b16 %v1897, %v1889
    %v2386 = vpack.c.b16 %v1898, %v1890
    %v2387 = vpack.c.b16 %v1899, %v1891
    %v2388 = vpack.c.b16 %v1908, %v1900
    %v2389 = vpack.c.b16 %v1909, %v1901
    %v2390 = vpack.c.b16 %v1910, %v1902
    %v2391 = vpack.c.b16 %v1911, %v1903
    %v2392 = vpack.c.b16 %v1912, %v1904
    %v2393 = vpack.c.b16 %v1913, %v1905
    %v2394 = vpack.c.b16 %v1914, %v1906
    %v2395 = vpack.c.b16 %v1915, %v1907
    %v2396 = vpack.c.b16 %v1924, %v1916
    %v2397 = vpack.c.b16 %v1925, %v1917
    %v2398 = vpack.c.b16 %v1926, %v1918
    %v2399 = vpack.c.b16 %v1927, %v1919
    %v2400 = vpack.c.b16 %v1928, %v1920
    %v2401 = vpack.c.b16 %v1929, %v1921
    %v2402 = vpack.c.b16 %v1930, %v1922
    %v2403 = vpack.c.b16 %v1931, %v1923
    %v2404 = vpack.c.b16 %v1940, %v1932
    %v2405 = vpack.c.b16 %v1941, %v1933
    %v2406 = vpack.c.b16 %v1942, %v1934
    %v2407 = vpack.c.b16 %v1943, %v1935
    %v2408 = vpack.c.b16 %v1944, %v1936
    %v2409 = vpack.c.b16 %v1945, %v1937
    %v2410 = vpack.c.b16 %v1946, %v1938
    %v2411 = vpack.c.b16 %v1947, %v1939
    %v2412 = vpack.c.b16 %v1956, %v1948
    %v2413 = vpack.c.b16 %v1957, %v1949
    %v2414 = vpack.c.b16 %v1958, %v1950
    %v2415 = vpack.c.b16 %v1959, %v1951
    %v2416 = vpack.c.b16 %v1960, %v1952
    %v2417 = vpack.c.b16 %v1961, %v1953
    %v2418 = vpack.c.b16 %v1962, %v1954
    %v2419 = vpack.c.b16 %v1963, %v1955
    %v2420 = vpack.c.b16 %v1972, %v1964
    %v2421 = vpack.c.b16 %v1973, %v1965
    %v2422 = vpack.c.b16 %v1974, %v1966
    %v2423 = vpack.c.b16 %v1975, %v1967
    %v2424 = vpack.c.b16 %v1976, %v1968
    %v2425 = vpack.c.b16 %v1977, %v1969
    %v2426 = vpack.c.b16 %v1978, %v1970
    %v2427 = vpack.c.b16 %v1979, %v1971
    %2876 = vmatprep.subr.bf16.mxu0 %v2037
    %2877 = vmatpush1.bf16.msra.mxu0 %v2036
    %2878 = vmatprep.subr.bf16.mxu0 %v2029
    %2879 = vmatpush1.bf16.msra.mxu0 %v2028
    %2880 = vmatprep.subr.bf16.mxu0 %v2021
    %2881 = vmatpush1.bf16.msra.mxu0 %v2020
    %2882 = vmatprep.subr.bf16.mxu0 %v2013
    %2883 = vmatpush1.bf16.msra.mxu0 %v2012
    %2884 = vmatprep.subr.bf16.mxu0 %v2005
    %2885 = vmatpush1.bf16.msra.mxu0 %v2004
    %2886 = vmatprep.subr.bf16.mxu0 %v1997
    %2887 = vmatpush1.bf16.msra.mxu0 %v1996
    %2888 = vmatprep.subr.bf16.mxu0 %v1989
    %2889 = vmatpush1.bf16.msra.mxu0 %v1988
    %2890 = vmatprep.subr.bf16.mxu0 %v1981
    %2891 = vmatpush1.bf16.msra.mxu0 %v1980
    %2892 = vmatprep.subr.bf16.mxu0 %v2101
    %2893 = vmatpush2.bf16.msra.mxu0 %v2100
    %2894 = vmatprep.subr.bf16.mxu0 %v2093
    %2895 = vmatpush2.bf16.msra.mxu0 %v2092
    %2896 = vmatprep.subr.bf16.mxu0 %v2085
    %2897 = vmatpush2.bf16.msra.mxu0 %v2084
    %2898 = vmatprep.subr.bf16.mxu0 %v2077
    %2899 = vmatpush2.bf16.msra.mxu0 %v2076
    %2900 = vmatprep.subr.bf16.mxu0 %v2069
    %2901 = vmatpush2.bf16.msra.mxu0 %v2068
    %2902 = vmatprep.subr.bf16.mxu0 %v2061
    %2903 = vmatpush2.bf16.msra.mxu0 %v2060
    %2904 = vmatprep.subr.bf16.mxu0 %v2053
    %2905 = vmatpush2.bf16.msra.mxu0 %v2052
    %2906 = vmatprep.subr.bf16.mxu0 %v2045
    %2907 = vmatpush2.bf16.msra.mxu0 %v2044
    %2908 = vmatprep.mubr.bf16.mxu0 %v623
    %2909 = vmatmul.mubr.bf16.gmra.mxu0 %v622
    %v2910 = vpop.f32.mrf.mxu0
    %v2911 = vadd.f32 %v574, %v2910
    %v2912 = vpop.f32.mrf.mxu0
    %v2913 = vadd.f32 %v578, %v2912
    %v2914 = vpop.f32.mrf.mxu0
    %v2915 = vpop.f32.mrf.mxu0
    %2916 = vdwg.mxu0
    %2917 = vmatprep.subr.bf16.mxu0 %v2165
    %2918 = vmatpush1.bf16.msra.mxu0 %v2164
    %2919 = vmatprep.subr.bf16.mxu0 %v2157
    %2920 = vmatpush1.bf16.msra.mxu0 %v2156
    %2921 = vmatprep.subr.bf16.mxu0 %v2149
    %2922 = vmatpush1.bf16.msra.mxu0 %v2148
    %2923 = vmatprep.subr.bf16.mxu0 %v2141
    %2924 = vmatpush1.bf16.msra.mxu0 %v2140
    %2925 = vmatprep.subr.bf16.mxu0 %v2133
    %2926 = vmatpush1.bf16.msra.mxu0 %v2132
    %2927 = vmatprep.subr.bf16.mxu0 %v2125
    %2928 = vmatpush1.bf16.msra.mxu0 %v2124
    %2929 = vmatprep.subr.bf16.mxu0 %v2117
    %2930 = vmatpush1.bf16.msra.mxu0 %v2116
    %2931 = vmatprep.subr.bf16.mxu0 %v2109
    %2932 = vmatpush1.bf16.msra.mxu0 %v2108
    %2933 = vmatprep.subr.bf16.mxu0 %v2229
    %2934 = vmatpush2.bf16.msra.mxu0 %v2228
    %2935 = vmatprep.subr.bf16.mxu0 %v2221
    %2936 = vmatpush2.bf16.msra.mxu0 %v2220
    %2937 = vmatprep.subr.bf16.mxu0 %v2213
    %2938 = vmatpush2.bf16.msra.mxu0 %v2212
    %2939 = vmatprep.subr.bf16.mxu0 %v2205
    %2940 = vmatpush2.bf16.msra.mxu0 %v2204
    %2941 = vmatprep.subr.bf16.mxu0 %v2197
    %2942 = vmatpush2.bf16.msra.mxu0 %v2196
    %2943 = vmatprep.subr.bf16.mxu0 %v2189
    %2944 = vmatpush2.bf16.msra.mxu0 %v2188
    %2945 = vmatprep.subr.bf16.mxu0 %v2181
    %2946 = vmatpush2.bf16.msra.mxu0 %v2180
    %2947 = vmatprep.subr.bf16.mxu0 %v2173
    %2948 = vmatpush2.bf16.msra.mxu0 %v2172
    %2949 = vmatprep.mubr.bf16.mxu0 %v625
    %2950 = vmatmul.mubr.bf16.gmra.mxu0 %v624
    %v2951 = vpop.f32.mrf.mxu0
    %v2952 = vadd.f32 %v2911, %v2951
    %v2953 = vpop.f32.mrf.mxu0
    %v2954 = vadd.f32 %v2913, %v2953
    %v2955 = vpop.f32.mrf.mxu0
    %v2956 = vpop.f32.mrf.mxu0
    %2957 = vdwg.mxu0
    %2958 = vmatprep.subr.bf16.mxu0 %v2293
    %2959 = vmatpush1.bf16.msra.mxu0 %v2292
    %2960 = vmatprep.subr.bf16.mxu0 %v2285
    %2961 = vmatpush1.bf16.msra.mxu0 %v2284
    %2962 = vmatprep.subr.bf16.mxu0 %v2277
    %2963 = vmatpush1.bf16.msra.mxu0 %v2276
    %2964 = vmatprep.subr.bf16.mxu0 %v2269
    %2965 = vmatpush1.bf16.msra.mxu0 %v2268
    %2966 = vmatprep.subr.bf16.mxu0 %v2261
    %2967 = vmatpush1.bf16.msra.mxu0 %v2260
    %2968 = vmatprep.subr.bf16.mxu0 %v2253
    %2969 = vmatpush1.bf16.msra.mxu0 %v2252
    %2970 = vmatprep.subr.bf16.mxu0 %v2245
    %2971 = vmatpush1.bf16.msra.mxu0 %v2244
    %2972 = vmatprep.subr.bf16.mxu0 %v2237
    %2973 = vmatpush1.bf16.msra.mxu0 %v2236
    %2974 = vmatprep.subr.bf16.mxu0 %v2357
    %2975 = vmatpush2.bf16.msra.mxu0 %v2356
    %2976 = vmatprep.subr.bf16.mxu0 %v2349
    %2977 = vmatpush2.bf16.msra.mxu0 %v2348
    %2978 = vmatprep.subr.bf16.mxu0 %v2341
    %2979 = vmatpush2.bf16.msra.mxu0 %v2340
    %2980 = vmatprep.subr.bf16.mxu0 %v2333
    %2981 = vmatpush2.bf16.msra.mxu0 %v2332
    %2982 = vmatprep.subr.bf16.mxu0 %v2325
    %2983 = vmatpush2.bf16.msra.mxu0 %v2324
    %2984 = vmatprep.subr.bf16.mxu0 %v2317
    %2985 = vmatpush2.bf16.msra.mxu0 %v2316
    %2986 = vmatprep.subr.bf16.mxu0 %v2309
    %2987 = vmatpush2.bf16.msra.mxu0 %v2308
    %2988 = vmatprep.subr.bf16.mxu0 %v2301
    %2989 = vmatpush2.bf16.msra.mxu0 %v2300
    %2990 = vmatprep.mubr.bf16.mxu0 %v627
    %2991 = vmatmul.mubr.bf16.gmra.mxu0 %v626
    %v2992 = vpop.f32.mrf.mxu0
    %v2993 = vadd.f32 %v2952, %v2992
    %v2994 = vpop.f32.mrf.mxu0
    %v2995 = vadd.f32 %v2954, %v2994
    %v2996 = vpop.f32.mrf.mxu0
    %v2997 = vpop.f32.mrf.mxu0
    %2998 = vdwg.mxu0
    %2999 = vmatprep.subr.bf16.mxu0 %v2421
    %3000 = vmatpush1.bf16.msra.mxu0 %v2420
    %3001 = vmatprep.subr.bf16.mxu0 %v2413
    %3002 = vmatpush1.bf16.msra.mxu0 %v2412
    %3003 = vmatprep.subr.bf16.mxu0 %v2405
    %3004 = vmatpush1.bf16.msra.mxu0 %v2404
    %3005 = vmatprep.subr.bf16.mxu0 %v2397
    %3006 = vmatpush1.bf16.msra.mxu0 %v2396
    %3007 = vmatprep.subr.bf16.mxu0 %v2389
    %3008 = vmatpush1.bf16.msra.mxu0 %v2388
    %3009 = vmatprep.subr.bf16.mxu0 %v2381
    %3010 = vmatpush1.bf16.msra.mxu0 %v2380
    %3011 = vmatprep.subr.bf16.mxu0 %v2373
    %3012 = vmatpush1.bf16.msra.mxu0 %v2372
    %3013 = vmatprep.subr.bf16.mxu0 %v2365
    %3014 = vmatpush1.bf16.msra.mxu0 %v2364
    %3015 = vmatprep.subr.bf16.mxu0 0
    %3016 = vmatpush2.bf16.msra.mxu0 0
    %3017 = vmatprep.subr.bf16.mxu0 0
    %3018 = vmatpush2.bf16.msra.mxu0 0
    %3019 = vmatprep.subr.bf16.mxu0 0
    %3020 = vmatpush2.bf16.msra.mxu0 0
    %3021 = vmatprep.subr.bf16.mxu0 0
    %3022 = vmatpush2.bf16.msra.mxu0 0
    %3023 = vmatprep.subr.bf16.mxu0 0
    %3024 = vmatpush2.bf16.msra.mxu0 0
    %3025 = vmatprep.subr.bf16.mxu0 0
    %3026 = vmatpush2.bf16.msra.mxu0 0
    %3027 = vmatprep.subr.bf16.mxu0 0
    %3028 = vmatpush2.bf16.msra.mxu0 0
    %3029 = vmatprep.subr.bf16.mxu0 0
    %3030 = vmatpush2.bf16.msra.mxu0 0
    %3031 = vmatprep.mubr.bf16.mxu0 0
    %3032 = vmatmul.mubr.bf16.gmra.mxu0 %v628
    %v3033 = vpop.f32.mrf.mxu0
    %v3034 = vadd.f32 %v2993, %v3033
    %v3035 = vpop.f32.mrf.mxu0
    %v3036 = vadd.f32 %v2995, %v3035
    %v3037 = vpop.f32.mrf.mxu0
    %v3038 = vpop.f32.mrf.mxu0
    %3039 = vdwg.mxu0
    %3040 = vmatprep.subr.bf16.mxu0 %v2039
    %3041 = vmatpush1.bf16.msra.mxu0 %v2038
    %3042 = vmatprep.subr.bf16.mxu0 %v2031
    %3043 = vmatpush1.bf16.msra.mxu0 %v2030
    %3044 = vmatprep.subr.bf16.mxu0 %v2023
    %3045 = vmatpush1.bf16.msra.mxu0 %v2022
    %3046 = vmatprep.subr.bf16.mxu0 %v2015
    %3047 = vmatpush1.bf16.msra.mxu0 %v2014
    %3048 = vmatprep.subr.bf16.mxu0 %v2007
    %3049 = vmatpush1.bf16.msra.mxu0 %v2006
    %3050 = vmatprep.subr.bf16.mxu0 %v1999
    %3051 = vmatpush1.bf16.msra.mxu0 %v1998
    %3052 = vmatprep.subr.bf16.mxu0 %v1991
    %3053 = vmatpush1.bf16.msra.mxu0 %v1990
    %3054 = vmatprep.subr.bf16.mxu0 %v1983
    %3055 = vmatpush1.bf16.msra.mxu0 %v1982
    %3056 = vmatprep.subr.bf16.mxu0 %v2103
    %3057 = vmatpush2.bf16.msra.mxu0 %v2102
    %3058 = vmatprep.subr.bf16.mxu0 %v2095
    %3059 = vmatpush2.bf16.msra.mxu0 %v2094
    %3060 = vmatprep.subr.bf16.mxu0 %v2087
    %3061 = vmatpush2.bf16.msra.mxu0 %v2086
    %3062 = vmatprep.subr.bf16.mxu0 %v2079
    %3063 = vmatpush2.bf16.msra.mxu0 %v2078
    %3064 = vmatprep.subr.bf16.mxu0 %v2071
    %3065 = vmatpush2.bf16.msra.mxu0 %v2070
    %3066 = vmatprep.subr.bf16.mxu0 %v2063
    %3067 = vmatpush2.bf16.msra.mxu0 %v2062
    %3068 = vmatprep.subr.bf16.mxu0 %v2055
    %3069 = vmatpush2.bf16.msra.mxu0 %v2054
    %3070 = vmatprep.subr.bf16.mxu0 %v2047
    %3071 = vmatpush2.bf16.msra.mxu0 %v2046
    %3072 = vmatprep.mubr.bf16.mxu0 %v623
    %3073 = vmatmul.mubr.bf16.gmra.mxu0 %v622
    %v3074 = vpop.f32.mrf.mxu0
    %v3075 = vadd.f32 %v582, %v3074
    %v3076 = vpop.f32.mrf.mxu0
    %v3077 = vadd.f32 %v586, %v3076
    %v3078 = vpop.f32.mrf.mxu0
    %v3079 = vpop.f32.mrf.mxu0
    %3080 = vdwg.mxu0
    %3081 = vmatprep.subr.bf16.mxu0 %v2167
    %3082 = vmatpush1.bf16.msra.mxu0 %v2166
    %3083 = vmatprep.subr.bf16.mxu0 %v2159
    %3084 = vmatpush1.bf16.msra.mxu0 %v2158
    %3085 = vmatprep.subr.bf16.mxu0 %v2151
    %3086 = vmatpush1.bf16.msra.mxu0 %v2150
    %3087 = vmatprep.subr.bf16.mxu0 %v2143
    %3088 = vmatpush1.bf16.msra.mxu0 %v2142
    %3089 = vmatprep.subr.bf16.mxu0 %v2135
    %3090 = vmatpush1.bf16.msra.mxu0 %v2134
    %3091 = vmatprep.subr.bf16.mxu0 %v2127
    %3092 = vmatpush1.bf16.msra.mxu0 %v2126
    %3093 = vmatprep.subr.bf16.mxu0 %v2119
    %3094 = vmatpush1.bf16.msra.mxu0 %v2118
    %3095 = vmatprep.subr.bf16.mxu0 %v2111
    %3096 = vmatpush1.bf16.msra.mxu0 %v2110
    %3097 = vmatprep.subr.bf16.mxu0 %v2231
    %3098 = vmatpush2.bf16.msra.mxu0 %v2230
    %3099 = vmatprep.subr.bf16.mxu0 %v2223
    %3100 = vmatpush2.bf16.msra.mxu0 %v2222
    %3101 = vmatprep.subr.bf16.mxu0 %v2215
    %3102 = vmatpush2.bf16.msra.mxu0 %v2214
    %3103 = vmatprep.subr.bf16.mxu0 %v2207
    %3104 = vmatpush2.bf16.msra.mxu0 %v2206
    %3105 = vmatprep.subr.bf16.mxu0 %v2199
    %3106 = vmatpush2.bf16.msra.mxu0 %v2198
    %3107 = vmatprep.subr.bf16.mxu0 %v2191
    %3108 = vmatpush2.bf16.msra.mxu0 %v2190
    %3109 = vmatprep.subr.bf16.mxu0 %v2183
    %3110 = vmatpush2.bf16.msra.mxu0 %v2182
    %3111 = vmatprep.subr.bf16.mxu0 %v2175
    %3112 = vmatpush2.bf16.msra.mxu0 %v2174
    %3113 = vmatprep.mubr.bf16.mxu0 %v625
    %3114 = vmatmul.mubr.bf16.gmra.mxu0 %v624
    %v3115 = vpop.f32.mrf.mxu0
    %v3116 = vadd.f32 %v3075, %v3115
    %v3117 = vpop.f32.mrf.mxu0
    %v3118 = vadd.f32 %v3077, %v3117
    %v3119 = vpop.f32.mrf.mxu0
    %v3120 = vpop.f32.mrf.mxu0
    %3121 = vdwg.mxu0
    %3122 = vmatprep.subr.bf16.mxu0 %v2295
    %3123 = vmatpush1.bf16.msra.mxu0 %v2294
    %3124 = vmatprep.subr.bf16.mxu0 %v2287
    %3125 = vmatpush1.bf16.msra.mxu0 %v2286
    %3126 = vmatprep.subr.bf16.mxu0 %v2279
    %3127 = vmatpush1.bf16.msra.mxu0 %v2278
    %3128 = vmatprep.subr.bf16.mxu0 %v2271
    %3129 = vmatpush1.bf16.msra.mxu0 %v2270
    %3130 = vmatprep.subr.bf16.mxu0 %v2263
    %3131 = vmatpush1.bf16.msra.mxu0 %v2262
    %3132 = vmatprep.subr.bf16.mxu0 %v2255
    %3133 = vmatpush1.bf16.msra.mxu0 %v2254
    %3134 = vmatprep.subr.bf16.mxu0 %v2247
    %3135 = vmatpush1.bf16.msra.mxu0 %v2246
    %3136 = vmatprep.subr.bf16.mxu0 %v2239
    %3137 = vmatpush1.bf16.msra.mxu0 %v2238
    %3138 = vmatprep.subr.bf16.mxu0 %v2359
    %3139 = vmatpush2.bf16.msra.mxu0 %v2358
    %3140 = vmatprep.subr.bf16.mxu0 %v2351
    %3141 = vmatpush2.bf16.msra.mxu0 %v2350
    %3142 = vmatprep.subr.bf16.mxu0 %v2343
    %3143 = vmatpush2.bf16.msra.mxu0 %v2342
    %3144 = vmatprep.subr.bf16.mxu0 %v2335
    %3145 = vmatpush2.bf16.msra.mxu0 %v2334
    %3146 = vmatprep.subr.bf16.mxu0 %v2327
    %3147 = vmatpush2.bf16.msra.mxu0 %v2326
    %3148 = vmatprep.subr.bf16.mxu0 %v2319
    %3149 = vmatpush2.bf16.msra.mxu0 %v2318
    %3150 = vmatprep.subr.bf16.mxu0 %v2311
    %3151 = vmatpush2.bf16.msra.mxu0 %v2310
    %3152 = vmatprep.subr.bf16.mxu0 %v2303
    %3153 = vmatpush2.bf16.msra.mxu0 %v2302
    %3154 = vmatprep.mubr.bf16.mxu0 %v627
    %3155 = vmatmul.mubr.bf16.gmra.mxu0 %v626
    %v3156 = vpop.f32.mrf.mxu0
    %v3157 = vadd.f32 %v3116, %v3156
    %v3158 = vpop.f32.mrf.mxu0
    %v3159 = vadd.f32 %v3118, %v3158
    %v3160 = vpop.f32.mrf.mxu0
    %v3161 = vpop.f32.mrf.mxu0
    %3162 = vdwg.mxu0
    %3163 = vmatprep.subr.bf16.mxu0 %v2423
    %3164 = vmatpush1.bf16.msra.mxu0 %v2422
    %3165 = vmatprep.subr.bf16.mxu0 %v2415
    %3166 = vmatpush1.bf16.msra.mxu0 %v2414
    %3167 = vmatprep.subr.bf16.mxu0 %v2407
    %3168 = vmatpush1.bf16.msra.mxu0 %v2406
    %3169 = vmatprep.subr.bf16.mxu0 %v2399
    %3170 = vmatpush1.bf16.msra.mxu0 %v2398
    %3171 = vmatprep.subr.bf16.mxu0 %v2391
    %3172 = vmatpush1.bf16.msra.mxu0 %v2390
    %3173 = vmatprep.subr.bf16.mxu0 %v2383
    %3174 = vmatpush1.bf16.msra.mxu0 %v2382
    %3175 = vmatprep.subr.bf16.mxu0 %v2375
    %3176 = vmatpush1.bf16.msra.mxu0 %v2374
    %3177 = vmatprep.subr.bf16.mxu0 %v2367
    %3178 = vmatpush1.bf16.msra.mxu0 %v2366
    %3179 = vmatprep.subr.bf16.mxu0 0
    %3180 = vmatpush2.bf16.msra.mxu0 0
    %3181 = vmatprep.subr.bf16.mxu0 0
    %3182 = vmatpush2.bf16.msra.mxu0 0
    %3183 = vmatprep.subr.bf16.mxu0 0
    %3184 = vmatpush2.bf16.msra.mxu0 0
    %3185 = vmatprep.subr.bf16.mxu0 0
    %3186 = vmatpush2.bf16.msra.mxu0 0
    %3187 = vmatprep.subr.bf16.mxu0 0
    %3188 = vmatpush2.bf16.msra.mxu0 0
    %3189 = vmatprep.subr.bf16.mxu0 0
    %3190 = vmatpush2.bf16.msra.mxu0 0
    %3191 = vmatprep.subr.bf16.mxu0 0
    %3192 = vmatpush2.bf16.msra.mxu0 0
    %3193 = vmatprep.subr.bf16.mxu0 0
    %3194 = vmatpush2.bf16.msra.mxu0 0
    %3195 = vmatprep.mubr.bf16.mxu0 0
    %3196 = vmatmul.mubr.bf16.gmra.mxu0 %v628
    %v3197 = vpop.f32.mrf.mxu0
    %v3198 = vadd.f32 %v3157, %v3197
    %v3199 = vpop.f32.mrf.mxu0
    %v3200 = vadd.f32 %v3159, %v3199
    %v3201 = vpop.f32.mrf.mxu0
    %v3202 = vpop.f32.mrf.mxu0
    %3203 = vdwg.mxu0
    %3204 = vmatprep.subr.bf16.mxu0 %v2041
    %3205 = vmatpush1.bf16.msra.mxu0 %v2040
    %3206 = vmatprep.subr.bf16.mxu0 %v2033
    %3207 = vmatpush1.bf16.msra.mxu0 %v2032
    %3208 = vmatprep.subr.bf16.mxu0 %v2025
    %3209 = vmatpush1.bf16.msra.mxu0 %v2024
    %3210 = vmatprep.subr.bf16.mxu0 %v2017
    %3211 = vmatpush1.bf16.msra.mxu0 %v2016
    %3212 = vmatprep.subr.bf16.mxu0 %v2009
    %3213 = vmatpush1.bf16.msra.mxu0 %v2008
    %3214 = vmatprep.subr.bf16.mxu0 %v2001
    %3215 = vmatpush1.bf16.msra.mxu0 %v2000
    %3216 = vmatprep.subr.bf16.mxu0 %v1993
    %3217 = vmatpush1.bf16.msra.mxu0 %v1992
    %3218 = vmatprep.subr.bf16.mxu0 %v1985
    %3219 = vmatpush1.bf16.msra.mxu0 %v1984
    %3220 = vmatprep.subr.bf16.mxu0 %v2105
    %3221 = vmatpush2.bf16.msra.mxu0 %v2104
    %3222 = vmatprep.subr.bf16.mxu0 %v2097
    %3223 = vmatpush2.bf16.msra.mxu0 %v2096
    %3224 = vmatprep.subr.bf16.mxu0 %v2089
    %3225 = vmatpush2.bf16.msra.mxu0 %v2088
    %3226 = vmatprep.subr.bf16.mxu0 %v2081
    %3227 = vmatpush2.bf16.msra.mxu0 %v2080
    %3228 = vmatprep.subr.bf16.mxu0 %v2073
    %3229 = vmatpush2.bf16.msra.mxu0 %v2072
    %3230 = vmatprep.subr.bf16.mxu0 %v2065
    %3231 = vmatpush2.bf16.msra.mxu0 %v2064
    %3232 = vmatprep.subr.bf16.mxu0 %v2057
    %3233 = vmatpush2.bf16.msra.mxu0 %v2056
    %3234 = vmatprep.subr.bf16.mxu0 %v2049
    %3235 = vmatpush2.bf16.msra.mxu0 %v2048
    %3236 = vmatprep.mubr.bf16.mxu0 %v623
    %3237 = vmatmul.mubr.bf16.gmra.mxu0 %v622
    %v3238 = vpop.f32.mrf.mxu0
    %v3239 = vadd.f32 %v590, %v3238
    %v3240 = vpop.f32.mrf.mxu0
    %v3241 = vadd.f32 %v594, %v3240
    %v3242 = vpop.f32.mrf.mxu0
    %v3243 = vpop.f32.mrf.mxu0
    %3244 = vdwg.mxu0
    %3245 = vmatprep.subr.bf16.mxu0 %v2169
    %3246 = vmatpush1.bf16.msra.mxu0 %v2168
    %3247 = vmatprep.subr.bf16.mxu0 %v2161
    %3248 = vmatpush1.bf16.msra.mxu0 %v2160
    %3249 = vmatprep.subr.bf16.mxu0 %v2153
    %3250 = vmatpush1.bf16.msra.mxu0 %v2152
    %3251 = vmatprep.subr.bf16.mxu0 %v2145
    %3252 = vmatpush1.bf16.msra.mxu0 %v2144
    %3253 = vmatprep.subr.bf16.mxu0 %v2137
    %3254 = vmatpush1.bf16.msra.mxu0 %v2136
    %3255 = vmatprep.subr.bf16.mxu0 %v2129
    %3256 = vmatpush1.bf16.msra.mxu0 %v2128
    %3257 = vmatprep.subr.bf16.mxu0 %v2121
    %3258 = vmatpush1.bf16.msra.mxu0 %v2120
    %3259 = vmatprep.subr.bf16.mxu0 %v2113
    %3260 = vmatpush1.bf16.msra.mxu0 %v2112
    %3261 = vmatprep.subr.bf16.mxu0 %v2233
    %3262 = vmatpush2.bf16.msra.mxu0 %v2232
    %3263 = vmatprep.subr.bf16.mxu0 %v2225
    %3264 = vmatpush2.bf16.msra.mxu0 %v2224
    %3265 = vmatprep.subr.bf16.mxu0 %v2217
    %3266 = vmatpush2.bf16.msra.mxu0 %v2216
    %3267 = vmatprep.subr.bf16.mxu0 %v2209
    %3268 = vmatpush2.bf16.msra.mxu0 %v2208
    %3269 = vmatprep.subr.bf16.mxu0 %v2201
    %3270 = vmatpush2.bf16.msra.mxu0 %v2200
    %3271 = vmatprep.subr.bf16.mxu0 %v2193
    %3272 = vmatpush2.bf16.msra.mxu0 %v2192
    %3273 = vmatprep.subr.bf16.mxu0 %v2185
    %3274 = vmatpush2.bf16.msra.mxu0 %v2184
    %3275 = vmatprep.subr.bf16.mxu0 %v2177
    %3276 = vmatpush2.bf16.msra.mxu0 %v2176
    %3277 = vmatprep.mubr.bf16.mxu0 %v625
    %3278 = vmatmul.mubr.bf16.gmra.mxu0 %v624
    %v3279 = vpop.f32.mrf.mxu0
    %v3280 = vadd.f32 %v3239, %v3279
    %v3281 = vpop.f32.mrf.mxu0
    %v3282 = vadd.f32 %v3241, %v3281
    %v3283 = vpop.f32.mrf.mxu0
    %v3284 = vpop.f32.mrf.mxu0
    %3285 = vdwg.mxu0
    %3286 = vmatprep.subr.bf16.mxu0 %v2297
    %3287 = vmatpush1.bf16.msra.mxu0 %v2296
    %3288 = vmatprep.subr.bf16.mxu0 %v2289
    %3289 = vmatpush1.bf16.msra.mxu0 %v2288
    %3290 = vmatprep.subr.bf16.mxu0 %v2281
    %3291 = vmatpush1.bf16.msra.mxu0 %v2280
    %3292 = vmatprep.subr.bf16.mxu0 %v2273
    %3293 = vmatpush1.bf16.msra.mxu0 %v2272
    %3294 = vmatprep.subr.bf16.mxu0 %v2265
    %3295 = vmatpush1.bf16.msra.mxu0 %v2264
    %3296 = vmatprep.subr.bf16.mxu0 %v2257
    %3297 = vmatpush1.bf16.msra.mxu0 %v2256
    %3298 = vmatprep.subr.bf16.mxu0 %v2249
    %3299 = vmatpush1.bf16.msra.mxu0 %v2248
    %3300 = vmatprep.subr.bf16.mxu0 %v2241
    %3301 = vmatpush1.bf16.msra.mxu0 %v2240
    %3302 = vmatprep.subr.bf16.mxu0 %v2361
    %3303 = vmatpush2.bf16.msra.mxu0 %v2360
    %3304 = vmatprep.subr.bf16.mxu0 %v2353
    %3305 = vmatpush2.bf16.msra.mxu0 %v2352
    %3306 = vmatprep.subr.bf16.mxu0 %v2345
    %3307 = vmatpush2.bf16.msra.mxu0 %v2344
    %3308 = vmatprep.subr.bf16.mxu0 %v2337
    %3309 = vmatpush2.bf16.msra.mxu0 %v2336
    %3310 = vmatprep.subr.bf16.mxu0 %v2329
    %3311 = vmatpush2.bf16.msra.mxu0 %v2328
    %3312 = vmatprep.subr.bf16.mxu0 %v2321
    %3313 = vmatpush2.bf16.msra.mxu0 %v2320
    %3314 = vmatprep.subr.bf16.mxu0 %v2313
    %3315 = vmatpush2.bf16.msra.mxu0 %v2312
    %3316 = vmatprep.subr.bf16.mxu0 %v2305
    %3317 = vmatpush2.bf16.msra.mxu0 %v2304
    %3318 = vmatprep.mubr.bf16.mxu0 %v627
    %3319 = vmatmul.mubr.bf16.gmra.mxu0 %v626
    %v3320 = vpop.f32.mrf.mxu0
    %v3321 = vadd.f32 %v3280, %v3320
    %v3322 = vpop.f32.mrf.mxu0
    %v3323 = vadd.f32 %v3282, %v3322
    %v3324 = vpop.f32.mrf.mxu0
    %v3325 = vpop.f32.mrf.mxu0
    %3326 = vdwg.mxu0
    %3327 = vmatprep.subr.bf16.mxu0 %v2425
    %3328 = vmatpush1.bf16.msra.mxu0 %v2424
    %3329 = vmatprep.subr.bf16.mxu0 %v2417
    %3330 = vmatpush1.bf16.msra.mxu0 %v2416
    %3331 = vmatprep.subr.bf16.mxu0 %v2409
    %3332 = vmatpush1.bf16.msra.mxu0 %v2408
    %3333 = vmatprep.subr.bf16.mxu0 %v2401
    %3334 = vmatpush1.bf16.msra.mxu0 %v2400
    %3335 = vmatprep.subr.bf16.mxu0 %v2393
    %3336 = vmatpush1.bf16.msra.mxu0 %v2392
    %3337 = vmatprep.subr.bf16.mxu0 %v2385
    %3338 = vmatpush1.bf16.msra.mxu0 %v2384
    %3339 = vmatprep.subr.bf16.mxu0 %v2377
    %3340 = vmatpush1.bf16.msra.mxu0 %v2376
    %3341 = vmatprep.subr.bf16.mxu0 %v2369
    %3342 = vmatpush1.bf16.msra.mxu0 %v2368
    %3343 = vmatprep.subr.bf16.mxu0 0
    %3344 = vmatpush2.bf16.msra.mxu0 0
    %3345 = vmatprep.subr.bf16.mxu0 0
    %3346 = vmatpush2.bf16.msra.mxu0 0
    %3347 = vmatprep.subr.bf16.mxu0 0
    %3348 = vmatpush2.bf16.msra.mxu0 0
    %3349 = vmatprep.subr.bf16.mxu0 0
    %3350 = vmatpush2.bf16.msra.mxu0 0
    %3351 = vmatprep.subr.bf16.mxu0 0
    %3352 = vmatpush2.bf16.msra.mxu0 0
    %3353 = vmatprep.subr.bf16.mxu0 0
    %3354 = vmatpush2.bf16.msra.mxu0 0
    %3355 = vmatprep.subr.bf16.mxu0 0
    %3356 = vmatpush2.bf16.msra.mxu0 0
    %3357 = vmatprep.subr.bf16.mxu0 0
    %3358 = vmatpush2.bf16.msra.mxu0 0
    %3359 = vmatprep.mubr.bf16.mxu0 0
    %3360 = vmatmul.mubr.bf16.gmra.mxu0 %v628
    %v3361 = vpop.f32.mrf.mxu0
    %v3362 = vadd.f32 %v3321, %v3361
    %v3363 = vpop.f32.mrf.mxu0
    %v3364 = vadd.f32 %v3323, %v3363
    %v3365 = vpop.f32.mrf.mxu0
    %v3366 = vpop.f32.mrf.mxu0
    %3367 = vdwg.mxu0
    %3368 = vmatprep.subr.bf16.mxu0 %v2043
    %3369 = vmatpush1.bf16.msra.mxu0 %v2042
    %3370 = vmatprep.subr.bf16.mxu0 %v2035
    %3371 = vmatpush1.bf16.msra.mxu0 %v2034
    %3372 = vmatprep.subr.bf16.mxu0 %v2027
    %3373 = vmatpush1.bf16.msra.mxu0 %v2026
    %3374 = vmatprep.subr.bf16.mxu0 %v2019
    %3375 = vmatpush1.bf16.msra.mxu0 %v2018
    %3376 = vmatprep.subr.bf16.mxu0 %v2011
    %3377 = vmatpush1.bf16.msra.mxu0 %v2010
    %3378 = vmatprep.subr.bf16.mxu0 %v2003
    %3379 = vmatpush1.bf16.msra.mxu0 %v2002
    %3380 = vmatprep.subr.bf16.mxu0 %v1995
    %3381 = vmatpush1.bf16.msra.mxu0 %v1994
    %3382 = vmatprep.subr.bf16.mxu0 %v1987
    %3383 = vmatpush1.bf16.msra.mxu0 %v1986
    %3384 = vmatprep.subr.bf16.mxu0 %v2107
    %3385 = vmatpush2.bf16.msra.mxu0 %v2106
    %3386 = vmatprep.subr.bf16.mxu0 %v2099
    %3387 = vmatpush2.bf16.msra.mxu0 %v2098
    %3388 = vmatprep.subr.bf16.mxu0 %v2091
    %3389 = vmatpush2.bf16.msra.mxu0 %v2090
    %3390 = vmatprep.subr.bf16.mxu0 %v2083
    %3391 = vmatpush2.bf16.msra.mxu0 %v2082
    %3392 = vmatprep.subr.bf16.mxu0 %v2075
    %3393 = vmatpush2.bf16.msra.mxu0 %v2074
    %3394 = vmatprep.subr.bf16.mxu0 %v2067
    %3395 = vmatpush2.bf16.msra.mxu0 %v2066
    %3396 = vmatprep.subr.bf16.mxu0 %v2059
    %3397 = vmatpush2.bf16.msra.mxu0 %v2058
    %3398 = vmatprep.subr.bf16.mxu0 %v2051
    %3399 = vmatpush2.bf16.msra.mxu0 %v2050
    %3400 = vmatprep.mubr.bf16.mxu0 %v623
    %3401 = vmatmul.mubr.bf16.gmra.mxu0 %v622
    %v3402 = vpop.f32.mrf.mxu0
    %v3403 = vadd.f32 %v598, %v3402
    %v3404 = vpop.f32.mrf.mxu0
    %v3405 = vadd.f32 %v602, %v3404
    %v3406 = vpop.f32.mrf.mxu0
    %v3407 = vpop.f32.mrf.mxu0
    %3408 = vdwg.mxu0
    %3409 = vmatprep.subr.bf16.mxu0 %v2171
    %3410 = vmatpush1.bf16.msra.mxu0 %v2170
    %3411 = vmatprep.subr.bf16.mxu0 %v2163
    %3412 = vmatpush1.bf16.msra.mxu0 %v2162
    %3413 = vmatprep.subr.bf16.mxu0 %v2155
    %3414 = vmatpush1.bf16.msra.mxu0 %v2154
    %3415 = vmatprep.subr.bf16.mxu0 %v2147
    %3416 = vmatpush1.bf16.msra.mxu0 %v2146
    %3417 = vmatprep.subr.bf16.mxu0 %v2139
    %3418 = vmatpush1.bf16.msra.mxu0 %v2138
    %3419 = vmatprep.subr.bf16.mxu0 %v2131
    %3420 = vmatpush1.bf16.msra.mxu0 %v2130
    %3421 = vmatprep.subr.bf16.mxu0 %v2123
    %3422 = vmatpush1.bf16.msra.mxu0 %v2122
    %3423 = vmatprep.subr.bf16.mxu0 %v2115
    %3424 = vmatpush1.bf16.msra.mxu0 %v2114
    %3425 = vmatprep.subr.bf16.mxu0 %v2235
    %3426 = vmatpush2.bf16.msra.mxu0 %v2234
    %3427 = vmatprep.subr.bf16.mxu0 %v2227
    %3428 = vmatpush2.bf16.msra.mxu0 %v2226
    %3429 = vmatprep.subr.bf16.mxu0 %v2219
    %3430 = vmatpush2.bf16.msra.mxu0 %v2218
    %3431 = vmatprep.subr.bf16.mxu0 %v2211
    %3432 = vmatpush2.bf16.msra.mxu0 %v2210
    %3433 = vmatprep.subr.bf16.mxu0 %v2203
    %3434 = vmatpush2.bf16.msra.mxu0 %v2202
    %3435 = vmatprep.subr.bf16.mxu0 %v2195
    %3436 = vmatpush2.bf16.msra.mxu0 %v2194
    %3437 = vmatprep.subr.bf16.mxu0 %v2187
    %3438 = vmatpush2.bf16.msra.mxu0 %v2186
    %3439 = vmatprep.subr.bf16.mxu0 %v2179
    %3440 = vmatpush2.bf16.msra.mxu0 %v2178
    %3441 = vmatprep.mubr.bf16.mxu0 %v625
    %3442 = vmatmul.mubr.bf16.gmra.mxu0 %v624
    %v3443 = vpop.f32.mrf.mxu0
    %v3444 = vadd.f32 %v3403, %v3443
    %v3445 = vpop.f32.mrf.mxu0
    %v3446 = vadd.f32 %v3405, %v3445
    %v3447 = vpop.f32.mrf.mxu0
    %v3448 = vpop.f32.mrf.mxu0
    %3449 = vdwg.mxu0
    %3450 = vmatprep.subr.bf16.mxu0 %v2299
    %3451 = vmatpush1.bf16.msra.mxu0 %v2298
    %3452 = vmatprep.subr.bf16.mxu0 %v2291
    %3453 = vmatpush1.bf16.msra.mxu0 %v2290
    %3454 = vmatprep.subr.bf16.mxu0 %v2283
    %3455 = vmatpush1.bf16.msra.mxu0 %v2282
    %3456 = vmatprep.subr.bf16.mxu0 %v2275
    %3457 = vmatpush1.bf16.msra.mxu0 %v2274
    %3458 = vmatprep.subr.bf16.mxu0 %v2267
    %3459 = vmatpush1.bf16.msra.mxu0 %v2266
    %3460 = vmatprep.subr.bf16.mxu0 %v2259
    %3461 = vmatpush1.bf16.msra.mxu0 %v2258
    %3462 = vmatprep.subr.bf16.mxu0 %v2251
    %3463 = vmatpush1.bf16.msra.mxu0 %v2250
    %3464 = vmatprep.subr.bf16.mxu0 %v2243
    %3465 = vmatpush1.bf16.msra.mxu0 %v2242
    %3466 = vmatprep.subr.bf16.mxu0 %v2363
    %3467 = vmatpush2.bf16.msra.mxu0 %v2362
    %3468 = vmatprep.subr.bf16.mxu0 %v2355
    %3469 = vmatpush2.bf16.msra.mxu0 %v2354
    %3470 = vmatprep.subr.bf16.mxu0 %v2347
    %3471 = vmatpush2.bf16.msra.mxu0 %v2346
    %3472 = vmatprep.subr.bf16.mxu0 %v2339
    %3473 = vmatpush2.bf16.msra.mxu0 %v2338
    %3474 = vmatprep.subr.bf16.mxu0 %v2331
    %3475 = vmatpush2.bf16.msra.mxu0 %v2330
    %3476 = vmatprep.subr.bf16.mxu0 %v2323
    %3477 = vmatpush2.bf16.msra.mxu0 %v2322
    %3478 = vmatprep.subr.bf16.mxu0 %v2315
    %3479 = vmatpush2.bf16.msra.mxu0 %v2314
    %3480 = vmatprep.subr.bf16.mxu0 %v2307
    %3481 = vmatpush2.bf16.msra.mxu0 %v2306
    %3482 = vmatprep.mubr.bf16.mxu0 %v627
    %3483 = vmatmul.mubr.bf16.gmra.mxu0 %v626
    %v3484 = vpop.f32.mrf.mxu0
    %v3485 = vadd.f32 %v3444, %v3484
    %v3486 = vpop.f32.mrf.mxu0
    %v3487 = vadd.f32 %v3446, %v3486
    %v3488 = vpop.f32.mrf.mxu0
    %v3489 = vpop.f32.mrf.mxu0
    %3490 = vdwg.mxu0
    %3491 = vmatprep.subr.bf16.mxu0 %v2427
    %3492 = vmatpush1.bf16.msra.mxu0 %v2426
    %3493 = vmatprep.subr.bf16.mxu0 %v2419
    %3494 = vmatpush1.bf16.msra.mxu0 %v2418
    %3495 = vmatprep.subr.bf16.mxu0 %v2411
    %3496 = vmatpush1.bf16.msra.mxu0 %v2410
    %3497 = vmatprep.subr.bf16.mxu0 %v2403
    %3498 = vmatpush1.bf16.msra.mxu0 %v2402
    %3499 = vmatprep.subr.bf16.mxu0 %v2395
    %3500 = vmatpush1.bf16.msra.mxu0 %v2394
    %3501 = vmatprep.subr.bf16.mxu0 %v2387
    %3502 = vmatpush1.bf16.msra.mxu0 %v2386
    %3503 = vmatprep.subr.bf16.mxu0 %v2379
    %3504 = vmatpush1.bf16.msra.mxu0 %v2378
    %3505 = vmatprep.subr.bf16.mxu0 %v2371
    %3506 = vmatpush1.bf16.msra.mxu0 %v2370
    %3507 = vmatprep.subr.bf16.mxu0 0
    %3508 = vmatpush2.bf16.msra.mxu0 0
    %3509 = vmatprep.subr.bf16.mxu0 0
    %3510 = vmatpush2.bf16.msra.mxu0 0
    %3511 = vmatprep.subr.bf16.mxu0 0
    %3512 = vmatpush2.bf16.msra.mxu0 0
    %3513 = vmatprep.subr.bf16.mxu0 0
    %3514 = vmatpush2.bf16.msra.mxu0 0
    %3515 = vmatprep.subr.bf16.mxu0 0
    %3516 = vmatpush2.bf16.msra.mxu0 0
    %3517 = vmatprep.subr.bf16.mxu0 0
    %3518 = vmatpush2.bf16.msra.mxu0 0
    %3519 = vmatprep.subr.bf16.mxu0 0
    %3520 = vmatpush2.bf16.msra.mxu0 0
    %3521 = vmatprep.subr.bf16.mxu0 0
    %3522 = vmatpush2.bf16.msra.mxu0 0
    %3523 = vmatprep.mubr.bf16.mxu0 0
    %3524 = vmatmul.mubr.bf16.gmra.mxu0 %v628
    %v3525 = vpop.f32.mrf.mxu0
    %v3526 = vadd.f32 %v3485, %v3525
    %v3527 = vpop.f32.mrf.mxu0
    %v3528 = vadd.f32 %v3487, %v3527
    %v3529 = vpop.f32.mrf.mxu0
    %v3530 = vpop.f32.mrf.mxu0
    %3531 = vdwg.mxu0
    %v3532 = vmul.f32 %v3034, 0.2
    %v3533 = vmul.f32 %v3036, 0.2
    %v3534 = vmul.f32 %v3198, 0.2
    %v3535 = vmul.f32 %v3200, 0.2
    %v3536 = vmul.f32 %v3362, 0.2
    %v3537 = vmul.f32 %v3364, 0.2
    %v3538 = vmul.f32 %v3526, 0.2
    %v3539 = vmul.f32 %v3528, 0.2
    %v3540 = vmax.f32 %v3034, %v3532
    %v3541 = vmax.f32 %v3036, %v3533
    %v3542 = vmax.f32 %v3198, %v3534
    %v3543 = vmax.f32 %v3200, %v3535
    %v3544 = vmax.f32 %v3362, %v3536
    %v3545 = vmax.f32 %v3364, %v3537
    %v3546 = vmax.f32 %v3526, %v3538
    %v3547 = vmax.f32 %v3528, %v3539
    %v3548 = vpack.c.bf16 %v3540, %v3540
    %v3549 = vpack.c.bf16 %v3541, %v3541
    %v3550 = vpack.c.bf16 %v3542, %v3542
    %v3551 = vpack.c.bf16 %v3543, %v3543
    %v3552 = vpack.c.bf16 %v3544, %v3544
    %v3553 = vpack.c.bf16 %v3545, %v3545
    %v3554 = vpack.c.bf16 %v3546, %v3546
    %v3555 = vpack.c.bf16 %v3547, %v3547
    %v3556 = vld [vmem:[#allocation6] sm:$0xff]
    %v3557 = vld [vmem:[#allocation6 + $0x8] sm:$0xff]
    %v3558 = vld [vmem:[#allocation6 + $0x10] sm:$0xff]
    %v3559 = vld [vmem:[#allocation6 + $0x18] sm:$0xff]
    %v3560 = vld [vmem:[#allocation6 + $0x20] sm:$0xff]
    %v3561 = vld [vmem:[#allocation6 + $0x28] sm:$0xff]
    %v3562 = vld [vmem:[#allocation6 + $0x30] sm:$0xff]
    %v3563 = vld [vmem:[#allocation6 + $0x38] sm:$0xff]
    %v3564 = vld [vmem:[#allocation6 + $0x40] sm:$0xff]
    %v3565 = vld [vmem:[#allocation6 + $0x48] sm:$0xff]
    %v3566 = vld [vmem:[#allocation6 + $0x50] sm:$0xff]
    %v3567 = vld [vmem:[#allocation6 + $0x58] sm:$0xff]
    %v3568 = vld [vmem:[#allocation6 + $0x60] sm:$0xff]
    %v3569 = vld [vmem:[#allocation6 + $0x68] sm:$0xff]
    %v3570 = vld [vmem:[#allocation6 + $0x70] sm:$0xff]
    %v3571 = vld [vmem:[#allocation6 + $0x78] sm:$0xff]
    %v3572 = vld [vmem:[#allocation6 + $0x80] sm:$0xff]
    %v3573 = vld [vmem:[#allocation6 + $0x88] sm:$0xff]
    %v3574 = vld [vmem:[#allocation6 + $0x90] sm:$0xff]
    %v3575 = vld [vmem:[#allocation6 + $0x98] sm:$0xff]
    %v3576 = vld [vmem:[#allocation6 + $0xa0] sm:$0xff]
    %v3577 = vld [vmem:[#allocation6 + $0xa8] sm:$0xff]
    %v3578 = vld [vmem:[#allocation6 + $0xb0] sm:$0xff]
    %v3579 = vld [vmem:[#allocation6 + $0xb8] sm:$0xff]
    %v3580 = vld [vmem:[#allocation6 + $0xc0] sm:$0xff]
    %v3581 = vld [vmem:[#allocation6 + $0xc8] sm:$0xff]
    %v3582 = vld [vmem:[#allocation6 + $0xd0] sm:$0xff]
    %v3583 = vld [vmem:[#allocation6 + $0xd8] sm:$0xff]
    %v3584 = vld [vmem:[#allocation6 + $0xe0] sm:$0xff]
    %v3585 = vld [vmem:[#allocation6 + $0xe8] sm:$0xff]
    %v3586 = vld [vmem:[#allocation6 + $0xf0] sm:$0xff]
    %v3587 = vld [vmem:[#allocation6 + $0xf8] sm:$0xff]
    %v3588 = vld [vmem:[#allocation6 + $0x100] sm:$0xff]
    %v3589 = vld [vmem:[#allocation6 + $0x108] sm:$0xff]
    %v3590 = vld [vmem:[#allocation6 + $0x110] sm:$0xff]
    %v3591 = vld [vmem:[#allocation6 + $0x118] sm:$0xff]
    %v3592 = vld [vmem:[#allocation6 + $0x120] sm:$0xff]
    %v3593 = vld [vmem:[#allocation6 + $0x128] sm:$0xff]
    %v3594 = vld [vmem:[#allocation6 + $0x130] sm:$0xff]
    %v3595 = vld [vmem:[#allocation6 + $0x138] sm:$0xff]
    %v3596 = vld [vmem:[#allocation6 + $0x140] sm:$0xff]
    %v3597 = vld [vmem:[#allocation6 + $0x148] sm:$0xff]
    %v3598 = vld [vmem:[#allocation6 + $0x150] sm:$0xff]
    %v3599 = vld [vmem:[#allocation6 + $0x158] sm:$0xff]
    %v3600 = vld [vmem:[#allocation6 + $0x160] sm:$0xff]
    %v3601 = vld [vmem:[#allocation6 + $0x168] sm:$0xff]
    %v3602 = vld [vmem:[#allocation6 + $0x170] sm:$0xff]
    %v3603 = vld [vmem:[#allocation6 + $0x178] sm:$0xff]
    %v3604 = vld [vmem:[#allocation6 + $0x180] sm:$0xff]
    %v3605 = vld [vmem:[#allocation6 + $0x188] sm:$0xff]
    %v3606 = vld [vmem:[#allocation6 + $0x190] sm:$0xff]
    %v3607 = vld [vmem:[#allocation6 + $0x198] sm:$0xff]
    %v3608 = vld [vmem:[#allocation6 + $0x1a0] sm:$0xff]
    %v3609 = vld [vmem:[#allocation6 + $0x1a8] sm:$0xff]
    %v3610 = vld [vmem:[#allocation6 + $0x1b0] sm:$0xff]
    %v3611 = vld [vmem:[#allocation6 + $0x1b8] sm:$0xff]
    %v3612 = vld [vmem:[#allocation6 + $0x1c0] sm:$0xff]
    %v3613 = vld [vmem:[#allocation6 + $0x1c8] sm:$0xff]
    %v3614 = vld [vmem:[#allocation6 + $0x1d0] sm:$0xff]
    %v3615 = vld [vmem:[#allocation6 + $0x1d8] sm:$0xff]
    %v3616 = vld [vmem:[#allocation6 + $0x1e0] sm:$0xff]
    %v3617 = vld [vmem:[#allocation6 + $0x1e8] sm:$0xff]
    %v3618 = vld [vmem:[#allocation6 + $0x1f0] sm:$0xff]
    %v3619 = vld [vmem:[#allocation6 + $0x1f8] sm:$0xff]
    %v3620 = vld [vmem:[#allocation6 + $0x200] sm:$0xff]
    %v3621 = vld [vmem:[#allocation6 + $0x208] sm:$0xff]
    %v3622 = vld [vmem:[#allocation6 + $0x210] sm:$0xff]
    %v3623 = vld [vmem:[#allocation6 + $0x218] sm:$0xff]
    %v3624 = vld [vmem:[#allocation6 + $0x220] sm:$0xff]
    %v3625 = vld [vmem:[#allocation6 + $0x228] sm:$0xff]
    %v3626 = vld [vmem:[#allocation6 + $0x230] sm:$0xff]
    %v3627 = vld [vmem:[#allocation6 + $0x238] sm:$0xff]
    %v3628 = vld [vmem:[#allocation6 + $0x240] sm:$0xff]
    %v3629 = vld [vmem:[#allocation6 + $0x248] sm:$0xff]
    %v3630 = vld [vmem:[#allocation6 + $0x250] sm:$0xff]
    %v3631 = vld [vmem:[#allocation6 + $0x258] sm:$0xff]
    %v3632 = vld [vmem:[#allocation6 + $0x260] sm:$0xff]
    %v3633 = vld [vmem:[#allocation6 + $0x268] sm:$0xff]
    %v3634 = vld [vmem:[#allocation6 + $0x270] sm:$0xff]
    %v3635 = vld [vmem:[#allocation6 + $0x278] sm:$0xff]
    %v3636 = vld [vmem:[#allocation6 + $0x280] sm:$0xff]
    %v3637 = vld [vmem:[#allocation6 + $0x288] sm:$0xff]
    %v3638 = vld [vmem:[#allocation6 + $0x290] sm:$0xff]
    %v3639 = vld [vmem:[#allocation6 + $0x298] sm:$0xff]
    %v3640 = vld [vmem:[#allocation6 + $0x2a0] sm:$0xff]
    %v3641 = vld [vmem:[#allocation6 + $0x2a8] sm:$0xff]
    %v3642 = vld [vmem:[#allocation6 + $0x2b0] sm:$0xff]
    %v3643 = vld [vmem:[#allocation6 + $0x2b8] sm:$0xff]
    %v3644 = vld [vmem:[#allocation6 + $0x2c0] sm:$0xff]
    %v3645 = vld [vmem:[#allocation6 + $0x2c8] sm:$0xff]
    %v3646 = vld [vmem:[#allocation6 + $0x2d0] sm:$0xff]
    %v3647 = vld [vmem:[#allocation6 + $0x2d8] sm:$0xff]
    %v3648 = vld [vmem:[#allocation6 + $0x2e0] sm:$0xff]
    %v3649 = vld [vmem:[#allocation6 + $0x2e8] sm:$0xff]
    %v3650 = vld [vmem:[#allocation6 + $0x2f0] sm:$0xff]
    %v3651 = vld [vmem:[#allocation6 + $0x2f8] sm:$0xff]
    %v3652 = vld [vmem:[#allocation6 + $0x300] sm:$0xff]
    %v3653 = vld [vmem:[#allocation6 + $0x308] sm:$0xff]
    %v3654 = vld [vmem:[#allocation6 + $0x310] sm:$0xff]
    %v3655 = vld [vmem:[#allocation6 + $0x318] sm:$0xff]
    %v3656 = vld [vmem:[#allocation6 + $0x320] sm:$0xff]
    %v3657 = vld [vmem:[#allocation6 + $0x328] sm:$0xff]
    %v3658 = vld [vmem:[#allocation6 + $0x330] sm:$0xff]
    %v3659 = vld [vmem:[#allocation6 + $0x338] sm:$0xff]
    %v3660 = vld [vmem:[#allocation6 + $0x340] sm:$0xff]
    %v3661 = vld [vmem:[#allocation6 + $0x348] sm:$0xff]
    %v3662 = vld [vmem:[#allocation6 + $0x350] sm:$0xff]
    %v3663 = vld [vmem:[#allocation6 + $0x358] sm:$0xff]
    %v3664 = vld [vmem:[#allocation6 + $0x360] sm:$0xff]
    %v3665 = vld [vmem:[#allocation6 + $0x368] sm:$0xff]
    %v3666 = vld [vmem:[#allocation6 + $0x370] sm:$0xff]
    %v3667 = vld [vmem:[#allocation6 + $0x378] sm:$0xff]
    %v3668 = vld [vmem:[#allocation6 + $0x380] sm:$0xff]
    %v3669 = vld [vmem:[#allocation6 + $0x388] sm:$0xff]
    %v3670 = vld [vmem:[#allocation6 + $0x390] sm:$0xff]
    %v3671 = vld [vmem:[#allocation6 + $0x398] sm:$0xff]
    %v3672 = vld [vmem:[#allocation6 + $0x3a0] sm:$0xff]
    %v3673 = vld [vmem:[#allocation6 + $0x3a8] sm:$0xff]
    %v3674 = vld [vmem:[#allocation6 + $0x3b0] sm:$0xff]
    %v3675 = vld [vmem:[#allocation6 + $0x3b8] sm:$0xff]
    %v3676 = vld [vmem:[#allocation6 + $0x3c0] sm:$0xff]
    %v3677 = vld [vmem:[#allocation6 + $0x3c8] sm:$0xff]
    %v3678 = vld [vmem:[#allocation6 + $0x3d0] sm:$0xff]
    %v3679 = vld [vmem:[#allocation6 + $0x3d8] sm:$0xff]
    %v3680 = vld [vmem:[#allocation6 + $0x3e0] sm:$0xff]
    %v3681 = vld [vmem:[#allocation6 + $0x3e8] sm:$0xff]
    %v3682 = vld [vmem:[#allocation6 + $0x3f0] sm:$0xff]
    %v3683 = vld [vmem:[#allocation6 + $0x3f8] sm:$0xff]
    %v3684 = vld [vmem:[#allocation6 + $0x400] sm:$0xff]
    %v3685 = vld [vmem:[#allocation6 + $0x408] sm:$0xff]
    %v3686 = vld [vmem:[#allocation6 + $0x410] sm:$0xff]
    %v3687 = vld [vmem:[#allocation6 + $0x418] sm:$0xff]
    %v3688 = vld [vmem:[#allocation6 + $0x420] sm:$0xff]
    %v3689 = vld [vmem:[#allocation6 + $0x428] sm:$0xff]
    %v3690 = vld [vmem:[#allocation6 + $0x430] sm:$0xff]
    %v3691 = vld [vmem:[#allocation6 + $0x438] sm:$0xff]
    %v3692 = vld [vmem:[#allocation6 + $0x440] sm:$0xff]
    %v3693 = vld [vmem:[#allocation6 + $0x448] sm:$0xff]
    %v3694 = vld [vmem:[#allocation6 + $0x450] sm:$0xff]
    %v3695 = vld [vmem:[#allocation6 + $0x458] sm:$0xff]
    %v3696 = vld [vmem:[#allocation6 + $0x460] sm:$0xff]
    %v3697 = vld [vmem:[#allocation6 + $0x468] sm:$0xff]
    %v3698 = vld [vmem:[#allocation6 + $0x470] sm:$0xff]
    %v3699 = vld [vmem:[#allocation6 + $0x478] sm:$0xff]
    %v3700 = vld [vmem:[#allocation6 + $0x480] sm:$0xff]
    %v3701 = vld [vmem:[#allocation6 + $0x488] sm:$0xff]
    %v3702 = vld [vmem:[#allocation6 + $0x490] sm:$0xff]
    %v3703 = vld [vmem:[#allocation6 + $0x498] sm:$0xff]
    %v3704 = vld [vmem:[#allocation6 + $0x4a0] sm:$0xff]
    %v3705 = vld [vmem:[#allocation6 + $0x4a8] sm:$0xff]
    %v3706 = vld [vmem:[#allocation6 + $0x4b0] sm:$0xff]
    %v3707 = vld [vmem:[#allocation6 + $0x4b8] sm:$0xff]
    %v3708 = vld [vmem:[#allocation6 + $0x4c0] sm:$0xff]
    %v3709 = vld [vmem:[#allocation6 + $0x4c8] sm:$0xff]
    %v3710 = vld [vmem:[#allocation6 + $0x4d0] sm:$0xff]
    %v3711 = vld [vmem:[#allocation6 + $0x4d8] sm:$0xff]
    %v3712 = vld [vmem:[#allocation6 + $0x4e0] sm:$0xff]
    %v3713 = vld [vmem:[#allocation6 + $0x4e8] sm:$0xff]
    %v3714 = vld [vmem:[#allocation6 + $0x4f0] sm:$0xff]
    %v3715 = vld [vmem:[#allocation6 + $0x4f8] sm:$0xff]
    %v3716 = vld [vmem:[#allocation6 + $0x500] sm:$0xff]
    %v3717 = vld [vmem:[#allocation6 + $0x508] sm:$0xff]
    %v3718 = vld [vmem:[#allocation6 + $0x510] sm:$0xff]
    %v3719 = vld [vmem:[#allocation6 + $0x518] sm:$0xff]
    %v3720 = vld [vmem:[#allocation6 + $0x520] sm:$0xff]
    %v3721 = vld [vmem:[#allocation6 + $0x528] sm:$0xff]
    %v3722 = vld [vmem:[#allocation6 + $0x530] sm:$0xff]
    %v3723 = vld [vmem:[#allocation6 + $0x538] sm:$0xff]
    %v3724 = vld [vmem:[#allocation6 + $0x540] sm:$0xff]
    %v3725 = vld [vmem:[#allocation6 + $0x548] sm:$0xff]
    %v3726 = vld [vmem:[#allocation6 + $0x550] sm:$0xff]
    %v3727 = vld [vmem:[#allocation6 + $0x558] sm:$0xff]
    %v3728 = vld [vmem:[#allocation6 + $0x560] sm:$0xff]
    %v3729 = vld [vmem:[#allocation6 + $0x568] sm:$0xff]
    %v3730 = vld [vmem:[#allocation6 + $0x570] sm:$0xff]
    %v3731 = vld [vmem:[#allocation6 + $0x578] sm:$0xff]
    %v3732 = vld [vmem:[#allocation6 + $0x580] sm:$0xff]
    %v3733 = vld [vmem:[#allocation6 + $0x588] sm:$0xff]
    %v3734 = vld [vmem:[#allocation6 + $0x590] sm:$0xff]
    %v3735 = vld [vmem:[#allocation6 + $0x598] sm:$0xff]
    %v3736 = vld [vmem:[#allocation6 + $0x5a0] sm:$0xff]
    %v3737 = vld [vmem:[#allocation6 + $0x5a8] sm:$0xff]
    %v3738 = vld [vmem:[#allocation6 + $0x5b0] sm:$0xff]
    %v3739 = vld [vmem:[#allocation6 + $0x5b8] sm:$0xff]
    %v3740 = vld [vmem:[#allocation6 + $0x5c0] sm:$0xff]
    %v3741 = vld [vmem:[#allocation6 + $0x5c8] sm:$0xff]
    %v3742 = vld [vmem:[#allocation6 + $0x5d0] sm:$0xff]
    %v3743 = vld [vmem:[#allocation6 + $0x5d8] sm:$0xff]
    %v3744 = vld [vmem:[#allocation6 + $0x5e0] sm:$0xff]
    %v3745 = vld [vmem:[#allocation6 + $0x5e8] sm:$0xff]
    %v3746 = vld [vmem:[#allocation6 + $0x5f0] sm:$0xff]
    %v3747 = vld [vmem:[#allocation6 + $0x5f8] sm:$0xff]
    %v3748 = vld [vmem:[#allocation6 + $0x600] sm:$0xff]
    %v3749 = vld [vmem:[#allocation6 + $0x608] sm:$0xff]
    %v3750 = vld [vmem:[#allocation6 + $0x610] sm:$0xff]
    %v3751 = vld [vmem:[#allocation6 + $0x618] sm:$0xff]
    %v3752 = vld [vmem:[#allocation6 + $0x620] sm:$0xff]
    %v3753 = vld [vmem:[#allocation6 + $0x628] sm:$0xff]
    %v3754 = vld [vmem:[#allocation6 + $0x630] sm:$0xff]
    %v3755 = vld [vmem:[#allocation6 + $0x638] sm:$0xff]
    %v3756 = vld [vmem:[#allocation6 + $0x640] sm:$0xff]
    %v3757 = vld [vmem:[#allocation6 + $0x648] sm:$0xff]
    %v3758 = vld [vmem:[#allocation6 + $0x650] sm:$0xff]
    %v3759 = vld [vmem:[#allocation6 + $0x658] sm:$0xff]
    %v3760 = vld [vmem:[#allocation6 + $0x660] sm:$0xff]
    %v3761 = vld [vmem:[#allocation6 + $0x668] sm:$0xff]
    %v3762 = vld [vmem:[#allocation6 + $0x670] sm:$0xff]
    %v3763 = vld [vmem:[#allocation6 + $0x678] sm:$0xff]
    %v3764 = vld [vmem:[#allocation6 + $0x680] sm:$0xff]
    %v3765 = vld [vmem:[#allocation6 + $0x688] sm:$0xff]
    %v3766 = vld [vmem:[#allocation6 + $0x690] sm:$0xff]
    %v3767 = vld [vmem:[#allocation6 + $0x698] sm:$0xff]
    %v3768 = vld [vmem:[#allocation6 + $0x6a0] sm:$0xff]
    %v3769 = vld [vmem:[#allocation6 + $0x6a8] sm:$0xff]
    %v3770 = vld [vmem:[#allocation6 + $0x6b0] sm:$0xff]
    %v3771 = vld [vmem:[#allocation6 + $0x6b8] sm:$0xff]
    %v3772 = vld [vmem:[#allocation6 + $0x6c0] sm:$0xff]
    %v3773 = vld [vmem:[#allocation6 + $0x6c8] sm:$0xff]
    %v3774 = vld [vmem:[#allocation6 + $0x6d0] sm:$0xff]
    %v3775 = vld [vmem:[#allocation6 + $0x6d8] sm:$0xff]
    %v3776 = vld [vmem:[#allocation6 + $0x6e0] sm:$0xff]
    %v3777 = vld [vmem:[#allocation6 + $0x6e8] sm:$0xff]
    %v3778 = vld [vmem:[#allocation6 + $0x6f0] sm:$0xff]
    %v3779 = vld [vmem:[#allocation6 + $0x6f8] sm:$0xff]
    %v3780 = vld [vmem:[#allocation6 + $0x700] sm:$0xff]
    %v3781 = vld [vmem:[#allocation6 + $0x708] sm:$0xff]
    %v3782 = vld [vmem:[#allocation6 + $0x710] sm:$0xff]
    %v3783 = vld [vmem:[#allocation6 + $0x718] sm:$0xff]
    %v3784 = vld [vmem:[#allocation6 + $0x720] sm:$0xff]
    %v3785 = vld [vmem:[#allocation6 + $0x728] sm:$0xff]
    %v3786 = vld [vmem:[#allocation6 + $0x730] sm:$0xff]
    %v3787 = vld [vmem:[#allocation6 + $0x738] sm:$0xff]
    %v3788 = vld [vmem:[#allocation6 + $0x740] sm:$0xff]
    %v3789 = vld [vmem:[#allocation6 + $0x748] sm:$0xff]
    %v3790 = vld [vmem:[#allocation6 + $0x750] sm:$0xff]
    %v3791 = vld [vmem:[#allocation6 + $0x758] sm:$0xff]
    %v3792 = vld [vmem:[#allocation6 + $0x760] sm:$0xff]
    %v3793 = vld [vmem:[#allocation6 + $0x768] sm:$0xff]
    %v3794 = vld [vmem:[#allocation6 + $0x770] sm:$0xff]
    %v3795 = vld [vmem:[#allocation6 + $0x778] sm:$0xff]
    %v3796 = vld [vmem:[#allocation6 + $0x780] sm:$0xff]
    %v3797 = vld [vmem:[#allocation6 + $0x788] sm:$0xff]
    %v3798 = vld [vmem:[#allocation6 + $0x790] sm:$0xff]
    %v3799 = vld [vmem:[#allocation6 + $0x798] sm:$0xff]
    %v3800 = vld [vmem:[#allocation6 + $0x7a0] sm:$0xff]
    %v3801 = vld [vmem:[#allocation6 + $0x7a8] sm:$0xff]
    %v3802 = vld [vmem:[#allocation6 + $0x7b0] sm:$0xff]
    %v3803 = vld [vmem:[#allocation6 + $0x7b8] sm:$0xff]
    %v3804 = vld [vmem:[#allocation6 + $0x7c0] sm:$0xff]
    %v3805 = vld [vmem:[#allocation6 + $0x7c8] sm:$0xff]
    %v3806 = vld [vmem:[#allocation6 + $0x7d0] sm:$0xff]
    %v3807 = vld [vmem:[#allocation6 + $0x7d8] sm:$0xff]
    %v3808 = vld [vmem:[#allocation6 + $0x7e0] sm:$0xff]
    %v3809 = vld [vmem:[#allocation6 + $0x7e8] sm:$0xff]
    %v3810 = vld [vmem:[#allocation6 + $0x7f0] sm:$0xff]
    %v3811 = vld [vmem:[#allocation6 + $0x7f8] sm:$0xff]
    %v3812 = vld [vmem:[#allocation7] sm:$0xf]
    %v3814 = vlaneseq
    %v3815 = vshrl.u32 %v3814, 7
    %v3816 = vsub.s32 0, %v3815
    %v3817 = vrot.slane %v3812, %v3816
    %v3818 = vlaneseq
    %v3819 = vshrl.u32 %v3818, 7
    %v3820 = vsub.s32 1, %v3819
    %v3821 = vrot.slane %v3812, %v3820
    %v3822 = vlaneseq
    %v3823 = vshrl.u32 %v3822, 7
    %v3824 = vsub.s32 2, %v3823
    %v3825 = vrot.slane %v3812, %v3824
    %v3826 = vlaneseq
    %v3827 = vshrl.u32 %v3826, 7
    %v3828 = vsub.s32 3, %v3827
    %v3829 = vrot.slane %v3812, %v3828
    %v4090 = vunpack.c.l.b16 %v3556
    %v4091 = vunpack.c.h.b16 %v3556
    %v4092 = vunpack.c.l.b16 %v3557
    %v4093 = vunpack.c.h.b16 %v3557
    %v4094 = vunpack.c.l.b16 %v3558
    %v4095 = vunpack.c.h.b16 %v3558
    %v4096 = vunpack.c.l.b16 %v3559
    %v4097 = vunpack.c.h.b16 %v3559
    %v4098 = vunpack.c.l.b16 %v3560
    %v4099 = vunpack.c.h.b16 %v3560
    %v4100 = vunpack.c.l.b16 %v3561
    %v4101 = vunpack.c.h.b16 %v3561
    %v4102 = vunpack.c.l.b16 %v3562
    %v4103 = vunpack.c.h.b16 %v3562
    %v4104 = vunpack.c.l.b16 %v3563
    %v4105 = vunpack.c.h.b16 %v3563
    %v4106 = vunpack.c.l.b16 %v3564
    %v4107 = vunpack.c.h.b16 %v3564
    %v4108 = vunpack.c.l.b16 %v3565
    %v4109 = vunpack.c.h.b16 %v3565
    %v4110 = vunpack.c.l.b16 %v3566
    %v4111 = vunpack.c.h.b16 %v3566
    %v4112 = vunpack.c.l.b16 %v3567
    %v4113 = vunpack.c.h.b16 %v3567
    %v4114 = vunpack.c.l.b16 %v3568
    %v4115 = vunpack.c.h.b16 %v3568
    %v4116 = vunpack.c.l.b16 %v3569
    %v4117 = vunpack.c.h.b16 %v3569
    %v4118 = vunpack.c.l.b16 %v3570
    %v4119 = vunpack.c.h.b16 %v3570
    %v4120 = vunpack.c.l.b16 %v3571
    %v4121 = vunpack.c.h.b16 %v3571
    %v4122 = vunpack.c.l.b16 %v3572
    %v4123 = vunpack.c.h.b16 %v3572
    %v4124 = vunpack.c.l.b16 %v3573
    %v4125 = vunpack.c.h.b16 %v3573
    %v4126 = vunpack.c.l.b16 %v3574
    %v4127 = vunpack.c.h.b16 %v3574
    %v4128 = vunpack.c.l.b16 %v3575
    %v4129 = vunpack.c.h.b16 %v3575
    %v4130 = vunpack.c.l.b16 %v3576
    %v4131 = vunpack.c.h.b16 %v3576
    %v4132 = vunpack.c.l.b16 %v3577
    %v4133 = vunpack.c.h.b16 %v3577
    %v4134 = vunpack.c.l.b16 %v3578
    %v4135 = vunpack.c.h.b16 %v3578
    %v4136 = vunpack.c.l.b16 %v3579
    %v4137 = vunpack.c.h.b16 %v3579
    %v4138 = vunpack.c.l.b16 %v3580
    %v4139 = vunpack.c.h.b16 %v3580
    %v4140 = vunpack.c.l.b16 %v3581
    %v4141 = vunpack.c.h.b16 %v3581
    %v4142 = vunpack.c.l.b16 %v3582
    %v4143 = vunpack.c.h.b16 %v3582
    %v4144 = vunpack.c.l.b16 %v3583
    %v4145 = vunpack.c.h.b16 %v3583
    %v4146 = vunpack.c.l.b16 %v3584
    %v4147 = vunpack.c.h.b16 %v3584
    %v4148 = vunpack.c.l.b16 %v3585
    %v4149 = vunpack.c.h.b16 %v3585
    %v4150 = vunpack.c.l.b16 %v3586
    %v4151 = vunpack.c.h.b16 %v3586
    %v4152 = vunpack.c.l.b16 %v3587
    %v4153 = vunpack.c.h.b16 %v3587
    %v4154 = vunpack.c.l.b16 %v3588
    %v4155 = vunpack.c.h.b16 %v3588
    %v4156 = vunpack.c.l.b16 %v3589
    %v4157 = vunpack.c.h.b16 %v3589
    %v4158 = vunpack.c.l.b16 %v3590
    %v4159 = vunpack.c.h.b16 %v3590
    %v4160 = vunpack.c.l.b16 %v3591
    %v4161 = vunpack.c.h.b16 %v3591
    %v4162 = vunpack.c.l.b16 %v3592
    %v4163 = vunpack.c.h.b16 %v3592
    %v4164 = vunpack.c.l.b16 %v3593
    %v4165 = vunpack.c.h.b16 %v3593
    %v4166 = vunpack.c.l.b16 %v3594
    %v4167 = vunpack.c.h.b16 %v3594
    %v4168 = vunpack.c.l.b16 %v3595
    %v4169 = vunpack.c.h.b16 %v3595
    %v4170 = vunpack.c.l.b16 %v3596
    %v4171 = vunpack.c.h.b16 %v3596
    %v4172 = vunpack.c.l.b16 %v3597
    %v4173 = vunpack.c.h.b16 %v3597
    %v4174 = vunpack.c.l.b16 %v3598
    %v4175 = vunpack.c.h.b16 %v3598
    %v4176 = vunpack.c.l.b16 %v3599
    %v4177 = vunpack.c.h.b16 %v3599
    %v4178 = vunpack.c.l.b16 %v3600
    %v4179 = vunpack.c.h.b16 %v3600
    %v4180 = vunpack.c.l.b16 %v3601
    %v4181 = vunpack.c.h.b16 %v3601
    %v4182 = vunpack.c.l.b16 %v3602
    %v4183 = vunpack.c.h.b16 %v3602
    %v4184 = vunpack.c.l.b16 %v3603
    %v4185 = vunpack.c.h.b16 %v3603
    %v4186 = vunpack.c.l.b16 %v3604
    %v4187 = vunpack.c.h.b16 %v3604
    %v4188 = vunpack.c.l.b16 %v3605
    %v4189 = vunpack.c.h.b16 %v3605
    %v4190 = vunpack.c.l.b16 %v3606
    %v4191 = vunpack.c.h.b16 %v3606
    %v4192 = vunpack.c.l.b16 %v3607
    %v4193 = vunpack.c.h.b16 %v3607
    %v4194 = vunpack.c.l.b16 %v3608
    %v4195 = vunpack.c.h.b16 %v3608
    %v4196 = vunpack.c.l.b16 %v3609
    %v4197 = vunpack.c.h.b16 %v3609
    %v4198 = vunpack.c.l.b16 %v3610
    %v4199 = vunpack.c.h.b16 %v3610
    %v4200 = vunpack.c.l.b16 %v3611
    %v4201 = vunpack.c.h.b16 %v3611
    %v4202 = vunpack.c.l.b16 %v3612
    %v4203 = vunpack.c.h.b16 %v3612
    %v4204 = vunpack.c.l.b16 %v3613
    %v4205 = vunpack.c.h.b16 %v3613
    %v4206 = vunpack.c.l.b16 %v3614
    %v4207 = vunpack.c.h.b16 %v3614
    %v4208 = vunpack.c.l.b16 %v3615
    %v4209 = vunpack.c.h.b16 %v3615
    %v4210 = vunpack.c.l.b16 %v3616
    %v4211 = vunpack.c.h.b16 %v3616
    %v4212 = vunpack.c.l.b16 %v3617
    %v4213 = vunpack.c.h.b16 %v3617
    %v4214 = vunpack.c.l.b16 %v3618
    %v4215 = vunpack.c.h.b16 %v3618
    %v4216 = vunpack.c.l.b16 %v3619
    %v4217 = vunpack.c.h.b16 %v3619
    %v4218 = vunpack.c.l.b16 %v3620
    %v4219 = vunpack.c.h.b16 %v3620
    %v4220 = vunpack.c.l.b16 %v3621
    %v4221 = vunpack.c.h.b16 %v3621
    %v4222 = vunpack.c.l.b16 %v3622
    %v4223 = vunpack.c.h.b16 %v3622
    %v4224 = vunpack.c.l.b16 %v3623
    %v4225 = vunpack.c.h.b16 %v3623
    %v4226 = vunpack.c.l.b16 %v3624
    %v4227 = vunpack.c.h.b16 %v3624
    %v4228 = vunpack.c.l.b16 %v3625
    %v4229 = vunpack.c.h.b16 %v3625
    %v4230 = vunpack.c.l.b16 %v3626
    %v4231 = vunpack.c.h.b16 %v3626
    %v4232 = vunpack.c.l.b16 %v3627
    %v4233 = vunpack.c.h.b16 %v3627
    %v4234 = vunpack.c.l.b16 %v3628
    %v4235 = vunpack.c.h.b16 %v3628
    %v4236 = vunpack.c.l.b16 %v3629
    %v4237 = vunpack.c.h.b16 %v3629
    %v4238 = vunpack.c.l.b16 %v3630
    %v4239 = vunpack.c.h.b16 %v3630
    %v4240 = vunpack.c.l.b16 %v3631
    %v4241 = vunpack.c.h.b16 %v3631
    %v4242 = vunpack.c.l.b16 %v3632
    %v4243 = vunpack.c.h.b16 %v3632
    %v4244 = vunpack.c.l.b16 %v3633
    %v4245 = vunpack.c.h.b16 %v3633
    %v4246 = vunpack.c.l.b16 %v3634
    %v4247 = vunpack.c.h.b16 %v3634
    %v4248 = vunpack.c.l.b16 %v3635
    %v4249 = vunpack.c.h.b16 %v3635
    %v4250 = vunpack.c.l.b16 %v3636
    %v4251 = vunpack.c.h.b16 %v3636
    %v4252 = vunpack.c.l.b16 %v3637
    %v4253 = vunpack.c.h.b16 %v3637
    %v4254 = vunpack.c.l.b16 %v3638
    %v4255 = vunpack.c.h.b16 %v3638
    %v4256 = vunpack.c.l.b16 %v3639
    %v4257 = vunpack.c.h.b16 %v3639
    %v4258 = vunpack.c.l.b16 %v3640
    %v4259 = vunpack.c.h.b16 %v3640
    %v4260 = vunpack.c.l.b16 %v3641
    %v4261 = vunpack.c.h.b16 %v3641
    %v4262 = vunpack.c.l.b16 %v3642
    %v4263 = vunpack.c.h.b16 %v3642
    %v4264 = vunpack.c.l.b16 %v3643
    %v4265 = vunpack.c.h.b16 %v3643
    %v4266 = vunpack.c.l.b16 %v3644
    %v4267 = vunpack.c.h.b16 %v3644
    %v4268 = vunpack.c.l.b16 %v3645
    %v4269 = vunpack.c.h.b16 %v3645
    %v4270 = vunpack.c.l.b16 %v3646
    %v4271 = vunpack.c.h.b16 %v3646
    %v4272 = vunpack.c.l.b16 %v3647
    %v4273 = vunpack.c.h.b16 %v3647
    %v4274 = vunpack.c.l.b16 %v3648
    %v4275 = vunpack.c.h.b16 %v3648
    %v4276 = vunpack.c.l.b16 %v3649
    %v4277 = vunpack.c.h.b16 %v3649
    %v4278 = vunpack.c.l.b16 %v3650
    %v4279 = vunpack.c.h.b16 %v3650
    %v4280 = vunpack.c.l.b16 %v3651
    %v4281 = vunpack.c.h.b16 %v3651
    %v4282 = vunpack.c.l.b16 %v3652
    %v4283 = vunpack.c.h.b16 %v3652
    %v4284 = vunpack.c.l.b16 %v3653
    %v4285 = vunpack.c.h.b16 %v3653
    %v4286 = vunpack.c.l.b16 %v3654
    %v4287 = vunpack.c.h.b16 %v3654
    %v4288 = vunpack.c.l.b16 %v3655
    %v4289 = vunpack.c.h.b16 %v3655
    %v4290 = vunpack.c.l.b16 %v3656
    %v4291 = vunpack.c.h.b16 %v3656
    %v4292 = vunpack.c.l.b16 %v3657
    %v4293 = vunpack.c.h.b16 %v3657
    %v4294 = vunpack.c.l.b16 %v3658
    %v4295 = vunpack.c.h.b16 %v3658
    %v4296 = vunpack.c.l.b16 %v3659
    %v4297 = vunpack.c.h.b16 %v3659
    %v4298 = vunpack.c.l.b16 %v3660
    %v4299 = vunpack.c.h.b16 %v3660
    %v4300 = vunpack.c.l.b16 %v3661
    %v4301 = vunpack.c.h.b16 %v3661
    %v4302 = vunpack.c.l.b16 %v3662
    %v4303 = vunpack.c.h.b16 %v3662
    %v4304 = vunpack.c.l.b16 %v3663
    %v4305 = vunpack.c.h.b16 %v3663
    %v4306 = vunpack.c.l.b16 %v3664
    %v4307 = vunpack.c.h.b16 %v3664
    %v4308 = vunpack.c.l.b16 %v3665
    %v4309 = vunpack.c.h.b16 %v3665
    %v4310 = vunpack.c.l.b16 %v3666
    %v4311 = vunpack.c.h.b16 %v3666
    %v4312 = vunpack.c.l.b16 %v3667
    %v4313 = vunpack.c.h.b16 %v3667
    %v4314 = vunpack.c.l.b16 %v3668
    %v4315 = vunpack.c.h.b16 %v3668
    %v4316 = vunpack.c.l.b16 %v3669
    %v4317 = vunpack.c.h.b16 %v3669
    %v4318 = vunpack.c.l.b16 %v3670
    %v4319 = vunpack.c.h.b16 %v3670
    %v4320 = vunpack.c.l.b16 %v3671
    %v4321 = vunpack.c.h.b16 %v3671
    %v4322 = vunpack.c.l.b16 %v3672
    %v4323 = vunpack.c.h.b16 %v3672
    %v4324 = vunpack.c.l.b16 %v3673
    %v4325 = vunpack.c.h.b16 %v3673
    %v4326 = vunpack.c.l.b16 %v3674
    %v4327 = vunpack.c.h.b16 %v3674
    %v4328 = vunpack.c.l.b16 %v3675
    %v4329 = vunpack.c.h.b16 %v3675
    %v4330 = vunpack.c.l.b16 %v3676
    %v4331 = vunpack.c.h.b16 %v3676
    %v4332 = vunpack.c.l.b16 %v3677
    %v4333 = vunpack.c.h.b16 %v3677
    %v4334 = vunpack.c.l.b16 %v3678
    %v4335 = vunpack.c.h.b16 %v3678
    %v4336 = vunpack.c.l.b16 %v3679
    %v4337 = vunpack.c.h.b16 %v3679
    %v4338 = vunpack.c.l.b16 %v3680
    %v4339 = vunpack.c.h.b16 %v3680
    %v4340 = vunpack.c.l.b16 %v3681
    %v4341 = vunpack.c.h.b16 %v3681
    %v4342 = vunpack.c.l.b16 %v3682
    %v4343 = vunpack.c.h.b16 %v3682
    %v4344 = vunpack.c.l.b16 %v3683
    %v4345 = vunpack.c.h.b16 %v3683
    %v4346 = vunpack.c.l.b16 %v3684
    %v4347 = vunpack.c.h.b16 %v3684
    %v4348 = vunpack.c.l.b16 %v3685
    %v4349 = vunpack.c.h.b16 %v3685
    %v4350 = vunpack.c.l.b16 %v3686
    %v4351 = vunpack.c.h.b16 %v3686
    %v4352 = vunpack.c.l.b16 %v3687
    %v4353 = vunpack.c.h.b16 %v3687
    %v4354 = vunpack.c.l.b16 %v3688
    %v4355 = vunpack.c.h.b16 %v3688
    %v4356 = vunpack.c.l.b16 %v3689
    %v4357 = vunpack.c.h.b16 %v3689
    %v4358 = vunpack.c.l.b16 %v3690
    %v4359 = vunpack.c.h.b16 %v3690
    %v4360 = vunpack.c.l.b16 %v3691
    %v4361 = vunpack.c.h.b16 %v3691
    %v4362 = vunpack.c.l.b16 %v3692
    %v4363 = vunpack.c.h.b16 %v3692
    %v4364 = vunpack.c.l.b16 %v3693
    %v4365 = vunpack.c.h.b16 %v3693
    %v4366 = vunpack.c.l.b16 %v3694
    %v4367 = vunpack.c.h.b16 %v3694
    %v4368 = vunpack.c.l.b16 %v3695
    %v4369 = vunpack.c.h.b16 %v3695
    %v4370 = vunpack.c.l.b16 %v3696
    %v4371 = vunpack.c.h.b16 %v3696
    %v4372 = vunpack.c.l.b16 %v3697
    %v4373 = vunpack.c.h.b16 %v3697
    %v4374 = vunpack.c.l.b16 %v3698
    %v4375 = vunpack.c.h.b16 %v3698
    %v4376 = vunpack.c.l.b16 %v3699
    %v4377 = vunpack.c.h.b16 %v3699
    %v4378 = vunpack.c.l.b16 %v3700
    %v4379 = vunpack.c.h.b16 %v3700
    %v4380 = vunpack.c.l.b16 %v3701
    %v4381 = vunpack.c.h.b16 %v3701
    %v4382 = vunpack.c.l.b16 %v3702
    %v4383 = vunpack.c.h.b16 %v3702
    %v4384 = vunpack.c.l.b16 %v3703
    %v4385 = vunpack.c.h.b16 %v3703
    %v4386 = vunpack.c.l.b16 %v3704
    %v4387 = vunpack.c.h.b16 %v3704
    %v4388 = vunpack.c.l.b16 %v3705
    %v4389 = vunpack.c.h.b16 %v3705
    %v4390 = vunpack.c.l.b16 %v3706
    %v4391 = vunpack.c.h.b16 %v3706
    %v4392 = vunpack.c.l.b16 %v3707
    %v4393 = vunpack.c.h.b16 %v3707
    %v4394 = vunpack.c.l.b16 %v3708
    %v4395 = vunpack.c.h.b16 %v3708
    %v4396 = vunpack.c.l.b16 %v3709
    %v4397 = vunpack.c.h.b16 %v3709
    %v4398 = vunpack.c.l.b16 %v3710
    %v4399 = vunpack.c.h.b16 %v3710
    %v4400 = vunpack.c.l.b16 %v3711
    %v4401 = vunpack.c.h.b16 %v3711
    %v4402 = vunpack.c.l.b16 %v3712
    %v4403 = vunpack.c.h.b16 %v3712
    %v4404 = vunpack.c.l.b16 %v3713
    %v4405 = vunpack.c.h.b16 %v3713
    %v4406 = vunpack.c.l.b16 %v3714
    %v4407 = vunpack.c.h.b16 %v3714
    %v4408 = vunpack.c.l.b16 %v3715
    %v4409 = vunpack.c.h.b16 %v3715
    %v4410 = vunpack.c.l.b16 %v3716
    %v4411 = vunpack.c.h.b16 %v3716
    %v4412 = vunpack.c.l.b16 %v3717
    %v4413 = vunpack.c.h.b16 %v3717
    %v4414 = vunpack.c.l.b16 %v3718
    %v4415 = vunpack.c.h.b16 %v3718
    %v4416 = vunpack.c.l.b16 %v3719
    %v4417 = vunpack.c.h.b16 %v3719
    %v4418 = vunpack.c.l.b16 %v3720
    %v4419 = vunpack.c.h.b16 %v3720
    %v4420 = vunpack.c.l.b16 %v3721
    %v4421 = vunpack.c.h.b16 %v3721
    %v4422 = vunpack.c.l.b16 %v3722
    %v4423 = vunpack.c.h.b16 %v3722
    %v4424 = vunpack.c.l.b16 %v3723
    %v4425 = vunpack.c.h.b16 %v3723
    %v4426 = vunpack.c.l.b16 %v3724
    %v4427 = vunpack.c.h.b16 %v3724
    %v4428 = vunpack.c.l.b16 %v3725
    %v4429 = vunpack.c.h.b16 %v3725
    %v4430 = vunpack.c.l.b16 %v3726
    %v4431 = vunpack.c.h.b16 %v3726
    %v4432 = vunpack.c.l.b16 %v3727
    %v4433 = vunpack.c.h.b16 %v3727
    %v4434 = vunpack.c.l.b16 %v3728
    %v4435 = vunpack.c.h.b16 %v3728
    %v4436 = vunpack.c.l.b16 %v3729
    %v4437 = vunpack.c.h.b16 %v3729
    %v4438 = vunpack.c.l.b16 %v3730
    %v4439 = vunpack.c.h.b16 %v3730
    %v4440 = vunpack.c.l.b16 %v3731
    %v4441 = vunpack.c.h.b16 %v3731
    %v4442 = vunpack.c.l.b16 %v3732
    %v4443 = vunpack.c.h.b16 %v3732
    %v4444 = vunpack.c.l.b16 %v3733
    %v4445 = vunpack.c.h.b16 %v3733
    %v4446 = vunpack.c.l.b16 %v3734
    %v4447 = vunpack.c.h.b16 %v3734
    %v4448 = vunpack.c.l.b16 %v3735
    %v4449 = vunpack.c.h.b16 %v3735
    %v4450 = vunpack.c.l.b16 %v3736
    %v4451 = vunpack.c.h.b16 %v3736
    %v4452 = vunpack.c.l.b16 %v3737
    %v4453 = vunpack.c.h.b16 %v3737
    %v4454 = vunpack.c.l.b16 %v3738
    %v4455 = vunpack.c.h.b16 %v3738
    %v4456 = vunpack.c.l.b16 %v3739
    %v4457 = vunpack.c.h.b16 %v3739
    %v4458 = vunpack.c.l.b16 %v3740
    %v4459 = vunpack.c.h.b16 %v3740
    %v4460 = vunpack.c.l.b16 %v3741
    %v4461 = vunpack.c.h.b16 %v3741
    %v4462 = vunpack.c.l.b16 %v3742
    %v4463 = vunpack.c.h.b16 %v3742
    %v4464 = vunpack.c.l.b16 %v3743
    %v4465 = vunpack.c.h.b16 %v3743
    %v4466 = vunpack.c.l.b16 %v3744
    %v4467 = vunpack.c.h.b16 %v3744
    %v4468 = vunpack.c.l.b16 %v3745
    %v4469 = vunpack.c.h.b16 %v3745
    %v4470 = vunpack.c.l.b16 %v3746
    %v4471 = vunpack.c.h.b16 %v3746
    %v4472 = vunpack.c.l.b16 %v3747
    %v4473 = vunpack.c.h.b16 %v3747
    %v4474 = vunpack.c.l.b16 %v3748
    %v4475 = vunpack.c.h.b16 %v3748
    %v4476 = vunpack.c.l.b16 %v3749
    %v4477 = vunpack.c.h.b16 %v3749
    %v4478 = vunpack.c.l.b16 %v3750
    %v4479 = vunpack.c.h.b16 %v3750
    %v4480 = vunpack.c.l.b16 %v3751
    %v4481 = vunpack.c.h.b16 %v3751
    %v4482 = vunpack.c.l.b16 %v3752
    %v4483 = vunpack.c.h.b16 %v3752
    %v4484 = vunpack.c.l.b16 %v3753
    %v4485 = vunpack.c.h.b16 %v3753
    %v4486 = vunpack.c.l.b16 %v3754
    %v4487 = vunpack.c.h.b16 %v3754
    %v4488 = vunpack.c.l.b16 %v3755
    %v4489 = vunpack.c.h.b16 %v3755
    %v4490 = vunpack.c.l.b16 %v3756
    %v4491 = vunpack.c.h.b16 %v3756
    %v4492 = vunpack.c.l.b16 %v3757
    %v4493 = vunpack.c.h.b16 %v3757
    %v4494 = vunpack.c.l.b16 %v3758
    %v4495 = vunpack.c.h.b16 %v3758
    %v4496 = vunpack.c.l.b16 %v3759
    %v4497 = vunpack.c.h.b16 %v3759
    %v4498 = vunpack.c.l.b16 %v3760
    %v4499 = vunpack.c.h.b16 %v3760
    %v4500 = vunpack.c.l.b16 %v3761
    %v4501 = vunpack.c.h.b16 %v3761
    %v4502 = vunpack.c.l.b16 %v3762
    %v4503 = vunpack.c.h.b16 %v3762
    %v4504 = vunpack.c.l.b16 %v3763
    %v4505 = vunpack.c.h.b16 %v3763
    %v4506 = vunpack.c.l.b16 %v3764
    %v4507 = vunpack.c.h.b16 %v3764
    %v4508 = vunpack.c.l.b16 %v3765
    %v4509 = vunpack.c.h.b16 %v3765
    %v4510 = vunpack.c.l.b16 %v3766
    %v4511 = vunpack.c.h.b16 %v3766
    %v4512 = vunpack.c.l.b16 %v3767
    %v4513 = vunpack.c.h.b16 %v3767
    %v4514 = vunpack.c.l.b16 %v3768
    %v4515 = vunpack.c.h.b16 %v3768
    %v4516 = vunpack.c.l.b16 %v3769
    %v4517 = vunpack.c.h.b16 %v3769
    %v4518 = vunpack.c.l.b16 %v3770
    %v4519 = vunpack.c.h.b16 %v3770
    %v4520 = vunpack.c.l.b16 %v3771
    %v4521 = vunpack.c.h.b16 %v3771
    %v4522 = vunpack.c.l.b16 %v3772
    %v4523 = vunpack.c.h.b16 %v3772
    %v4524 = vunpack.c.l.b16 %v3773
    %v4525 = vunpack.c.h.b16 %v3773
    %v4526 = vunpack.c.l.b16 %v3774
    %v4527 = vunpack.c.h.b16 %v3774
    %v4528 = vunpack.c.l.b16 %v3775
    %v4529 = vunpack.c.h.b16 %v3775
    %v4530 = vunpack.c.l.b16 %v3776
    %v4531 = vunpack.c.h.b16 %v3776
    %v4532 = vunpack.c.l.b16 %v3777
    %v4533 = vunpack.c.h.b16 %v3777
    %v4534 = vunpack.c.l.b16 %v3778
    %v4535 = vunpack.c.h.b16 %v3778
    %v4536 = vunpack.c.l.b16 %v3779
    %v4537 = vunpack.c.h.b16 %v3779
    %v4538 = vunpack.c.l.b16 %v3780
    %v4539 = vunpack.c.h.b16 %v3780
    %v4540 = vunpack.c.l.b16 %v3781
    %v4541 = vunpack.c.h.b16 %v3781
    %v4542 = vunpack.c.l.b16 %v3782
    %v4543 = vunpack.c.h.b16 %v3782
    %v4544 = vunpack.c.l.b16 %v3783
    %v4545 = vunpack.c.h.b16 %v3783
    %v4546 = vunpack.c.l.b16 %v3784
    %v4547 = vunpack.c.h.b16 %v3784
    %v4548 = vunpack.c.l.b16 %v3785
    %v4549 = vunpack.c.h.b16 %v3785
    %v4550 = vunpack.c.l.b16 %v3786
    %v4551 = vunpack.c.h.b16 %v3786
    %v4552 = vunpack.c.l.b16 %v3787
    %v4553 = vunpack.c.h.b16 %v3787
    %v4554 = vunpack.c.l.b16 %v3788
    %v4555 = vunpack.c.h.b16 %v3788
    %v4556 = vunpack.c.l.b16 %v3789
    %v4557 = vunpack.c.h.b16 %v3789
    %v4558 = vunpack.c.l.b16 %v3790
    %v4559 = vunpack.c.h.b16 %v3790
    %v4560 = vunpack.c.l.b16 %v3791
    %v4561 = vunpack.c.h.b16 %v3791
    %v4562 = vunpack.c.l.b16 %v3792
    %v4563 = vunpack.c.h.b16 %v3792
    %v4564 = vunpack.c.l.b16 %v3793
    %v4565 = vunpack.c.h.b16 %v3793
    %v4566 = vunpack.c.l.b16 %v3794
    %v4567 = vunpack.c.h.b16 %v3794
    %v4568 = vunpack.c.l.b16 %v3795
    %v4569 = vunpack.c.h.b16 %v3795
    %v4570 = vunpack.c.l.b16 %v3796
    %v4571 = vunpack.c.h.b16 %v3796
    %v4572 = vunpack.c.l.b16 %v3797
    %v4573 = vunpack.c.h.b16 %v3797
    %v4574 = vunpack.c.l.b16 %v3798
    %v4575 = vunpack.c.h.b16 %v3798
    %v4576 = vunpack.c.l.b16 %v3799
    %v4577 = vunpack.c.h.b16 %v3799
    %v4578 = vunpack.c.l.b16 %v3800
    %v4579 = vunpack.c.h.b16 %v3800
    %v4580 = vunpack.c.l.b16 %v3801
    %v4581 = vunpack.c.h.b16 %v3801
    %v4582 = vunpack.c.l.b16 %v3802
    %v4583 = vunpack.c.h.b16 %v3802
    %v4584 = vunpack.c.l.b16 %v3803
    %v4585 = vunpack.c.h.b16 %v3803
    %v4586 = vunpack.c.l.b16 %v3804
    %v4587 = vunpack.c.h.b16 %v3804
    %v4588 = vunpack.c.l.b16 %v3805
    %v4589 = vunpack.c.h.b16 %v3805
    %v4590 = vunpack.c.l.b16 %v3806
    %v4591 = vunpack.c.h.b16 %v3806
    %v4592 = vunpack.c.l.b16 %v3807
    %v4593 = vunpack.c.h.b16 %v3807
    %v4594 = vunpack.c.l.b16 %v3808
    %v4595 = vunpack.c.h.b16 %v3808
    %v4596 = vunpack.c.l.b16 %v3809
    %v4597 = vunpack.c.h.b16 %v3809
    %v4598 = vunpack.c.l.b16 %v3810
    %v4599 = vunpack.c.h.b16 %v3810
    %v4600 = vunpack.c.l.b16 %v3811
    %v4601 = vunpack.c.h.b16 %v3811
    %v4602 = vpack.c.b16 %v4094, %v4090
    %v4603 = vpack.c.b16 %v4095, %v4091
    %v4604 = vpack.c.b16 %v4096, %v4092
    %v4605 = vpack.c.b16 %v4097, %v4093
    %v4606 = vpack.c.b16 %v4102, %v4098
    %v4607 = vpack.c.b16 %v4103, %v4099
    %v4608 = vpack.c.b16 %v4104, %v4100
    %v4609 = vpack.c.b16 %v4105, %v4101
    %v4610 = vpack.c.b16 %v4110, %v4106
    %v4611 = vpack.c.b16 %v4111, %v4107
    %v4612 = vpack.c.b16 %v4112, %v4108
    %v4613 = vpack.c.b16 %v4113, %v4109
    %v4614 = vpack.c.b16 %v4118, %v4114
    %v4615 = vpack.c.b16 %v4119, %v4115
    %v4616 = vpack.c.b16 %v4120, %v4116
    %v4617 = vpack.c.b16 %v4121, %v4117
    %v4618 = vpack.c.b16 %v4126, %v4122
    %v4619 = vpack.c.b16 %v4127, %v4123
    %v4620 = vpack.c.b16 %v4128, %v4124
    %v4621 = vpack.c.b16 %v4129, %v4125
    %v4622 = vpack.c.b16 %v4134, %v4130
    %v4623 = vpack.c.b16 %v4135, %v4131
    %v4624 = vpack.c.b16 %v4136, %v4132
    %v4625 = vpack.c.b16 %v4137, %v4133
    %v4626 = vpack.c.b16 %v4142, %v4138
    %v4627 = vpack.c.b16 %v4143, %v4139
    %v4628 = vpack.c.b16 %v4144, %v4140
    %v4629 = vpack.c.b16 %v4145, %v4141
    %v4630 = vpack.c.b16 %v4150, %v4146
    %v4631 = vpack.c.b16 %v4151, %v4147
    %v4632 = vpack.c.b16 %v4152, %v4148
    %v4633 = vpack.c.b16 %v4153, %v4149
    %v4634 = vpack.c.b16 %v4158, %v4154
    %v4635 = vpack.c.b16 %v4159, %v4155
    %v4636 = vpack.c.b16 %v4160, %v4156
    %v4637 = vpack.c.b16 %v4161, %v4157
    %v4638 = vpack.c.b16 %v4166, %v4162
    %v4639 = vpack.c.b16 %v4167, %v4163
    %v4640 = vpack.c.b16 %v4168, %v4164
    %v4641 = vpack.c.b16 %v4169, %v4165
    %v4642 = vpack.c.b16 %v4174, %v4170
    %v4643 = vpack.c.b16 %v4175, %v4171
    %v4644 = vpack.c.b16 %v4176, %v4172
    %v4645 = vpack.c.b16 %v4177, %v4173
    %v4646 = vpack.c.b16 %v4182, %v4178
    %v4647 = vpack.c.b16 %v4183, %v4179
    %v4648 = vpack.c.b16 %v4184, %v4180
    %v4649 = vpack.c.b16 %v4185, %v4181
    %v4650 = vpack.c.b16 %v4190, %v4186
    %v4651 = vpack.c.b16 %v4191, %v4187
    %v4652 = vpack.c.b16 %v4192, %v4188
    %v4653 = vpack.c.b16 %v4193, %v4189
    %v4654 = vpack.c.b16 %v4198, %v4194
    %v4655 = vpack.c.b16 %v4199, %v4195
    %v4656 = vpack.c.b16 %v4200, %v4196
    %v4657 = vpack.c.b16 %v4201, %v4197
    %v4658 = vpack.c.b16 %v4206, %v4202
    %v4659 = vpack.c.b16 %v4207, %v4203
    %v4660 = vpack.c.b16 %v4208, %v4204
    %v4661 = vpack.c.b16 %v4209, %v4205
    %v4662 = vpack.c.b16 %v4214, %v4210
    %v4663 = vpack.c.b16 %v4215, %v4211
    %v4664 = vpack.c.b16 %v4216, %v4212
    %v4665 = vpack.c.b16 %v4217, %v4213
    %v4666 = vpack.c.b16 %v4222, %v4218
    %v4667 = vpack.c.b16 %v4223, %v4219
    %v4668 = vpack.c.b16 %v4224, %v4220
    %v4669 = vpack.c.b16 %v4225, %v4221
    %v4670 = vpack.c.b16 %v4230, %v4226
    %v4671 = vpack.c.b16 %v4231, %v4227
    %v4672 = vpack.c.b16 %v4232, %v4228
    %v4673 = vpack.c.b16 %v4233, %v4229
    %v4674 = vpack.c.b16 %v4238, %v4234
    %v4675 = vpack.c.b16 %v4239, %v4235
    %v4676 = vpack.c.b16 %v4240, %v4236
    %v4677 = vpack.c.b16 %v4241, %v4237
    %v4678 = vpack.c.b16 %v4246, %v4242
    %v4679 = vpack.c.b16 %v4247, %v4243
    %v4680 = vpack.c.b16 %v4248, %v4244
    %v4681 = vpack.c.b16 %v4249, %v4245
    %v4682 = vpack.c.b16 %v4254, %v4250
    %v4683 = vpack.c.b16 %v4255, %v4251
    %v4684 = vpack.c.b16 %v4256, %v4252
    %v4685 = vpack.c.b16 %v4257, %v4253
    %v4686 = vpack.c.b16 %v4262, %v4258
    %v4687 = vpack.c.b16 %v4263, %v4259
    %v4688 = vpack.c.b16 %v4264, %v4260
    %v4689 = vpack.c.b16 %v4265, %v4261
    %v4690 = vpack.c.b16 %v4270, %v4266
    %v4691 = vpack.c.b16 %v4271, %v4267
    %v4692 = vpack.c.b16 %v4272, %v4268
    %v4693 = vpack.c.b16 %v4273, %v4269
    %v4694 = vpack.c.b16 %v4278, %v4274
    %v4695 = vpack.c.b16 %v4279, %v4275
    %v4696 = vpack.c.b16 %v4280, %v4276
    %v4697 = vpack.c.b16 %v4281, %v4277
    %v4698 = vpack.c.b16 %v4286, %v4282
    %v4699 = vpack.c.b16 %v4287, %v4283
    %v4700 = vpack.c.b16 %v4288, %v4284
    %v4701 = vpack.c.b16 %v4289, %v4285
    %v4702 = vpack.c.b16 %v4294, %v4290
    %v4703 = vpack.c.b16 %v4295, %v4291
    %v4704 = vpack.c.b16 %v4296, %v4292
    %v4705 = vpack.c.b16 %v4297, %v4293
    %v4706 = vpack.c.b16 %v4302, %v4298
    %v4707 = vpack.c.b16 %v4303, %v4299
    %v4708 = vpack.c.b16 %v4304, %v4300
    %v4709 = vpack.c.b16 %v4305, %v4301
    %v4710 = vpack.c.b16 %v4310, %v4306
    %v4711 = vpack.c.b16 %v4311, %v4307
    %v4712 = vpack.c.b16 %v4312, %v4308
    %v4713 = vpack.c.b16 %v4313, %v4309
    %v4714 = vpack.c.b16 %v4318, %v4314
    %v4715 = vpack.c.b16 %v4319, %v4315
    %v4716 = vpack.c.b16 %v4320, %v4316
    %v4717 = vpack.c.b16 %v4321, %v4317
    %v4718 = vpack.c.b16 %v4326, %v4322
    %v4719 = vpack.c.b16 %v4327, %v4323
    %v4720 = vpack.c.b16 %v4328, %v4324
    %v4721 = vpack.c.b16 %v4329, %v4325
    %v4722 = vpack.c.b16 %v4334, %v4330
    %v4723 = vpack.c.b16 %v4335, %v4331
    %v4724 = vpack.c.b16 %v4336, %v4332
    %v4725 = vpack.c.b16 %v4337, %v4333
    %v4726 = vpack.c.b16 %v4342, %v4338
    %v4727 = vpack.c.b16 %v4343, %v4339
    %v4728 = vpack.c.b16 %v4344, %v4340
    %v4729 = vpack.c.b16 %v4345, %v4341
    %v4730 = vpack.c.b16 %v4350, %v4346
    %v4731 = vpack.c.b16 %v4351, %v4347
    %v4732 = vpack.c.b16 %v4352, %v4348
    %v4733 = vpack.c.b16 %v4353, %v4349
    %v4734 = vpack.c.b16 %v4358, %v4354
    %v4735 = vpack.c.b16 %v4359, %v4355
    %v4736 = vpack.c.b16 %v4360, %v4356
    %v4737 = vpack.c.b16 %v4361, %v4357
    %v4738 = vpack.c.b16 %v4366, %v4362
    %v4739 = vpack.c.b16 %v4367, %v4363
    %v4740 = vpack.c.b16 %v4368, %v4364
    %v4741 = vpack.c.b16 %v4369, %v4365
    %v4742 = vpack.c.b16 %v4374, %v4370
    %v4743 = vpack.c.b16 %v4375, %v4371
    %v4744 = vpack.c.b16 %v4376, %v4372
    %v4745 = vpack.c.b16 %v4377, %v4373
    %v4746 = vpack.c.b16 %v4382, %v4378
    %v4747 = vpack.c.b16 %v4383, %v4379
    %v4748 = vpack.c.b16 %v4384, %v4380
    %v4749 = vpack.c.b16 %v4385, %v4381
    %v4750 = vpack.c.b16 %v4390, %v4386
    %v4751 = vpack.c.b16 %v4391, %v4387
    %v4752 = vpack.c.b16 %v4392, %v4388
    %v4753 = vpack.c.b16 %v4393, %v4389
    %v4754 = vpack.c.b16 %v4398, %v4394
    %v4755 = vpack.c.b16 %v4399, %v4395
    %v4756 = vpack.c.b16 %v4400, %v4396
    %v4757 = vpack.c.b16 %v4401, %v4397
    %v4758 = vpack.c.b16 %v4406, %v4402
    %v4759 = vpack.c.b16 %v4407, %v4403
    %v4760 = vpack.c.b16 %v4408, %v4404
    %v4761 = vpack.c.b16 %v4409, %v4405
    %v4762 = vpack.c.b16 %v4414, %v4410
    %v4763 = vpack.c.b16 %v4415, %v4411
    %v4764 = vpack.c.b16 %v4416, %v4412
    %v4765 = vpack.c.b16 %v4417, %v4413
    %v4766 = vpack.c.b16 %v4422, %v4418
    %v4767 = vpack.c.b16 %v4423, %v4419
    %v4768 = vpack.c.b16 %v4424, %v4420
    %v4769 = vpack.c.b16 %v4425, %v4421
    %v4770 = vpack.c.b16 %v4430, %v4426
    %v4771 = vpack.c.b16 %v4431, %v4427
    %v4772 = vpack.c.b16 %v4432, %v4428
    %v4773 = vpack.c.b16 %v4433, %v4429
    %v4774 = vpack.c.b16 %v4438, %v4434
    %v4775 = vpack.c.b16 %v4439, %v4435
    %v4776 = vpack.c.b16 %v4440, %v4436
    %v4777 = vpack.c.b16 %v4441, %v4437
    %v4778 = vpack.c.b16 %v4446, %v4442
    %v4779 = vpack.c.b16 %v4447, %v4443
    %v4780 = vpack.c.b16 %v4448, %v4444
    %v4781 = vpack.c.b16 %v4449, %v4445
    %v4782 = vpack.c.b16 %v4454, %v4450
    %v4783 = vpack.c.b16 %v4455, %v4451
    %v4784 = vpack.c.b16 %v4456, %v4452
    %v4785 = vpack.c.b16 %v4457, %v4453
    %v4786 = vpack.c.b16 %v4462, %v4458
    %v4787 = vpack.c.b16 %v4463, %v4459
    %v4788 = vpack.c.b16 %v4464, %v4460
    %v4789 = vpack.c.b16 %v4465, %v4461
    %v4790 = vpack.c.b16 %v4470, %v4466
    %v4791 = vpack.c.b16 %v4471, %v4467
    %v4792 = vpack.c.b16 %v4472, %v4468
    %v4793 = vpack.c.b16 %v4473, %v4469
    %v4794 = vpack.c.b16 %v4478, %v4474
    %v4795 = vpack.c.b16 %v4479, %v4475
    %v4796 = vpack.c.b16 %v4480, %v4476
    %v4797 = vpack.c.b16 %v4481, %v4477
    %v4798 = vpack.c.b16 %v4486, %v4482
    %v4799 = vpack.c.b16 %v4487, %v4483
    %v4800 = vpack.c.b16 %v4488, %v4484
    %v4801 = vpack.c.b16 %v4489, %v4485
    %v4802 = vpack.c.b16 %v4494, %v4490
    %v4803 = vpack.c.b16 %v4495, %v4491
    %v4804 = vpack.c.b16 %v4496, %v4492
    %v4805 = vpack.c.b16 %v4497, %v4493
    %v4806 = vpack.c.b16 %v4502, %v4498
    %v4807 = vpack.c.b16 %v4503, %v4499
    %v4808 = vpack.c.b16 %v4504, %v4500
    %v4809 = vpack.c.b16 %v4505, %v4501
    %v4810 = vpack.c.b16 %v4510, %v4506
    %v4811 = vpack.c.b16 %v4511, %v4507
    %v4812 = vpack.c.b16 %v4512, %v4508
    %v4813 = vpack.c.b16 %v4513, %v4509
    %v4814 = vpack.c.b16 %v4518, %v4514
    %v4815 = vpack.c.b16 %v4519, %v4515
    %v4816 = vpack.c.b16 %v4520, %v4516
    %v4817 = vpack.c.b16 %v4521, %v4517
    %v4818 = vpack.c.b16 %v4526, %v4522
    %v4819 = vpack.c.b16 %v4527, %v4523
    %v4820 = vpack.c.b16 %v4528, %v4524
    %v4821 = vpack.c.b16 %v4529, %v4525
    %v4822 = vpack.c.b16 %v4534, %v4530
    %v4823 = vpack.c.b16 %v4535, %v4531
    %v4824 = vpack.c.b16 %v4536, %v4532
    %v4825 = vpack.c.b16 %v4537, %v4533
    %v4826 = vpack.c.b16 %v4542, %v4538
    %v4827 = vpack.c.b16 %v4543, %v4539
    %v4828 = vpack.c.b16 %v4544, %v4540
    %v4829 = vpack.c.b16 %v4545, %v4541
    %v4830 = vpack.c.b16 %v4550, %v4546
    %v4831 = vpack.c.b16 %v4551, %v4547
    %v4832 = vpack.c.b16 %v4552, %v4548
    %v4833 = vpack.c.b16 %v4553, %v4549
    %v4834 = vpack.c.b16 %v4558, %v4554
    %v4835 = vpack.c.b16 %v4559, %v4555
    %v4836 = vpack.c.b16 %v4560, %v4556
    %v4837 = vpack.c.b16 %v4561, %v4557
    %v4838 = vpack.c.b16 %v4566, %v4562
    %v4839 = vpack.c.b16 %v4567, %v4563
    %v4840 = vpack.c.b16 %v4568, %v4564
    %v4841 = vpack.c.b16 %v4569, %v4565
    %v4842 = vpack.c.b16 %v4574, %v4570
    %v4843 = vpack.c.b16 %v4575, %v4571
    %v4844 = vpack.c.b16 %v4576, %v4572
    %v4845 = vpack.c.b16 %v4577, %v4573
    %v4846 = vpack.c.b16 %v4582, %v4578
    %v4847 = vpack.c.b16 %v4583, %v4579
    %v4848 = vpack.c.b16 %v4584, %v4580
    %v4849 = vpack.c.b16 %v4585, %v4581
    %v4850 = vpack.c.b16 %v4590, %v4586
    %v4851 = vpack.c.b16 %v4591, %v4587
    %v4852 = vpack.c.b16 %v4592, %v4588
    %v4853 = vpack.c.b16 %v4593, %v4589
    %v4854 = vpack.c.b16 %v4598, %v4594
    %v4855 = vpack.c.b16 %v4599, %v4595
    %v4856 = vpack.c.b16 %v4600, %v4596
    %v4857 = vpack.c.b16 %v4601, %v4597
    %5114 = vmatprep.subr.bf16.mxu0 %v4631
    %5115 = vmatpush1.bf16.msra.mxu0 %v4630
    %5116 = vmatprep.subr.bf16.mxu0 %v4627
    %5117 = vmatpush1.bf16.msra.mxu0 %v4626
    %5118 = vmatprep.subr.bf16.mxu0 %v4623
    %5119 = vmatpush1.bf16.msra.mxu0 %v4622
    %5120 = vmatprep.subr.bf16.mxu0 %v4619
    %5121 = vmatpush1.bf16.msra.mxu0 %v4618
    %5122 = vmatprep.subr.bf16.mxu0 %v4615
    %5123 = vmatpush1.bf16.msra.mxu0 %v4614
    %5124 = vmatprep.subr.bf16.mxu0 %v4611
    %5125 = vmatpush1.bf16.msra.mxu0 %v4610
    %5126 = vmatprep.subr.bf16.mxu0 %v4607
    %5127 = vmatpush1.bf16.msra.mxu0 %v4606
    %5128 = vmatprep.subr.bf16.mxu0 %v4603
    %5129 = vmatpush1.bf16.msra.mxu0 %v4602
    %5130 = vmatprep.subr.bf16.mxu0 %v4663
    %5131 = vmatpush2.bf16.msra.mxu0 %v4662
    %5132 = vmatprep.subr.bf16.mxu0 %v4659
    %5133 = vmatpush2.bf16.msra.mxu0 %v4658
    %5134 = vmatprep.subr.bf16.mxu0 %v4655
    %5135 = vmatpush2.bf16.msra.mxu0 %v4654
    %5136 = vmatprep.subr.bf16.mxu0 %v4651
    %5137 = vmatpush2.bf16.msra.mxu0 %v4650
    %5138 = vmatprep.subr.bf16.mxu0 %v4647
    %5139 = vmatpush2.bf16.msra.mxu0 %v4646
    %5140 = vmatprep.subr.bf16.mxu0 %v4643
    %5141 = vmatpush2.bf16.msra.mxu0 %v4642
    %5142 = vmatprep.subr.bf16.mxu0 %v4639
    %5143 = vmatpush2.bf16.msra.mxu0 %v4638
    %5144 = vmatprep.subr.bf16.mxu0 %v4635
    %5145 = vmatpush2.bf16.msra.mxu0 %v4634
    %5146 = vmatprep.mubr.bf16.mxu0 %v3549
    %5147 = vmatmul.mubr.bf16.gmra.mxu0 %v3548
    %v5148 = vpop.f32.mrf.mxu0
    %v5149 = vadd.f32 %v3817, %v5148
    %v5150 = vpop.f32.mrf.mxu0
    %v5151 = vadd.f32 %v3821, %v5150
    %v5152 = vpop.f32.mrf.mxu0
    %v5153 = vpop.f32.mrf.mxu0
    %5154 = vdwg.mxu0
    %5155 = vmatprep.subr.bf16.mxu0 %v4695
    %5156 = vmatpush1.bf16.msra.mxu0 %v4694
    %5157 = vmatprep.subr.bf16.mxu0 %v4691
    %5158 = vmatpush1.bf16.msra.mxu0 %v4690
    %5159 = vmatprep.subr.bf16.mxu0 %v4687
    %5160 = vmatpush1.bf16.msra.mxu0 %v4686
    %5161 = vmatprep.subr.bf16.mxu0 %v4683
    %5162 = vmatpush1.bf16.msra.mxu0 %v4682
    %5163 = vmatprep.subr.bf16.mxu0 %v4679
    %5164 = vmatpush1.bf16.msra.mxu0 %v4678
    %5165 = vmatprep.subr.bf16.mxu0 %v4675
    %5166 = vmatpush1.bf16.msra.mxu0 %v4674
    %5167 = vmatprep.subr.bf16.mxu0 %v4671
    %5168 = vmatpush1.bf16.msra.mxu0 %v4670
    %5169 = vmatprep.subr.bf16.mxu0 %v4667
    %5170 = vmatpush1.bf16.msra.mxu0 %v4666
    %5171 = vmatprep.subr.bf16.mxu0 %v4727
    %5172 = vmatpush2.bf16.msra.mxu0 %v4726
    %5173 = vmatprep.subr.bf16.mxu0 %v4723
    %5174 = vmatpush2.bf16.msra.mxu0 %v4722
    %5175 = vmatprep.subr.bf16.mxu0 %v4719
    %5176 = vmatpush2.bf16.msra.mxu0 %v4718
    %5177 = vmatprep.subr.bf16.mxu0 %v4715
    %5178 = vmatpush2.bf16.msra.mxu0 %v4714
    %5179 = vmatprep.subr.bf16.mxu0 %v4711
    %5180 = vmatpush2.bf16.msra.mxu0 %v4710
    %5181 = vmatprep.subr.bf16.mxu0 %v4707
    %5182 = vmatpush2.bf16.msra.mxu0 %v4706
    %5183 = vmatprep.subr.bf16.mxu0 %v4703
    %5184 = vmatpush2.bf16.msra.mxu0 %v4702
    %5185 = vmatprep.subr.bf16.mxu0 %v4699
    %5186 = vmatpush2.bf16.msra.mxu0 %v4698
    %5187 = vmatprep.mubr.bf16.mxu0 %v3551
    %5188 = vmatmul.mubr.bf16.gmra.mxu0 %v3550
    %v5189 = vpop.f32.mrf.mxu0
    %v5190 = vadd.f32 %v5149, %v5189
    %v5191 = vpop.f32.mrf.mxu0
    %v5192 = vadd.f32 %v5151, %v5191
    %v5193 = vpop.f32.mrf.mxu0
    %v5194 = vpop.f32.mrf.mxu0
    %5195 = vdwg.mxu0
    %5196 = vmatprep.subr.bf16.mxu0 %v4759
    %5197 = vmatpush1.bf16.msra.mxu0 %v4758
    %5198 = vmatprep.subr.bf16.mxu0 %v4755
    %5199 = vmatpush1.bf16.msra.mxu0 %v4754
    %5200 = vmatprep.subr.bf16.mxu0 %v4751
    %5201 = vmatpush1.bf16.msra.mxu0 %v4750
    %5202 = vmatprep.subr.bf16.mxu0 %v4747
    %5203 = vmatpush1.bf16.msra.mxu0 %v4746
    %5204 = vmatprep.subr.bf16.mxu0 %v4743
    %5205 = vmatpush1.bf16.msra.mxu0 %v4742
    %5206 = vmatprep.subr.bf16.mxu0 %v4739
    %5207 = vmatpush1.bf16.msra.mxu0 %v4738
    %5208 = vmatprep.subr.bf16.mxu0 %v4735
    %5209 = vmatpush1.bf16.msra.mxu0 %v4734
    %5210 = vmatprep.subr.bf16.mxu0 %v4731
    %5211 = vmatpush1.bf16.msra.mxu0 %v4730
    %5212 = vmatprep.subr.bf16.mxu0 %v4791
    %5213 = vmatpush2.bf16.msra.mxu0 %v4790
    %5214 = vmatprep.subr.bf16.mxu0 %v4787
    %5215 = vmatpush2.bf16.msra.mxu0 %v4786
    %5216 = vmatprep.subr.bf16.mxu0 %v4783
    %5217 = vmatpush2.bf16.msra.mxu0 %v4782
    %5218 = vmatprep.subr.bf16.mxu0 %v4779
    %5219 = vmatpush2.bf16.msra.mxu0 %v4778
    %5220 = vmatprep.subr.bf16.mxu0 %v4775
    %5221 = vmatpush2.bf16.msra.mxu0 %v4774
    %5222 = vmatprep.subr.bf16.mxu0 %v4771
    %5223 = vmatpush2.bf16.msra.mxu0 %v4770
    %5224 = vmatprep.subr.bf16.mxu0 %v4767
    %5225 = vmatpush2.bf16.msra.mxu0 %v4766
    %5226 = vmatprep.subr.bf16.mxu0 %v4763
    %5227 = vmatpush2.bf16.msra.mxu0 %v4762
    %5228 = vmatprep.mubr.bf16.mxu0 %v3553
    %5229 = vmatmul.mubr.bf16.gmra.mxu0 %v3552
    %v5230 = vpop.f32.mrf.mxu0
    %v5231 = vadd.f32 %v5190, %v5230
    %v5232 = vpop.f32.mrf.mxu0
    %v5233 = vadd.f32 %v5192, %v5232
    %v5234 = vpop.f32.mrf.mxu0
    %v5235 = vpop.f32.mrf.mxu0
    %5236 = vdwg.mxu0
    %5237 = vmatprep.subr.bf16.mxu0 %v4823
    %5238 = vmatpush1.bf16.msra.mxu0 %v4822
    %5239 = vmatprep.subr.bf16.mxu0 %v4819
    %5240 = vmatpush1.bf16.msra.mxu0 %v4818
    %5241 = vmatprep.subr.bf16.mxu0 %v4815
    %5242 = vmatpush1.bf16.msra.mxu0 %v4814
    %5243 = vmatprep.subr.bf16.mxu0 %v4811
    %5244 = vmatpush1.bf16.msra.mxu0 %v4810
    %5245 = vmatprep.subr.bf16.mxu0 %v4807
    %5246 = vmatpush1.bf16.msra.mxu0 %v4806
    %5247 = vmatprep.subr.bf16.mxu0 %v4803
    %5248 = vmatpush1.bf16.msra.mxu0 %v4802
    %5249 = vmatprep.subr.bf16.mxu0 %v4799
    %5250 = vmatpush1.bf16.msra.mxu0 %v4798
    %5251 = vmatprep.subr.bf16.mxu0 %v4795
    %5252 = vmatpush1.bf16.msra.mxu0 %v4794
    %5253 = vmatprep.subr.bf16.mxu0 %v4855
    %5254 = vmatpush2.bf16.msra.mxu0 %v4854
    %5255 = vmatprep.subr.bf16.mxu0 %v4851
    %5256 = vmatpush2.bf16.msra.mxu0 %v4850
    %5257 = vmatprep.subr.bf16.mxu0 %v4847
    %5258 = vmatpush2.bf16.msra.mxu0 %v4846
    %5259 = vmatprep.subr.bf16.mxu0 %v4843
    %5260 = vmatpush2.bf16.msra.mxu0 %v4842
    %5261 = vmatprep.subr.bf16.mxu0 %v4839
    %5262 = vmatpush2.bf16.msra.mxu0 %v4838
    %5263 = vmatprep.subr.bf16.mxu0 %v4835
    %5264 = vmatpush2.bf16.msra.mxu0 %v4834
    %5265 = vmatprep.subr.bf16.mxu0 %v4831
    %5266 = vmatpush2.bf16.msra.mxu0 %v4830
    %5267 = vmatprep.subr.bf16.mxu0 %v4827
    %5268 = vmatpush2.bf16.msra.mxu0 %v4826
    %5269 = vmatprep.mubr.bf16.mxu0 %v3555
    %5270 = vmatmul.mubr.bf16.gmra.mxu0 %v3554
    %v5271 = vpop.f32.mrf.mxu0
    %v5272 = vadd.f32 %v5231, %v5271
    %v5273 = vpop.f32.mrf.mxu0
    %v5274 = vadd.f32 %v5233, %v5273
    %v5275 = vpop.f32.mrf.mxu0
    %v5276 = vpop.f32.mrf.mxu0
    %5277 = vdwg.mxu0
    %5278 = vmatprep.subr.bf16.mxu0 %v4633
    %5279 = vmatpush1.bf16.msra.mxu0 %v4632
    %5280 = vmatprep.subr.bf16.mxu0 %v4629
    %5281 = vmatpush1.bf16.msra.mxu0 %v4628
    %5282 = vmatprep.subr.bf16.mxu0 %v4625
    %5283 = vmatpush1.bf16.msra.mxu0 %v4624
    %5284 = vmatprep.subr.bf16.mxu0 %v4621
    %5285 = vmatpush1.bf16.msra.mxu0 %v4620
    %5286 = vmatprep.subr.bf16.mxu0 %v4617
    %5287 = vmatpush1.bf16.msra.mxu0 %v4616
    %5288 = vmatprep.subr.bf16.mxu0 %v4613
    %5289 = vmatpush1.bf16.msra.mxu0 %v4612
    %5290 = vmatprep.subr.bf16.mxu0 %v4609
    %5291 = vmatpush1.bf16.msra.mxu0 %v4608
    %5292 = vmatprep.subr.bf16.mxu0 %v4605
    %5293 = vmatpush1.bf16.msra.mxu0 %v4604
    %5294 = vmatprep.subr.bf16.mxu0 %v4665
    %5295 = vmatpush2.bf16.msra.mxu0 %v4664
    %5296 = vmatprep.subr.bf16.mxu0 %v4661
    %5297 = vmatpush2.bf16.msra.mxu0 %v4660
    %5298 = vmatprep.subr.bf16.mxu0 %v4657
    %5299 = vmatpush2.bf16.msra.mxu0 %v4656
    %5300 = vmatprep.subr.bf16.mxu0 %v4653
    %5301 = vmatpush2.bf16.msra.mxu0 %v4652
    %5302 = vmatprep.subr.bf16.mxu0 %v4649
    %5303 = vmatpush2.bf16.msra.mxu0 %v4648
    %5304 = vmatprep.subr.bf16.mxu0 %v4645
    %5305 = vmatpush2.bf16.msra.mxu0 %v4644
    %5306 = vmatprep.subr.bf16.mxu0 %v4641
    %5307 = vmatpush2.bf16.msra.mxu0 %v4640
    %5308 = vmatprep.subr.bf16.mxu0 %v4637
    %5309 = vmatpush2.bf16.msra.mxu0 %v4636
    %5310 = vmatprep.mubr.bf16.mxu0 %v3549
    %5311 = vmatmul.mubr.bf16.gmra.mxu0 %v3548
    %v5312 = vpop.f32.mrf.mxu0
    %v5313 = vadd.f32 %v3825, %v5312
    %v5314 = vpop.f32.mrf.mxu0
    %v5315 = vadd.f32 %v3829, %v5314
    %v5316 = vpop.f32.mrf.mxu0
    %v5317 = vpop.f32.mrf.mxu0
    %5318 = vdwg.mxu0
    %5319 = vmatprep.subr.bf16.mxu0 %v4697
    %5320 = vmatpush1.bf16.msra.mxu0 %v4696
    %5321 = vmatprep.subr.bf16.mxu0 %v4693
    %5322 = vmatpush1.bf16.msra.mxu0 %v4692
    %5323 = vmatprep.subr.bf16.mxu0 %v4689
    %5324 = vmatpush1.bf16.msra.mxu0 %v4688
    %5325 = vmatprep.subr.bf16.mxu0 %v4685
    %5326 = vmatpush1.bf16.msra.mxu0 %v4684
    %5327 = vmatprep.subr.bf16.mxu0 %v4681
    %5328 = vmatpush1.bf16.msra.mxu0 %v4680
    %5329 = vmatprep.subr.bf16.mxu0 %v4677
    %5330 = vmatpush1.bf16.msra.mxu0 %v4676
    %5331 = vmatprep.subr.bf16.mxu0 %v4673
    %5332 = vmatpush1.bf16.msra.mxu0 %v4672
    %5333 = vmatprep.subr.bf16.mxu0 %v4669
    %5334 = vmatpush1.bf16.msra.mxu0 %v4668
    %5335 = vmatprep.subr.bf16.mxu0 %v4729
    %5336 = vmatpush2.bf16.msra.mxu0 %v4728
    %5337 = vmatprep.subr.bf16.mxu0 %v4725
    %5338 = vmatpush2.bf16.msra.mxu0 %v4724
    %5339 = vmatprep.subr.bf16.mxu0 %v4721
    %5340 = vmatpush2.bf16.msra.mxu0 %v4720
    %5341 = vmatprep.subr.bf16.mxu0 %v4717
    %5342 = vmatpush2.bf16.msra.mxu0 %v4716
    %5343 = vmatprep.subr.bf16.mxu0 %v4713
    %5344 = vmatpush2.bf16.msra.mxu0 %v4712
    %5345 = vmatprep.subr.bf16.mxu0 %v4709
    %5346 = vmatpush2.bf16.msra.mxu0 %v4708
    %5347 = vmatprep.subr.bf16.mxu0 %v4705
    %5348 = vmatpush2.bf16.msra.mxu0 %v4704
    %5349 = vmatprep.subr.bf16.mxu0 %v4701
    %5350 = vmatpush2.bf16.msra.mxu0 %v4700
    %5351 = vmatprep.mubr.bf16.mxu0 %v3551
    %5352 = vmatmul.mubr.bf16.gmra.mxu0 %v3550
    %v5353 = vpop.f32.mrf.mxu0
    %v5354 = vadd.f32 %v5313, %v5353
    %v5355 = vpop.f32.mrf.mxu0
    %v5356 = vadd.f32 %v5315, %v5355
    %v5357 = vpop.f32.mrf.mxu0
    %v5358 = vpop.f32.mrf.mxu0
    %5359 = vdwg.mxu0
    %5360 = vmatprep.subr.bf16.mxu0 %v4761
    %5361 = vmatpush1.bf16.msra.mxu0 %v4760
    %5362 = vmatprep.subr.bf16.mxu0 %v4757
    %5363 = vmatpush1.bf16.msra.mxu0 %v4756
    %5364 = vmatprep.subr.bf16.mxu0 %v4753
    %5365 = vmatpush1.bf16.msra.mxu0 %v4752
    %5366 = vmatprep.subr.bf16.mxu0 %v4749
    %5367 = vmatpush1.bf16.msra.mxu0 %v4748
    %5368 = vmatprep.subr.bf16.mxu0 %v4745
    %5369 = vmatpush1.bf16.msra.mxu0 %v4744
    %5370 = vmatprep.subr.bf16.mxu0 %v4741
    %5371 = vmatpush1.bf16.msra.mxu0 %v4740
    %5372 = vmatprep.subr.bf16.mxu0 %v4737
    %5373 = vmatpush1.bf16.msra.mxu0 %v4736
    %5374 = vmatprep.subr.bf16.mxu0 %v4733
    %5375 = vmatpush1.bf16.msra.mxu0 %v4732
    %5376 = vmatprep.subr.bf16.mxu0 %v4793
    %5377 = vmatpush2.bf16.msra.mxu0 %v4792
    %5378 = vmatprep.subr.bf16.mxu0 %v4789
    %5379 = vmatpush2.bf16.msra.mxu0 %v4788
    %5380 = vmatprep.subr.bf16.mxu0 %v4785
    %5381 = vmatpush2.bf16.msra.mxu0 %v4784
    %5382 = vmatprep.subr.bf16.mxu0 %v4781
    %5383 = vmatpush2.bf16.msra.mxu0 %v4780
    %5384 = vmatprep.subr.bf16.mxu0 %v4777
    %5385 = vmatpush2.bf16.msra.mxu0 %v4776
    %5386 = vmatprep.subr.bf16.mxu0 %v4773
    %5387 = vmatpush2.bf16.msra.mxu0 %v4772
    %5388 = vmatprep.subr.bf16.mxu0 %v4769
    %5389 = vmatpush2.bf16.msra.mxu0 %v4768
    %5390 = vmatprep.subr.bf16.mxu0 %v4765
    %5391 = vmatpush2.bf16.msra.mxu0 %v4764
    %5392 = vmatprep.mubr.bf16.mxu0 %v3553
    %5393 = vmatmul.mubr.bf16.gmra.mxu0 %v3552
    %v5394 = vpop.f32.mrf.mxu0
    %v5395 = vadd.f32 %v5354, %v5394
    %v5396 = vpop.f32.mrf.mxu0
    %v5397 = vadd.f32 %v5356, %v5396
    %v5398 = vpop.f32.mrf.mxu0
    %v5399 = vpop.f32.mrf.mxu0
    %5400 = vdwg.mxu0
    %5401 = vmatprep.subr.bf16.mxu0 %v4825
    %5402 = vmatpush1.bf16.msra.mxu0 %v4824
    %5403 = vmatprep.subr.bf16.mxu0 %v4821
    %5404 = vmatpush1.bf16.msra.mxu0 %v4820
    %5405 = vmatprep.subr.bf16.mxu0 %v4817
    %5406 = vmatpush1.bf16.msra.mxu0 %v4816
    %5407 = vmatprep.subr.bf16.mxu0 %v4813
    %5408 = vmatpush1.bf16.msra.mxu0 %v4812
    %5409 = vmatprep.subr.bf16.mxu0 %v4809
    %5410 = vmatpush1.bf16.msra.mxu0 %v4808
    %5411 = vmatprep.subr.bf16.mxu0 %v4805
    %5412 = vmatpush1.bf16.msra.mxu0 %v4804
    %5413 = vmatprep.subr.bf16.mxu0 %v4801
    %5414 = vmatpush1.bf16.msra.mxu0 %v4800
    %5415 = vmatprep.subr.bf16.mxu0 %v4797
    %5416 = vmatpush1.bf16.msra.mxu0 %v4796
    %5417 = vmatprep.subr.bf16.mxu0 %v4857
    %5418 = vmatpush2.bf16.msra.mxu0 %v4856
    %5419 = vmatprep.subr.bf16.mxu0 %v4853
    %5420 = vmatpush2.bf16.msra.mxu0 %v4852
    %5421 = vmatprep.subr.bf16.mxu0 %v4849
    %5422 = vmatpush2.bf16.msra.mxu0 %v4848
    %5423 = vmatprep.subr.bf16.mxu0 %v4845
    %5424 = vmatpush2.bf16.msra.mxu0 %v4844
    %5425 = vmatprep.subr.bf16.mxu0 %v4841
    %5426 = vmatpush2.bf16.msra.mxu0 %v4840
    %5427 = vmatprep.subr.bf16.mxu0 %v4837
    %5428 = vmatpush2.bf16.msra.mxu0 %v4836
    %5429 = vmatprep.subr.bf16.mxu0 %v4833
    %5430 = vmatpush2.bf16.msra.mxu0 %v4832
    %5431 = vmatprep.subr.bf16.mxu0 %v4829
    %5432 = vmatpush2.bf16.msra.mxu0 %v4828
    %5433 = vmatprep.mubr.bf16.mxu0 %v3555
    %5434 = vmatmul.mubr.bf16.gmra.mxu0 %v3554
    %v5435 = vpop.f32.mrf.mxu0
    %v5436 = vadd.f32 %v5395, %v5435
    %v5437 = vpop.f32.mrf.mxu0
    %v5438 = vadd.f32 %v5397, %v5437
    %v5439 = vpop.f32.mrf.mxu0
    %v5440 = vpop.f32.mrf.mxu0
    %5441 = vdwg.mxu0
    %v5442 = vmul.f32 %v5272, 0.2
    %v5443 = vmul.f32 %v5274, 0.2
    %v5444 = vmul.f32 %v5436, 0.2
    %v5445 = vmul.f32 %v5438, 0.2
    %v5446 = vmax.f32 %v5272, %v5442
    %v5447 = vmax.f32 %v5274, %v5443
    %v5448 = vmax.f32 %v5436, %v5444
    %v5449 = vmax.f32 %v5438, %v5445
    %v5450 = vpack.c.bf16 %v5446, %v5446
    %v5451 = vpack.c.bf16 %v5447, %v5447
    %v5452 = vpack.c.bf16 %v5448, %v5448
    %v5453 = vpack.c.bf16 %v5449, %v5449
    %v5454 = vld [vmem:[#allocation9] sm:$0xff]
    %v5455 = vld [vmem:[#allocation9 + $0x8] sm:$0xff]
    %v5456 = vld [vmem:[#allocation9 + $0x10] sm:$0xff]
    %v5457 = vld [vmem:[#allocation9 + $0x18] sm:$0xff]
    %v5458 = vld [vmem:[#allocation9 + $0x20] sm:$0xff]
    %v5459 = vld [vmem:[#allocation9 + $0x28] sm:$0xff]
    %v5460 = vld [vmem:[#allocation9 + $0x30] sm:$0xff]
    %v5461 = vld [vmem:[#allocation9 + $0x38] sm:$0xff]
    %v5462 = vld [vmem:[#allocation9 + $0x40] sm:$0xff]
    %v5463 = vld [vmem:[#allocation9 + $0x48] sm:$0xff]
    %v5464 = vld [vmem:[#allocation9 + $0x50] sm:$0xff]
    %v5465 = vld [vmem:[#allocation9 + $0x58] sm:$0xff]
    %v5466 = vld [vmem:[#allocation9 + $0x60] sm:$0xff]
    %v5467 = vld [vmem:[#allocation9 + $0x68] sm:$0xff]
    %v5468 = vld [vmem:[#allocation9 + $0x70] sm:$0xff]
    %v5469 = vld [vmem:[#allocation9 + $0x78] sm:$0xff]
    %v5470 = vld [vmem:[#allocation9 + $0x80] sm:$0xff]
    %v5471 = vld [vmem:[#allocation9 + $0x88] sm:$0xff]
    %v5472 = vld [vmem:[#allocation9 + $0x90] sm:$0xff]
    %v5473 = vld [vmem:[#allocation9 + $0x98] sm:$0xff]
    %v5474 = vld [vmem:[#allocation9 + $0xa0] sm:$0xff]
    %v5475 = vld [vmem:[#allocation9 + $0xa8] sm:$0xff]
    %v5476 = vld [vmem:[#allocation9 + $0xb0] sm:$0xff]
    %v5477 = vld [vmem:[#allocation9 + $0xb8] sm:$0xff]
    %v5478 = vld [vmem:[#allocation9 + $0xc0] sm:$0xff]
    %v5479 = vld [vmem:[#allocation9 + $0xc8] sm:$0xff]
    %v5480 = vld [vmem:[#allocation9 + $0xd0] sm:$0xff]
    %v5481 = vld [vmem:[#allocation9 + $0xd8] sm:$0xff]
    %v5482 = vld [vmem:[#allocation9 + $0xe0] sm:$0xff]
    %v5483 = vld [vmem:[#allocation9 + $0xe8] sm:$0xff]
    %v5484 = vld [vmem:[#allocation9 + $0xf0] sm:$0xff]
    %v5485 = vld [vmem:[#allocation9 + $0xf8] sm:$0xff]
    %v5486 = vld [vmem:[#allocation9 + $0x100] sm:$0xff]
    %v5487 = vld [vmem:[#allocation9 + $0x108] sm:$0xff]
    %v5488 = vld [vmem:[#allocation9 + $0x110] sm:$0xff]
    %v5489 = vld [vmem:[#allocation9 + $0x118] sm:$0xff]
    %v5490 = vld [vmem:[#allocation9 + $0x120] sm:$0xff]
    %v5491 = vld [vmem:[#allocation9 + $0x128] sm:$0xff]
    %v5492 = vld [vmem:[#allocation9 + $0x130] sm:$0xff]
    %v5493 = vld [vmem:[#allocation9 + $0x138] sm:$0xff]
    %v5494 = vld [vmem:[#allocation9 + $0x140] sm:$0xff]
    %v5495 = vld [vmem:[#allocation9 + $0x148] sm:$0xff]
    %v5496 = vld [vmem:[#allocation9 + $0x150] sm:$0xff]
    %v5497 = vld [vmem:[#allocation9 + $0x158] sm:$0xff]
    %v5498 = vld [vmem:[#allocation9 + $0x160] sm:$0xff]
    %v5499 = vld [vmem:[#allocation9 + $0x168] sm:$0xff]
    %v5500 = vld [vmem:[#allocation9 + $0x170] sm:$0xff]
    %v5501 = vld [vmem:[#allocation9 + $0x178] sm:$0xff]
    %v5502 = vld [vmem:[#allocation9 + $0x180] sm:$0xff]
    %v5503 = vld [vmem:[#allocation9 + $0x188] sm:$0xff]
    %v5504 = vld [vmem:[#allocation9 + $0x190] sm:$0xff]
    %v5505 = vld [vmem:[#allocation9 + $0x198] sm:$0xff]
    %v5506 = vld [vmem:[#allocation9 + $0x1a0] sm:$0xff]
    %v5507 = vld [vmem:[#allocation9 + $0x1a8] sm:$0xff]
    %v5508 = vld [vmem:[#allocation9 + $0x1b0] sm:$0xff]
    %v5509 = vld [vmem:[#allocation9 + $0x1b8] sm:$0xff]
    %v5510 = vld [vmem:[#allocation9 + $0x1c0] sm:$0xff]
    %v5511 = vld [vmem:[#allocation9 + $0x1c8] sm:$0xff]
    %v5512 = vld [vmem:[#allocation9 + $0x1d0] sm:$0xff]
    %v5513 = vld [vmem:[#allocation9 + $0x1d8] sm:$0xff]
    %v5514 = vld [vmem:[#allocation9 + $0x1e0] sm:$0xff]
    %v5515 = vld [vmem:[#allocation9 + $0x1e8] sm:$0xff]
    %v5516 = vld [vmem:[#allocation9 + $0x1f0] sm:$0xff]
    %v5517 = vld [vmem:[#allocation9 + $0x1f8] sm:$0xff]
    %v5518 = vld [vmem:[#allocation10] sm:$0x3]
    %v5520 = vlaneseq
    %v5521 = vshrl.u32 %v5520, 7
    %v5522 = vsub.s32 0, %v5521
    %v5523 = vrot.slane %v5518, %v5522
    %v5524 = vlaneseq
    %v5525 = vshrl.u32 %v5524, 7
    %v5526 = vsub.s32 1, %v5525
    %v5527 = vrot.slane %v5518, %v5526
    %v5594 = vunpack.c.l.b16 %v5454
    %v5595 = vunpack.c.h.b16 %v5454
    %v5596 = vunpack.c.l.b16 %v5455
    %v5597 = vunpack.c.h.b16 %v5455
    %v5598 = vunpack.c.l.b16 %v5456
    %v5599 = vunpack.c.h.b16 %v5456
    %v5600 = vunpack.c.l.b16 %v5457
    %v5601 = vunpack.c.h.b16 %v5457
    %v5602 = vunpack.c.l.b16 %v5458
    %v5603 = vunpack.c.h.b16 %v5458
    %v5604 = vunpack.c.l.b16 %v5459
    %v5605 = vunpack.c.h.b16 %v5459
    %v5606 = vunpack.c.l.b16 %v5460
    %v5607 = vunpack.c.h.b16 %v5460
    %v5608 = vunpack.c.l.b16 %v5461
    %v5609 = vunpack.c.h.b16 %v5461
    %v5610 = vunpack.c.l.b16 %v5462
    %v5611 = vunpack.c.h.b16 %v5462
    %v5612 = vunpack.c.l.b16 %v5463
    %v5613 = vunpack.c.h.b16 %v5463
    %v5614 = vunpack.c.l.b16 %v5464
    %v5615 = vunpack.c.h.b16 %v5464
    %v5616 = vunpack.c.l.b16 %v5465
    %v5617 = vunpack.c.h.b16 %v5465
    %v5618 = vunpack.c.l.b16 %v5466
    %v5619 = vunpack.c.h.b16 %v5466
    %v5620 = vunpack.c.l.b16 %v5467
    %v5621 = vunpack.c.h.b16 %v5467
    %v5622 = vunpack.c.l.b16 %v5468
    %v5623 = vunpack.c.h.b16 %v5468
    %v5624 = vunpack.c.l.b16 %v5469
    %v5625 = vunpack.c.h.b16 %v5469
    %v5626 = vunpack.c.l.b16 %v5470
    %v5627 = vunpack.c.h.b16 %v5470
    %v5628 = vunpack.c.l.b16 %v5471
    %v5629 = vunpack.c.h.b16 %v5471
    %v5630 = vunpack.c.l.b16 %v5472
    %v5631 = vunpack.c.h.b16 %v5472
    %v5632 = vunpack.c.l.b16 %v5473
    %v5633 = vunpack.c.h.b16 %v5473
    %v5634 = vunpack.c.l.b16 %v5474
    %v5635 = vunpack.c.h.b16 %v5474
    %v5636 = vunpack.c.l.b16 %v5475
    %v5637 = vunpack.c.h.b16 %v5475
    %v5638 = vunpack.c.l.b16 %v5476
    %v5639 = vunpack.c.h.b16 %v5476
    %v5640 = vunpack.c.l.b16 %v5477
    %v5641 = vunpack.c.h.b16 %v5477
    %v5642 = vunpack.c.l.b16 %v5478
    %v5643 = vunpack.c.h.b16 %v5478
    %v5644 = vunpack.c.l.b16 %v5479
    %v5645 = vunpack.c.h.b16 %v5479
    %v5646 = vunpack.c.l.b16 %v5480
    %v5647 = vunpack.c.h.b16 %v5480
    %v5648 = vunpack.c.l.b16 %v5481
    %v5649 = vunpack.c.h.b16 %v5481
    %v5650 = vunpack.c.l.b16 %v5482
    %v5651 = vunpack.c.h.b16 %v5482
    %v5652 = vunpack.c.l.b16 %v5483
    %v5653 = vunpack.c.h.b16 %v5483
    %v5654 = vunpack.c.l.b16 %v5484
    %v5655 = vunpack.c.h.b16 %v5484
    %v5656 = vunpack.c.l.b16 %v5485
    %v5657 = vunpack.c.h.b16 %v5485
    %v5658 = vunpack.c.l.b16 %v5486
    %v5659 = vunpack.c.h.b16 %v5486
    %v5660 = vunpack.c.l.b16 %v5487
    %v5661 = vunpack.c.h.b16 %v5487
    %v5662 = vunpack.c.l.b16 %v5488
    %v5663 = vunpack.c.h.b16 %v5488
    %v5664 = vunpack.c.l.b16 %v5489
    %v5665 = vunpack.c.h.b16 %v5489
    %v5666 = vunpack.c.l.b16 %v5490
    %v5667 = vunpack.c.h.b16 %v5490
    %v5668 = vunpack.c.l.b16 %v5491
    %v5669 = vunpack.c.h.b16 %v5491
    %v5670 = vunpack.c.l.b16 %v5492
    %v5671 = vunpack.c.h.b16 %v5492
    %v5672 = vunpack.c.l.b16 %v5493
    %v5673 = vunpack.c.h.b16 %v5493
    %v5674 = vunpack.c.l.b16 %v5494
    %v5675 = vunpack.c.h.b16 %v5494
    %v5676 = vunpack.c.l.b16 %v5495
    %v5677 = vunpack.c.h.b16 %v5495
    %v5678 = vunpack.c.l.b16 %v5496
    %v5679 = vunpack.c.h.b16 %v5496
    %v5680 = vunpack.c.l.b16 %v5497
    %v5681 = vunpack.c.h.b16 %v5497
    %v5682 = vunpack.c.l.b16 %v5498
    %v5683 = vunpack.c.h.b16 %v5498
    %v5684 = vunpack.c.l.b16 %v5499
    %v5685 = vunpack.c.h.b16 %v5499
    %v5686 = vunpack.c.l.b16 %v5500
    %v5687 = vunpack.c.h.b16 %v5500
    %v5688 = vunpack.c.l.b16 %v5501
    %v5689 = vunpack.c.h.b16 %v5501
    %v5690 = vunpack.c.l.b16 %v5502
    %v5691 = vunpack.c.h.b16 %v5502
    %v5692 = vunpack.c.l.b16 %v5503
    %v5693 = vunpack.c.h.b16 %v5503
    %v5694 = vunpack.c.l.b16 %v5504
    %v5695 = vunpack.c.h.b16 %v5504
    %v5696 = vunpack.c.l.b16 %v5505
    %v5697 = vunpack.c.h.b16 %v5505
    %v5698 = vunpack.c.l.b16 %v5506
    %v5699 = vunpack.c.h.b16 %v5506
    %v5700 = vunpack.c.l.b16 %v5507
    %v5701 = vunpack.c.h.b16 %v5507
    %v5702 = vunpack.c.l.b16 %v5508
    %v5703 = vunpack.c.h.b16 %v5508
    %v5704 = vunpack.c.l.b16 %v5509
    %v5705 = vunpack.c.h.b16 %v5509
    %v5706 = vunpack.c.l.b16 %v5510
    %v5707 = vunpack.c.h.b16 %v5510
    %v5708 = vunpack.c.l.b16 %v5511
    %v5709 = vunpack.c.h.b16 %v5511
    %v5710 = vunpack.c.l.b16 %v5512
    %v5711 = vunpack.c.h.b16 %v5512
    %v5712 = vunpack.c.l.b16 %v5513
    %v5713 = vunpack.c.h.b16 %v5513
    %v5714 = vunpack.c.l.b16 %v5514
    %v5715 = vunpack.c.h.b16 %v5514
    %v5716 = vunpack.c.l.b16 %v5515
    %v5717 = vunpack.c.h.b16 %v5515
    %v5718 = vunpack.c.l.b16 %v5516
    %v5719 = vunpack.c.h.b16 %v5516
    %v5720 = vunpack.c.l.b16 %v5517
    %v5721 = vunpack.c.h.b16 %v5517
    %v5722 = vpack.c.b16 %v5596, %v5594
    %v5723 = vpack.c.b16 %v5597, %v5595
    %v5724 = vpack.c.b16 %v5600, %v5598
    %v5725 = vpack.c.b16 %v5601, %v5599
    %v5726 = vpack.c.b16 %v5604, %v5602
    %v5727 = vpack.c.b16 %v5605, %v5603
    %v5728 = vpack.c.b16 %v5608, %v5606
    %v5729 = vpack.c.b16 %v5609, %v5607
    %v5730 = vpack.c.b16 %v5612, %v5610
    %v5731 = vpack.c.b16 %v5613, %v5611
    %v5732 = vpack.c.b16 %v5616, %v5614
    %v5733 = vpack.c.b16 %v5617, %v5615
    %v5734 = vpack.c.b16 %v5620, %v5618
    %v5735 = vpack.c.b16 %v5621, %v5619
    %v5736 = vpack.c.b16 %v5624, %v5622
    %v5737 = vpack.c.b16 %v5625, %v5623
    %v5738 = vpack.c.b16 %v5628, %v5626
    %v5739 = vpack.c.b16 %v5629, %v5627
    %v5740 = vpack.c.b16 %v5632, %v5630
    %v5741 = vpack.c.b16 %v5633, %v5631
    %v5742 = vpack.c.b16 %v5636, %v5634
    %v5743 = vpack.c.b16 %v5637, %v5635
    %v5744 = vpack.c.b16 %v5640, %v5638
    %v5745 = vpack.c.b16 %v5641, %v5639
    %v5746 = vpack.c.b16 %v5644, %v5642
    %v5747 = vpack.c.b16 %v5645, %v5643
    %v5748 = vpack.c.b16 %v5648, %v5646
    %v5749 = vpack.c.b16 %v5649, %v5647
    %v5750 = vpack.c.b16 %v5652, %v5650
    %v5751 = vpack.c.b16 %v5653, %v5651
    %v5752 = vpack.c.b16 %v5656, %v5654
    %v5753 = vpack.c.b16 %v5657, %v5655
    %v5754 = vpack.c.b16 %v5660, %v5658
    %v5755 = vpack.c.b16 %v5661, %v5659
    %v5756 = vpack.c.b16 %v5664, %v5662
    %v5757 = vpack.c.b16 %v5665, %v5663
    %v5758 = vpack.c.b16 %v5668, %v5666
    %v5759 = vpack.c.b16 %v5669, %v5667
    %v5760 = vpack.c.b16 %v5672, %v5670
    %v5761 = vpack.c.b16 %v5673, %v5671
    %v5762 = vpack.c.b16 %v5676, %v5674
    %v5763 = vpack.c.b16 %v5677, %v5675
    %v5764 = vpack.c.b16 %v5680, %v5678
    %v5765 = vpack.c.b16 %v5681, %v5679
    %v5766 = vpack.c.b16 %v5684, %v5682
    %v5767 = vpack.c.b16 %v5685, %v5683
    %v5768 = vpack.c.b16 %v5688, %v5686
    %v5769 = vpack.c.b16 %v5689, %v5687
    %v5770 = vpack.c.b16 %v5692, %v5690
    %v5771 = vpack.c.b16 %v5693, %v5691
    %v5772 = vpack.c.b16 %v5696, %v5694
    %v5773 = vpack.c.b16 %v5697, %v5695
    %v5774 = vpack.c.b16 %v5700, %v5698
    %v5775 = vpack.c.b16 %v5701, %v5699
    %v5776 = vpack.c.b16 %v5704, %v5702
    %v5777 = vpack.c.b16 %v5705, %v5703
    %v5778 = vpack.c.b16 %v5708, %v5706
    %v5779 = vpack.c.b16 %v5709, %v5707
    %v5780 = vpack.c.b16 %v5712, %v5710
    %v5781 = vpack.c.b16 %v5713, %v5711
    %v5782 = vpack.c.b16 %v5716, %v5714
    %v5783 = vpack.c.b16 %v5717, %v5715
    %v5784 = vpack.c.b16 %v5720, %v5718
    %v5785 = vpack.c.b16 %v5721, %v5719
    %5850 = vmatprep.subr.bf16.mxu0 %v5737
    %5851 = vmatpush1.bf16.msra.mxu0 %v5736
    %5852 = vmatprep.subr.bf16.mxu0 %v5735
    %5853 = vmatpush1.bf16.msra.mxu0 %v5734
    %5854 = vmatprep.subr.bf16.mxu0 %v5733
    %5855 = vmatpush1.bf16.msra.mxu0 %v5732
    %5856 = vmatprep.subr.bf16.mxu0 %v5731
    %5857 = vmatpush1.bf16.msra.mxu0 %v5730
    %5858 = vmatprep.subr.bf16.mxu0 %v5729
    %5859 = vmatpush1.bf16.msra.mxu0 %v5728
    %5860 = vmatprep.subr.bf16.mxu0 %v5727
    %5861 = vmatpush1.bf16.msra.mxu0 %v5726
    %5862 = vmatprep.subr.bf16.mxu0 %v5725
    %5863 = vmatpush1.bf16.msra.mxu0 %v5724
    %5864 = vmatprep.subr.bf16.mxu0 %v5723
    %5865 = vmatpush1.bf16.msra.mxu0 %v5722
    %5866 = vmatprep.subr.bf16.mxu0 %v5753
    %5867 = vmatpush2.bf16.msra.mxu0 %v5752
    %5868 = vmatprep.subr.bf16.mxu0 %v5751
    %5869 = vmatpush2.bf16.msra.mxu0 %v5750
    %5870 = vmatprep.subr.bf16.mxu0 %v5749
    %5871 = vmatpush2.bf16.msra.mxu0 %v5748
    %5872 = vmatprep.subr.bf16.mxu0 %v5747
    %5873 = vmatpush2.bf16.msra.mxu0 %v5746
    %5874 = vmatprep.subr.bf16.mxu0 %v5745
    %5875 = vmatpush2.bf16.msra.mxu0 %v5744
    %5876 = vmatprep.subr.bf16.mxu0 %v5743
    %5877 = vmatpush2.bf16.msra.mxu0 %v5742
    %5878 = vmatprep.subr.bf16.mxu0 %v5741
    %5879 = vmatpush2.bf16.msra.mxu0 %v5740
    %5880 = vmatprep.subr.bf16.mxu0 %v5739
    %5881 = vmatpush2.bf16.msra.mxu0 %v5738
    %5882 = vmatprep.mubr.bf16.mxu0 %v5451
    %5883 = vmatmul.mubr.bf16.gmra.mxu0 %v5450
    %v5884 = vpop.f32.mrf.mxu0
    %v5885 = vadd.f32 %v5523, %v5884
    %v5886 = vpop.f32.mrf.mxu0
    %v5887 = vadd.f32 %v5527, %v5886
    %v5888 = vpop.f32.mrf.mxu0
    %v5889 = vpop.f32.mrf.mxu0
    %5890 = vdwg.mxu0
    %5891 = vmatprep.subr.bf16.mxu0 %v5769
    %5892 = vmatpush1.bf16.msra.mxu0 %v5768
    %5893 = vmatprep.subr.bf16.mxu0 %v5767
    %5894 = vmatpush1.bf16.msra.mxu0 %v5766
    %5895 = vmatprep.subr.bf16.mxu0 %v5765
    %5896 = vmatpush1.bf16.msra.mxu0 %v5764
    %5897 = vmatprep.subr.bf16.mxu0 %v5763
    %5898 = vmatpush1.bf16.msra.mxu0 %v5762
    %5899 = vmatprep.subr.bf16.mxu0 %v5761
    %5900 = vmatpush1.bf16.msra.mxu0 %v5760
    %5901 = vmatprep.subr.bf16.mxu0 %v5759
    %5902 = vmatpush1.bf16.msra.mxu0 %v5758
    %5903 = vmatprep.subr.bf16.mxu0 %v5757
    %5904 = vmatpush1.bf16.msra.mxu0 %v5756
    %5905 = vmatprep.subr.bf16.mxu0 %v5755
    %5906 = vmatpush1.bf16.msra.mxu0 %v5754
    %5907 = vmatprep.subr.bf16.mxu0 %v5785
    %5908 = vmatpush2.bf16.msra.mxu0 %v5784
    %5909 = vmatprep.subr.bf16.mxu0 %v5783
    %5910 = vmatpush2.bf16.msra.mxu0 %v5782
    %5911 = vmatprep.subr.bf16.mxu0 %v5781
    %5912 = vmatpush2.bf16.msra.mxu0 %v5780
    %5913 = vmatprep.subr.bf16.mxu0 %v5779
    %5914 = vmatpush2.bf16.msra.mxu0 %v5778
    %5915 = vmatprep.subr.bf16.mxu0 %v5777
    %5916 = vmatpush2.bf16.msra.mxu0 %v5776
    %5917 = vmatprep.subr.bf16.mxu0 %v5775
    %5918 = vmatpush2.bf16.msra.mxu0 %v5774
    %5919 = vmatprep.subr.bf16.mxu0 %v5773
    %5920 = vmatpush2.bf16.msra.mxu0 %v5772
    %5921 = vmatprep.subr.bf16.mxu0 %v5771
    %5922 = vmatpush2.bf16.msra.mxu0 %v5770
    %5923 = vmatprep.mubr.bf16.mxu0 %v5453
    %5924 = vmatmul.mubr.bf16.gmra.mxu0 %v5452
    %v5925 = vpop.f32.mrf.mxu0
    %v5926 = vadd.f32 %v5885, %v5925
    %v5927 = vpop.f32.mrf.mxu0
    %v5928 = vadd.f32 %v5887, %v5927
    %v5929 = vpop.f32.mrf.mxu0
    %v5930 = vpop.f32.mrf.mxu0
    %5931 = vdwg.mxu0
    %v5932 = vmul.f32 %v5926, 0.2
    %v5933 = vmul.f32 %v5928, 0.2
    %v5934 = vmax.f32 %v5926, %v5932
    %v5935 = vmax.f32 %v5928, %v5933
    %v5936 = vld [vmem:[#allocation12] sm:$0x3]
    %v5938 = vlaneseq
    %v5939 = vshrl.u32 %v5938, 7
    %v5940 = vsub.s32 0, %v5939
    %v5941 = vrot.slane %v5936, %v5940
    %v5942 = vlaneseq
    %v5943 = vshrl.u32 %v5942, 7
    %v5944 = vsub.s32 1, %v5943
    %v5945 = vrot.slane %v5936, %v5944
    %v5948 = vmul.f32 %v5934, %v5941
    %v5949 = vmul.f32 %v5935, %v5945
    %v5950 = vadd.f32 %v5948, %v5949
    %5951 = vadd.xlane.f32.xlu0 %v5950
    %v5952 = vpop.xlane.xlu0 %5951
    %vm5953 = vcmask 7168
    %5954 = vst.msk [vmem:[%s8] sm:$0xff] %vm5953, %v5952
    // Predicated region
    $region62: #{san_discriminator_forward.1} parent=1 // pred_check
      _
    $region63: #{san_discriminator_forward.1} parent=1 // pred_check_branch
      %5956 = sbr.rel (0) target = $region65
    $region64: #{san_discriminator_forward.1} parent=1 // pred_region
      _
    $region65: #{san_discriminator_forward.1} parent=1 // pred_fallthru
      _
    // Predicated region
    $region66: #{san_discriminator_forward.1} parent=1 // pred_check
      _
    $region67: #{san_discriminator_forward.1} parent=1 // pred_check_branch
      %5958 = sbr.rel (0) target = $region69
    $region68: #{san_discriminator_forward.1} parent=1 // pred_region
      _
    $region69: #{san_discriminator_forward.1} parent=1 // pred_fallthru
      _
    %5959 = vsyncpa [#allocation3], 1
    %5960 = vsyncpa [#allocation5], 1
    %5961 = vsyncpa [#allocation8], 1
    %5962 = vsyncpa [#allocation11], 1

</llo_original>
